<compile_context>
chip_gen: v7x
topology: tpu7x:2x2x1
jax: 0.10.0
libtpu: 0.0.40
codegen_flags: <defaults>
</compile_context>

<pallas_src>
import functools

import jax
import jax.numpy as jnp
from jax.experimental import pallas as pl
from jax.experimental.pallas import tpu as pltpu


STATE_DIM = 9
IMG_FEAT_DIM = 15
LSTM_DIM = 100          # logical hidden size (matches the PyTorch reference)
LSTM_PAD = 128          # padded hidden so gate slices are 128-lane aligned
IMAGE_SIZE = 64


# ----------------------------------------------------------------------------
# Pallas kernel 1: conv-as-GEMM, transposed / lane-dense.
# ----------------------------------------------------------------------------
def _conv_mm_kernel(w_ref, x_ref, b_ref, o_ref, *, act):
    acc = jnp.dot(w_ref[...], x_ref[0], preferred_element_type=jnp.float32)
    acc = acc + b_ref[...]
    if act == "relu":
        acc = jnp.maximum(acc, 0.0)
    elif act == "sigmoid":
        acc = jax.nn.sigmoid(acc)
    o_ref[0] = acc.astype(o_ref.dtype)


def conv3x3_pallas(x_nchw, w_t, b, stride, act, out_dtype):
    """3x3 conv, pad 1.  x:(N,Cin,H,W); w_t:(Cout, Cin*9), (Cin,kh,kw) order."""
    N, Cin, H, W = x_nchw.shape
    Cout, CK = w_t.shape
    # im2col patches (feature dim ordered (Cin, kh, kw)); bf16 halves HBM traffic.
    # TODO(synk): fully fusing im2col (and the 2x upsample) into the kernel via
    # manual strided DMA would remove this HBM materialization entirely.
    patches = jax.lax.conv_general_dilated_patches(
        x_nchw, filter_shape=(3, 3), window_strides=(stride, stride),
        padding=((1, 1), (1, 1)))                    # (N, Cin*9, Ho, Wo)
    _, CKp, Ho, Wo = patches.shape
    assert CKp == CK, (CKp, CK)
    M = Ho * Wo
    cols = patches.reshape(N, CK, M)                 # free view, no transpose

    out = pl.pallas_call(
        functools.partial(_conv_mm_kernel, act=act),
        out_shape=jax.ShapeDtypeStruct((N, Cout, M), out_dtype),
        grid_spec=pltpu.PrefetchScalarGridSpec(
            num_scalar_prefetch=0,
            grid=(N,),                               # full spatial map per step
            in_specs=[
                pl.BlockSpec((Cout, CK), lambda n: (0, 0)),
                pl.BlockSpec((1, CK, M), lambda n: (n, 0, 0)),
                pl.BlockSpec((Cout, 1), lambda n: (0, 0)),
            ],
            out_specs=pl.BlockSpec((1, Cout, M), lambda n: (n, 0, 0)),
        ),
        compiler_params=pltpu.CompilerParams(
            dimension_semantics=("parallel",)),
    )(w_t, cols, b.reshape(Cout, 1).astype(jnp.float32))
    return out.reshape(N, Cout, Ho, Wo)


# ----------------------------------------------------------------------------
# Pallas kernel 2: one LSTM layer; the input projection (x@Wih + b) has already
# been hoisted out of the serial loop, so each step does a single (B,Hp)@(Hp,4Hp)
# recurrent matmul.  h/c live in VMEM scratch across grid iterations.
# ----------------------------------------------------------------------------
def _lstm_layer_kernel(xp_ref, whh_ref, y_ref, h_sc, c_sc, *, hp):
    t = pl.program_id(0)

    @pl.when(t == 0)
    def _():
        h_sc[...] = jnp.zeros_like(h_sc)
        c_sc[...] = jnp.zeros_like(c_sc)

    gates = xp_ref[0] + jnp.dot(h_sc[...], whh_ref[...],
                                preferred_element_type=jnp.float32)
    # gate slices at 0/128/256/384 -> lane-tile aligned (hp = 128)
    i = jax.nn.sigmoid(gates[:, 0 * hp:1 * hp])
    f = jax.nn.sigmoid(gates[:, 1 * hp:2 * hp])
    g = jnp.tanh(gates[:, 2 * hp:3 * hp])
    o = jax.nn.sigmoid(gates[:, 3 * hp:4 * hp])
    c_new = f * c_sc[...] + i * g
    h_new = o * jnp.tanh(c_new)
    c_sc[...] = c_new
    h_sc[...] = h_new
    y_ref[0] = h_new


def pallas_lstm_layer(xp_sbg, whh_p):
    """xp:(S,B,4*Hp) pre-projected inputs (bias folded in); whh:(Hp,4*Hp)."""
    S, B, G = xp_sbg.shape
    Hp = G // 4
    return pl.pallas_call(
        functools.partial(_lstm_layer_kernel, hp=Hp),
        out_shape=jax.ShapeDtypeStruct((S, B, Hp), jnp.float32),
        grid_spec=pltpu.PrefetchScalarGridSpec(
            num_scalar_prefetch=0,
            grid=(S,),
            in_specs=[
                pl.BlockSpec((1, B, G), lambda t: (t, 0, 0)),
                pl.BlockSpec((Hp, G), lambda t: (0, 0)),
            ],
            out_specs=pl.BlockSpec((1, B, Hp), lambda t: (t, 0, 0)),
            scratch_shapes=[pltpu.VMEM((B, Hp), jnp.float32),
                            pltpu.VMEM((B, Hp), jnp.float32)],
        ),
        compiler_params=pltpu.CompilerParams(
            dimension_semantics=("arbitrary",)),
    )(xp_sbg.astype(jnp.float32), whh_p.astype(jnp.float32))


def lstm2(x_bsd, p):
    """2-layer LSTM (zero init state).  x:(B,S,24) -> y:(B,S,Hp) (pad cols = 0)."""
    B, S, D = x_bsd.shape
    # Hoisted layer-0 input projection over all B*S rows (tiny -> plain XLA).
    xp0 = x_bsd.reshape(B * S, D) @ p["wih0"] + p["b0"]              # (B*S,4Hp)
    xp0 = jnp.transpose(xp0.reshape(B, S, 4 * LSTM_PAD), (1, 0, 2))  # (S,B,4Hp)
    y0 = pallas_lstm_layer(xp0, p["whh0"])                           # (S,B,Hp)
    # TODO(synk): nn.LSTM inter-layer dropout(p=0.1) is train-only; identity here.
    xp1 = y0.reshape(S * B, LSTM_PAD) @ p["wih1"] + p["b1"]          # (S*B,4Hp)
    xp1 = xp1.reshape(S, B, 4 * LSTM_PAD)
    y1 = pallas_lstm_layer(xp1, p["whh1"])                           # (S,B,Hp)
    return jnp.transpose(y1, (1, 0, 2))                              # (B,S,Hp)


# ----------------------------------------------------------------------------
# Encoder / decoder built from the Pallas conv GEMM.
# ----------------------------------------------------------------------------
def encoder(x_nchw, p):
    h = conv3x3_pallas(x_nchw, p["e_w1t"], p["e_b1"], 2, "relu", jnp.bfloat16)
    h = conv3x3_pallas(h, p["e_w2t"], p["e_b2"], 2, "relu", jnp.bfloat16)
    h = conv3x3_pallas(h, p["e_w3t"], p["e_b3"], 2, "relu", jnp.bfloat16)
    h = h.reshape(h.shape[0], -1).astype(jnp.float32)       # (N, 2048)
    # Tiny GEMM (M=B*S, N=15): plain XLA beats a pallas_call launch.
    return h @ p["e_wfc"] + p["e_bfc"]                       # (N, 15)


def upsample2(x):
    # TODO(synk): fuse the 2x nearest upsample into the following conv's im2col
    # to avoid one HBM round-trip of the upsampled activation.
    return jnp.repeat(jnp.repeat(x, 2, axis=2), 2, axis=3)


def decoder(z, p):
    N = z.shape[0]
    h = jax.nn.relu(z @ p["d_wfc"] + p["d_bfc"])             # tiny GEMM, plain XLA
    h = h.reshape(N, 32, 8, 8).astype(jnp.bfloat16)
    h = upsample2(h)                                          # (N,32,16,16)
    h = conv3x3_pallas(h, p["d_w1t"], p["d_b1"], 1, "relu", jnp.bfloat16)
    h = upsample2(h)                                          # (N,16,32,32)
    h = conv3x3_pallas(h, p["d_w2t"], p["d_b2"], 1, "relu", jnp.bfloat16)
    h = upsample2(h)                                          # (N,8,64,64)
    h = conv3x3_pallas(h, p["d_w3t"], p["d_b3"], 1, "sigmoid", jnp.float32)
    return h                                                  # (N,3,64,64) f32


# ----------------------------------------------------------------------------
# IM2IM forward (memory=None path): encoder -> cat -> LSTM -> split -> heads.
# ----------------------------------------------------------------------------
def im2im_forward(state, image, params):
    B, S, C, H, W = image.shape
    img_flat = image.reshape(B * S, C, H, W).astype(jnp.bfloat16)
    feat = encoder(img_flat, params).reshape(B, S, IMG_FEAT_DIM)      # (B,S,15)
    x = jnp.concatenate([feat, state.astype(jnp.float32)], axis=2)    # (B,S,24)

    y = lstm2(x, params)                                              # (B,S,128)
    image_feature_hat = y[:, :, :IMG_FEAT_DIM]                        # (B,S,15)
    state_feature = y[:, :, IMG_FEAT_DIM:LSTM_DIM]                    # (B,S,85)

    # State head (85 -> 9): tiny, plain XLA.
    state_hat = (jnp.einsum("bsh,hd->bsd", state_feature, params["l_w"])
                 + params["l_b"])                                     # (B,S,9)

    image_hat = decoder(image_feature_hat.reshape(B * S, IMG_FEAT_DIM), params)
    image_hat = image_hat.reshape(B, S, C, H, W)
    return state_hat, image_hat


# ----------------------------------------------------------------------------
# Deterministic synthetic parameters (Hp-padded LSTM, transposed conv weights).
# ----------------------------------------------------------------------------
def _pad_gate_cols(w, h, hp):
    """Zero-pad each of the 4 gate blocks along the last axis from h to hp."""
    parts = jnp.split(w, 4, axis=-1)
    pad = [(0, 0)] * (w.ndim - 1) + [(0, hp - h)]
    return jnp.concatenate([jnp.pad(q, pad) for q in parts], axis=-1)


def init_params(key):
    ks = iter(jax.random.split(key, 32))

    def dense(k, fi, fo):
        return (jax.random.normal(k, (fi, fo), jnp.float32)
                / jnp.sqrt(jnp.float32(fi)))

    def conv_t(k, cin, cout):   # (Cout, Cin*9); feature order (Cin, kh, kw)
        return (jax.random.normal(k, (cout, cin * 9), jnp.float32)
                / jnp.sqrt(jnp.float32(cin * 9))).astype(jnp.bfloat16)

    H, Hp = LSTM_DIM, LSTM_PAD
    p = {}
    # Encoder: convs 3->8->16->32 (3x3 stride 2), fc 2048->15.
    p["e_w1t"], p["e_b1"] = conv_t(next(ks), 3, 8),   jnp.zeros((8,), jnp.float32)
    p["e_w2t"], p["e_b2"] = conv_t(next(ks), 8, 16),  jnp.zeros((16,), jnp.float32)
    p["e_w3t"], p["e_b3"] = conv_t(next(ks), 16, 32), jnp.zeros((32,), jnp.float32)
    p["e_wfc"] = dense(next(ks), 2048, IMG_FEAT_DIM)
    p["e_bfc"] = jnp.zeros((IMG_FEAT_DIM,), jnp.float32)
    # LSTM (gate order i,f,g,o).  Hidden padded 100->128 with zero gate columns
    # and zero recurrent rows so padded units stay identically zero.
    wih0 = dense(next(ks), IMG_FEAT_DIM + STATE_DIM, 4 * H)
    whh0 = dense(next(ks), H, 4 * H)
    b0 = 0.01 * jax.random.normal(next(ks), (4 * H,), jnp.float32)
    wih1 = dense(next(ks), H, 4 * H)
    whh1 = dense(next(ks), H, 4 * H)
    b1 = 0.01 * jax.random.normal(next(ks), (4 * H,), jnp.float32)
    p["wih0"] = _pad_gate_cols(wih0, H, Hp)                               # (24,512)
    p["whh0"] = _pad_gate_cols(jnp.pad(whh0, ((0, Hp - H), (0, 0))), H, Hp)
    p["b0"] = _pad_gate_cols(b0[None, :], H, Hp)[0]
    p["wih1"] = _pad_gate_cols(jnp.pad(wih1, ((0, Hp - H), (0, 0))), H, Hp)
    p["whh1"] = _pad_gate_cols(jnp.pad(whh1, ((0, Hp - H), (0, 0))), H, Hp)
    p["b1"] = _pad_gate_cols(b1[None, :], H, Hp)[0]
    # State head: (100-15) -> 9.
    p["l_w"] = dense(next(ks), H - IMG_FEAT_DIM, STATE_DIM)
    p["l_b"] = jnp.zeros((STATE_DIM,), jnp.float32)
    # Decoder: fc 15->2048, convs 32->16->8->3.
    p["d_wfc"] = dense(next(ks), IMG_FEAT_DIM, 2048)
    p["d_bfc"] = jnp.zeros((2048,), jnp.float32)
    p["d_w1t"], p["d_b1"] = conv_t(next(ks), 32, 16), jnp.zeros((16,), jnp.float32)
    p["d_w2t"], p["d_b2"] = conv_t(next(ks), 16, 8),  jnp.zeros((8,), jnp.float32)
    p["d_w3t"], p["d_b3"] = conv_t(next(ks), 8, 3),   jnp.zeros((3,), jnp.float32)
    return p


if __name__ == "__main__":
    key = jax.random.PRNGKey(0)
    k_par, k_state, k_img = jax.random.split(key, 3)

    B, S = 2, 4
    params = init_params(k_par)
    state = jax.random.normal(k_state, (B, S, STATE_DIM), jnp.float32)
    image = jax.random.normal(k_img, (B, S, 3, IMAGE_SIZE, IMAGE_SIZE), jnp.float32)

    fwd = jax.jit(im2im_forward)
    state_hat, image_hat = fwd(state, image, params)
    jax.block_until_ready((state_hat, image_hat))

    assert state_hat.shape == (B, S, STATE_DIM), state_hat.shape
    assert image_hat.shape == (B, S, 3, IMAGE_SIZE, IMAGE_SIZE), image_hat.shape
    assert bool(jnp.all(jnp.isfinite(state_hat)))
    assert bool(jnp.all(jnp.isfinite(image_hat)))
    print("KERNEL_OK")
</pallas_src>

<mosaic_0001>
module attributes {stable_mosaic.version = 11 : i64} {
  func.func @_conv_mm_kernel(%arg0: i32, %arg1: memref<8x27xbf16, #tpu.memory_space<vmem>>, %arg2: memref<1x27x1024xbf16, #tpu.memory_space<vmem>>, %arg3: memref<8x1xf32, #tpu.memory_space<vmem>>, %arg4: memref<1x8x1024xbf16, #tpu.memory_space<vmem>>) attributes {dimension_semantics = [#tpu.dimension_semantics<parallel>], iteration_bounds = array<i64: 8>, scalar_prefetch = 0 : i64, scratch_operands = 0 : i64, tpu.core_type = #tpu.core_type<tc>, window_params = [{pipeline_mode = #tpu.pipeline_mode<synchronous>, transform_indices = @transform_0, window_bounds = array<i64: 8, 27>}, {transform_indices = @transform_1, window_bounds = array<i64: 1, 27, 1024>}, {pipeline_mode = #tpu.pipeline_mode<synchronous>, transform_indices = @transform_2, window_bounds = array<i64: 8, 1>}, {transform_indices = @transform_3, window_bounds = array<i64: 1, 8, 1024>}]} {
    %c0 = arith.constant 0 : index
    %c0_0 = arith.constant 0 : index
    %0 = vector.load %arg1[%c0, %c0_0] : memref<8x27xbf16, #tpu.memory_space<vmem>>, vector<8x27xbf16>
    %c0_1 = arith.constant 0 : index
    %c0_2 = arith.constant 0 : index
    %c0_3 = arith.constant 0 : index
    %1 = vector.load %arg2[%c0_1, %c0_2, %c0_3] : memref<1x27x1024xbf16, #tpu.memory_space<vmem>>, vector<1x27x1024xbf16>
    %2 = vector.shape_cast %1 : vector<1x27x1024xbf16> to vector<27x1024xbf16>
    %cst = arith.constant dense<0.000000e+00> : vector<8x1024xf32>
    %3 = tpu.matmul %0, %2, %cst {dimension_numbers = #tpu.dot_dimension_numbers<[1], [0], [0], [1], [0, 0, 1, 1], [], []>} : vector<8x27xbf16>, vector<27x1024xbf16>, vector<8x1024xf32> -> vector<8x1024xf32>
    %c0_4 = arith.constant 0 : index
    %c0_5 = arith.constant 0 : index
    %4 = vector.load %arg3[%c0_4, %c0_5] : memref<8x1xf32, #tpu.memory_space<vmem>>, vector<8x1xf32>
    %5 = vector.broadcast %4 : vector<8x1xf32> to vector<8x1024xf32>
    %6 = arith.addf %3, %5 : vector<8x1024xf32>
    %cst_6 = arith.constant 0.000000e+00 : f32
    %7 = vector.broadcast %cst_6 : f32 to vector<8x1024xf32>
    %8 = arith.maximumf %6, %7 : vector<8x1024xf32>
    %9 = arith.truncf %8 : vector<8x1024xf32> to vector<8x1024xbf16>
    %c0_7 = arith.constant 0 : index
    %c0_8 = arith.constant 0 : index
    %c0_9 = arith.constant 0 : index
    %10 = vector.load %arg4[%c0_7, %c0_8, %c0_9] : memref<1x8x1024xbf16, #tpu.memory_space<vmem>>, vector<1x8x1024xbf16>
    %11 = vector.shape_cast %10 : vector<1x8x1024xbf16> to vector<8x1024xbf16>
    %12 = vector.shape_cast %9 : vector<8x1024xbf16> to vector<1x8x1024xbf16>
    tpu.vector_store %arg4[%c0_7, %c0_8, %c0_9], %12 {strides = array<i32>} : memref<1x8x1024xbf16, #tpu.memory_space<vmem>>, vector<1x8x1024xbf16>,
    return
  }
  func.func @transform_0(%arg0: i32) -> (i32, i32) {
    %c0_i32 = arith.constant 0 : i32
    %c0_i32_0 = arith.constant 0 : i32
    %c0_i32_1 = arith.constant 0 : i32
    return %c0_i32, %c0_i32_0 : i32, i32
  }
  func.func @transform_1(%arg0: i32) -> (i32, i32, i32) {
    %c0_i32 = arith.constant 0 : i32
    %c0_i32_0 = arith.constant 0 : i32
    %c0_i32_1 = arith.constant 0 : i32
    return %arg0, %c0_i32, %c0_i32_0 : i32, i32, i32
  }
  func.func @transform_2(%arg0: i32) -> (i32, i32) {
    %c0_i32 = arith.constant 0 : i32
    %c0_i32_0 = arith.constant 0 : i32
    %c0_i32_1 = arith.constant 0 : i32
    return %c0_i32, %c0_i32_0 : i32, i32
  }
  func.func @transform_3(%arg0: i32) -> (i32, i32, i32) {
    %c0_i32 = arith.constant 0 : i32
    %c0_i32_0 = arith.constant 0 : i32
    %c0_i32_1 = arith.constant 0 : i32
    return %arg0, %c0_i32, %c0_i32_0 : i32, i32, i32
  }
}

module attributes {stable_mosaic.version = 11 : i64} {
  func.func @_conv_mm_kernel(%arg0: i32, %arg1: memref<16x72xbf16, #tpu.memory_space<vmem>>, %arg2: memref<1x72x256xbf16, #tpu.memory_space<vmem>>, %arg3: memref<16x1xf32, #tpu.memory_space<vmem>>, %arg4: memref<1x16x256xbf16, #tpu.memory_space<vmem>>) attributes {dimension_semantics = [#tpu.dimension_semantics<parallel>], iteration_bounds = array<i64: 8>, scalar_prefetch = 0 : i64, scratch_operands = 0 : i64, tpu.core_type = #tpu.core_type<tc>, window_params = [{pipeline_mode = #tpu.pipeline_mode<synchronous>, transform_indices = @transform_0, window_bounds = array<i64: 16, 72>}, {transform_indices = @transform_1, window_bounds = array<i64: 1, 72, 256>}, {pipeline_mode = #tpu.pipeline_mode<synchronous>, transform_indices = @transform_2, window_bounds = array<i64: 16, 1>}, {transform_indices = @transform_3, window_bounds = array<i64: 1, 16, 256>}]} {
    %c0 = arith.constant 0 : index
    %c0_0 = arith.constant 0 : index
    %0 = vector.load %arg1[%c0, %c0_0] : memref<16x72xbf16, #tpu.memory_space<vmem>>, vector<16x72xbf16>
    %c0_1 = arith.constant 0 : index
    %c0_2 = arith.constant 0 : index
    %c0_3 = arith.constant 0 : index
    %1 = vector.load %arg2[%c0_1, %c0_2, %c0_3] : memref<1x72x256xbf16, #tpu.memory_space<vmem>>, vector<1x72x256xbf16>
    %2 = vector.shape_cast %1 : vector<1x72x256xbf16> to vector<72x256xbf16>
    %cst = arith.constant dense<0.000000e+00> : vector<16x256xf32>
    %3 = tpu.matmul %0, %2, %cst {dimension_numbers = #tpu.dot_dimension_numbers<[1], [0], [0], [1], [0, 0, 1, 1], [], []>} : vector<16x72xbf16>, vector<72x256xbf16>, vector<16x256xf32> -> vector<16x256xf32>
    %c0_4 = arith.constant 0 : index
    %c0_5 = arith.constant 0 : index
    %4 = vector.load %arg3[%c0_4, %c0_5] : memref<16x1xf32, #tpu.memory_space<vmem>>, vector<16x1xf32>
    %5 = vector.broadcast %4 : vector<16x1xf32> to vector<16x256xf32>
    %6 = arith.addf %3, %5 : vector<16x256xf32>
    %cst_6 = arith.constant 0.000000e+00 : f32
    %7 = vector.broadcast %cst_6 : f32 to vector<16x256xf32>
    %8 = arith.maximumf %6, %7 : vector<16x256xf32>
    %9 = arith.truncf %8 : vector<16x256xf32> to vector<16x256xbf16>
    %c0_7 = arith.constant 0 : index
    %c0_8 = arith.constant 0 : index
    %c0_9 = arith.constant 0 : index
    %10 = vector.load %arg4[%c0_7, %c0_8, %c0_9] : memref<1x16x256xbf16, #tpu.memory_space<vmem>>, vector<1x16x256xbf16>
    %11 = vector.shape_cast %10 : vector<1x16x256xbf16> to vector<16x256xbf16>
    %12 = vector.shape_cast %9 : vector<16x256xbf16> to vector<1x16x256xbf16>
    tpu.vector_store %arg4[%c0_7, %c0_8, %c0_9], %12 {strides = array<i32>} : memref<1x16x256xbf16, #tpu.memory_space<vmem>>, vector<1x16x256xbf16>,
    return
  }
  func.func @transform_0(%arg0: i32) -> (i32, i32) {
    %c0_i32 = arith.constant 0 : i32
    %c0_i32_0 = arith.constant 0 : i32
    %c0_i32_1 = arith.constant 0 : i32
    return %c0_i32, %c0_i32_0 : i32, i32
  }
  func.func @transform_1(%arg0: i32) -> (i32, i32, i32) {
    %c0_i32 = arith.constant 0 : i32
    %c0_i32_0 = arith.constant 0 : i32
    %c0_i32_1 = arith.constant 0 : i32
    return %arg0, %c0_i32, %c0_i32_0 : i32, i32, i32
  }
  func.func @transform_2(%arg0: i32) -> (i32, i32) {
    %c0_i32 = arith.constant 0 : i32
    %c0_i32_0 = arith.constant 0 : i32
    %c0_i32_1 = arith.constant 0 : i32
    return %c0_i32, %c0_i32_0 : i32, i32
  }
  func.func @transform_3(%arg0: i32) -> (i32, i32, i32) {
    %c0_i32 = arith.constant 0 : i32
    %c0_i32_0 = arith.constant 0 : i32
    %c0_i32_1 = arith.constant 0 : i32
    return %arg0, %c0_i32, %c0_i32_0 : i32, i32, i32
  }
}

module attributes {stable_mosaic.version = 11 : i64} {
  func.func @_conv_mm_kernel(%arg0: i32, %arg1: memref<32x144xbf16, #tpu.memory_space<vmem>>, %arg2: memref<1x144x64xbf16, #tpu.memory_space<vmem>>, %arg3: memref<32x1xf32, #tpu.memory_space<vmem>>, %arg4: memref<1x32x64xbf16, #tpu.memory_space<vmem>>) attributes {dimension_semantics = [#tpu.dimension_semantics<parallel>], iteration_bounds = array<i64: 8>, scalar_prefetch = 0 : i64, scratch_operands = 0 : i64, tpu.core_type = #tpu.core_type<tc>, window_params = [{pipeline_mode = #tpu.pipeline_mode<synchronous>, transform_indices = @transform_0, window_bounds = array<i64: 32, 144>}, {transform_indices = @transform_1, window_bounds = array<i64: 1, 144, 64>}, {pipeline_mode = #tpu.pipeline_mode<synchronous>, transform_indices = @transform_2, window_bounds = array<i64: 32, 1>}, {transform_indices = @transform_3, window_bounds = array<i64: 1, 32, 64>}]} {
    %c0 = arith.constant 0 : index
    %c0_0 = arith.constant 0 : index
    %0 = vector.load %arg1[%c0, %c0_0] : memref<32x144xbf16, #tpu.memory_space<vmem>>, vector<32x144xbf16>
    %c0_1 = arith.constant 0 : index
    %c0_2 = arith.constant 0 : index
    %c0_3 = arith.constant 0 : index
    %1 = vector.load %arg2[%c0_1, %c0_2, %c0_3] : memref<1x144x64xbf16, #tpu.memory_space<vmem>>, vector<1x144x64xbf16>
    %2 = vector.shape_cast %1 : vector<1x144x64xbf16> to vector<144x64xbf16>
    %cst = arith.constant dense<0.000000e+00> : vector<32x64xf32>
    %3 = tpu.matmul %0, %2, %cst {dimension_numbers = #tpu.dot_dimension_numbers<[1], [0], [0], [1], [0, 0, 1, 1], [], []>} : vector<32x144xbf16>, vector<144x64xbf16>, vector<32x64xf32> -> vector<32x64xf32>
    %c0_4 = arith.constant 0 : index
    %c0_5 = arith.constant 0 : index
    %4 = vector.load %arg3[%c0_4, %c0_5] : memref<32x1xf32, #tpu.memory_space<vmem>>, vector<32x1xf32>
    %5 = vector.broadcast %4 : vector<32x1xf32> to vector<32x64xf32>
    %6 = arith.addf %3, %5 : vector<32x64xf32>
    %cst_6 = arith.constant 0.000000e+00 : f32
    %7 = vector.broadcast %cst_6 : f32 to vector<32x64xf32>
    %8 = arith.maximumf %6, %7 : vector<32x64xf32>
    %9 = arith.truncf %8 : vector<32x64xf32> to vector<32x64xbf16>
    %c0_7 = arith.constant 0 : index
    %c0_8 = arith.constant 0 : index
    %c0_9 = arith.constant 0 : index
    %10 = vector.load %arg4[%c0_7, %c0_8, %c0_9] : memref<1x32x64xbf16, #tpu.memory_space<vmem>>, vector<1x32x64xbf16>
    %11 = vector.shape_cast %10 : vector<1x32x64xbf16> to vector<32x64xbf16>
    %12 = vector.shape_cast %9 : vector<32x64xbf16> to vector<1x32x64xbf16>
    tpu.vector_store %arg4[%c0_7, %c0_8, %c0_9], %12 {strides = array<i32>} : memref<1x32x64xbf16, #tpu.memory_space<vmem>>, vector<1x32x64xbf16>,
    return
  }
  func.func @transform_0(%arg0: i32) -> (i32, i32) {
    %c0_i32 = arith.constant 0 : i32
    %c0_i32_0 = arith.constant 0 : i32
    %c0_i32_1 = arith.constant 0 : i32
    return %c0_i32, %c0_i32_0 : i32, i32
  }
  func.func @transform_1(%arg0: i32) -> (i32, i32, i32) {
    %c0_i32 = arith.constant 0 : i32
    %c0_i32_0 = arith.constant 0 : i32
    %c0_i32_1 = arith.constant 0 : i32
    return %arg0, %c0_i32, %c0_i32_0 : i32, i32, i32
  }
  func.func @transform_2(%arg0: i32) -> (i32, i32) {
    %c0_i32 = arith.constant 0 : i32
    %c0_i32_0 = arith.constant 0 : i32
    %c0_i32_1 = arith.constant 0 : i32
    return %c0_i32, %c0_i32_0 : i32, i32
  }
  func.func @transform_3(%arg0: i32) -> (i32, i32, i32) {
    %c0_i32 = arith.constant 0 : i32
    %c0_i32_0 = arith.constant 0 : i32
    %c0_i32_1 = arith.constant 0 : i32
    return %arg0, %c0_i32, %c0_i32_0 : i32, i32, i32
  }
}

module attributes {stable_mosaic.version = 11 : i64} {
  func.func @_lstm_layer_kernel(%arg0: i32, %arg1: memref<1x2x512xf32, #tpu.memory_space<vmem>>, %arg2: memref<128x512xf32, #tpu.memory_space<vmem>>, %arg3: memref<1x2x128xf32, #tpu.memory_space<vmem>>, %arg4: memref<2x128xf32, #tpu.memory_space<vmem>>, %arg5: memref<2x128xf32, #tpu.memory_space<vmem>>) attributes {dimension_semantics = [#tpu.dimension_semantics<arbitrary>], iteration_bounds = array<i64: 4>, scalar_prefetch = 0 : i64, scratch_operands = 2 : i64, tpu.core_type = #tpu.core_type<tc>, window_params = [{transform_indices = @transform_0, window_bounds = array<i64: 1, 2, 512>}, {pipeline_mode = #tpu.pipeline_mode<synchronous>, transform_indices = @transform_1, window_bounds = array<i64: 128, 512>}, {transform_indices = @transform_2, window_bounds = array<i64: 1, 2, 128>}]} {
    %c0_i32 = arith.constant 0 : i32
    %0 = arith.cmpi eq, %arg0, %c0_i32 : i32
    %1 = arith.extui %0 : i1 to i32
    %c0_i32_0 = arith.constant 0 : i32
    %2 = arith.cmpi ne, %1, %c0_i32_0 : i32
    scf.if %2 {
      %cst_19 = arith.constant 0.000000e+00 : f32
      %40 = vector.broadcast %cst_19 : f32 to vector<2x128xf32>
      %c0_20 = arith.constant 0 : index
      %c0_21 = arith.constant 0 : index
      %41 = vector.load %arg4[%c0_20, %c0_21] : memref<2x128xf32, #tpu.memory_space<vmem>>, vector<2x128xf32>
      tpu.vector_store %arg4[%c0_20, %c0_21], %40 {strides = array<i32>} : memref<2x128xf32, #tpu.memory_space<vmem>>, vector<2x128xf32>,
      %cst_22 = arith.constant 0.000000e+00 : f32
      %42 = vector.broadcast %cst_22 : f32 to vector<2x128xf32>
      %c0_23 = arith.constant 0 : index
      %c0_24 = arith.constant 0 : index
      %43 = vector.load %arg5[%c0_23, %c0_24] : memref<2x128xf32, #tpu.memory_space<vmem>>, vector<2x128xf32>
      tpu.vector_store %arg5[%c0_23, %c0_24], %42 {strides = array<i32>} : memref<2x128xf32, #tpu.memory_space<vmem>>, vector<2x128xf32>,
    } else {
    }
    %c0 = arith.constant 0 : index
    %c0_1 = arith.constant 0 : index
    %c0_2 = arith.constant 0 : index
    %3 = vector.load %arg1[%c0, %c0_1, %c0_2] : memref<1x2x512xf32, #tpu.memory_space<vmem>>, vector<1x2x512xf32>
    %4 = vector.shape_cast %3 : vector<1x2x512xf32> to vector<2x512xf32>
    %c0_3 = arith.constant 0 : index
    %c0_4 = arith.constant 0 : index
    %5 = vector.load %arg4[%c0_3, %c0_4] : memref<2x128xf32, #tpu.memory_space<vmem>>, vector<2x128xf32>
    %c0_5 = arith.constant 0 : index
    %c0_6 = arith.constant 0 : index
    %6 = vector.load %arg2[%c0_5, %c0_6] : memref<128x512xf32, #tpu.memory_space<vmem>>, vector<128x512xf32>
    %cst = arith.constant dense<0.000000e+00> : vector<2x512xf32>
    %7 = tpu.matmul %5, %6, %cst {dimension_numbers = #tpu.dot_dimension_numbers<[1], [0], [0], [1], [0, 0, 1, 1], [], []>} : vector<2x128xf32>, vector<128x512xf32>, vector<2x512xf32> -> vector<2x512xf32>
    %8 = arith.addf %4, %7 : vector<2x512xf32>
    %9 = vector.extract_strided_slice %8 {offsets = [0, 0], sizes = [2, 128], strides = [1, 1]} : vector<2x512xf32> to vector<2x128xf32>
    %10 = arith.negf %9 : vector<2x128xf32>
    %11 = math.exp %10 : vector<2x128xf32>
    %cst_7 = arith.constant 1.000000e+00 : f32
    %12 = vector.broadcast %cst_7 : f32 to vector<2x128xf32>
    %13 = arith.addf %12, %11 : vector<2x128xf32>
    %14 = arith.divf %12, %13 : vector<2x128xf32>
    %15 = vector.extract_strided_slice %8 {offsets = [0, 128], sizes = [2, 128], strides = [1, 1]} : vector<2x512xf32> to vector<2x128xf32>
    %16 = arith.negf %15 : vector<2x128xf32>
    %17 = math.exp %16 : vector<2x128xf32>
    %cst_8 = arith.constant 1.000000e+00 : f32
    %18 = vector.broadcast %cst_8 : f32 to vector<2x128xf32>
    %19 = arith.addf %18, %17 : vector<2x128xf32>
    %20 = arith.divf %18, %19 : vector<2x128xf32>
    %21 = vector.extract_strided_slice %8 {offsets = [0, 256], sizes = [2, 128], strides = [1, 1]} : vector<2x512xf32> to vector<2x128xf32>
    %22 = math.tanh %21 : vector<2x128xf32>
    %23 = vector.extract_strided_slice %8 {offsets = [0, 384], sizes = [2, 128], strides = [1, 1]} : vector<2x512xf32> to vector<2x128xf32>
    %24 = arith.negf %23 : vector<2x128xf32>
    %25 = math.exp %24 : vector<2x128xf32>
    %cst_9 = arith.constant 1.000000e+00 : f32
    %26 = vector.broadcast %cst_9 : f32 to vector<2x128xf32>
    %27 = arith.addf %26, %25 : vector<2x128xf32>
    %28 = arith.divf %26, %27 : vector<2x128xf32>
    %c0_10 = arith.constant 0 : index
    %c0_11 = arith.constant 0 : index
    %29 = vector.load %arg5[%c0_10, %c0_11] : memref<2x128xf32, #tpu.memory_space<vmem>>, vector<2x128xf32>
    %30 = arith.mulf %20, %29 : vector<2x128xf32>
    %31 = arith.mulf %14, %22 : vector<2x128xf32>
    %32 = arith.addf %30, %31 : vector<2x128xf32>
    %33 = math.tanh %32 : vector<2x128xf32>
    %34 = arith.mulf %28, %33 : vector<2x128xf32>
    %c0_12 = arith.constant 0 : index
    %c0_13 = arith.constant 0 : index
    %35 = vector.load %arg5[%c0_12, %c0_13] : memref<2x128xf32, #tpu.memory_space<vmem>>, vector<2x128xf32>
    tpu.vector_store %arg5[%c0_12, %c0_13], %32 {strides = array<i32>} : memref<2x128xf32, #tpu.memory_space<vmem>>, vector<2x128xf32>,
    %c0_14 = arith.constant 0 : index
    %c0_15 = arith.constant 0 : index
    %36 = vector.load %arg4[%c0_14, %c0_15] : memref<2x128xf32, #tpu.memory_space<vmem>>, vector<2x128xf32>
    tpu.vector_store %arg4[%c0_14, %c0_15], %34 {strides = array<i32>} : memref<2x128xf32, #tpu.memory_space<vmem>>, vector<2x128xf32>,
    %c0_16 = arith.constant 0 : index
    %c0_17 = arith.constant 0 : index
    %c0_18 = arith.constant 0 : index
    %37 = vector.load %arg3[%c0_16, %c0_17, %c0_18] : memref<1x2x128xf32, #tpu.memory_space<vmem>>, vector<1x2x128xf32>
    %38 = vector.shape_cast %37 : vector<1x2x128xf32> to vector<2x128xf32>
    %39 = vector.shape_cast %34 : vector<2x128xf32> to vector<1x2x128xf32>
    tpu.vector_store %arg3[%c0_16, %c0_17, %c0_18], %39 {strides = array<i32>} : memref<1x2x128xf32, #tpu.memory_space<vmem>>, vector<1x2x128xf32>,
    return
  }
  func.func @transform_0(%arg0: i32) -> (i32, i32, i32) {
    %c0_i32 = arith.constant 0 : i32
    %c0_i32_0 = arith.constant 0 : i32
    %c0_i32_1 = arith.constant 0 : i32
    return %arg0, %c0_i32, %c0_i32_0 : i32, i32, i32
  }
  func.func @transform_1(%arg0: i32) -> (i32, i32) {
    %c0_i32 = arith.constant 0 : i32
    %c0_i32_0 = arith.constant 0 : i32
    %c0_i32_1 = arith.constant 0 : i32
    return %c0_i32, %c0_i32_0 : i32, i32
  }
  func.func @transform_2(%arg0: i32) -> (i32, i32, i32) {
    %c0_i32 = arith.constant 0 : i32
    %c0_i32_0 = arith.constant 0 : i32
    %c0_i32_1 = arith.constant 0 : i32
    return %arg0, %c0_i32, %c0_i32_0 : i32, i32, i32
  }
}

module attributes {stable_mosaic.version = 11 : i64} {
  func.func @_conv_mm_kernel(%arg0: i32, %arg1: memref<16x288xbf16, #tpu.memory_space<vmem>>, %arg2: memref<1x288x256xbf16, #tpu.memory_space<vmem>>, %arg3: memref<16x1xf32, #tpu.memory_space<vmem>>, %arg4: memref<1x16x256xbf16, #tpu.memory_space<vmem>>) attributes {dimension_semantics = [#tpu.dimension_semantics<parallel>], iteration_bounds = array<i64: 8>, scalar_prefetch = 0 : i64, scratch_operands = 0 : i64, tpu.core_type = #tpu.core_type<tc>, window_params = [{pipeline_mode = #tpu.pipeline_mode<synchronous>, transform_indices = @transform_0, window_bounds = array<i64: 16, 288>}, {transform_indices = @transform_1, window_bounds = array<i64: 1, 288, 256>}, {pipeline_mode = #tpu.pipeline_mode<synchronous>, transform_indices = @transform_2, window_bounds = array<i64: 16, 1>}, {transform_indices = @transform_3, window_bounds = array<i64: 1, 16, 256>}]} {
    %c0 = arith.constant 0 : index
    %c0_0 = arith.constant 0 : index
    %0 = vector.load %arg1[%c0, %c0_0] : memref<16x288xbf16, #tpu.memory_space<vmem>>, vector<16x288xbf16>
    %c0_1 = arith.constant 0 : index
    %c0_2 = arith.constant 0 : index
    %c0_3 = arith.constant 0 : index
    %1 = vector.load %arg2[%c0_1, %c0_2, %c0_3] : memref<1x288x256xbf16, #tpu.memory_space<vmem>>, vector<1x288x256xbf16>
    %2 = vector.shape_cast %1 : vector<1x288x256xbf16> to vector<288x256xbf16>
    %cst = arith.constant dense<0.000000e+00> : vector<16x256xf32>
    %3 = tpu.matmul %0, %2, %cst {dimension_numbers = #tpu.dot_dimension_numbers<[1], [0], [0], [1], [0, 0, 1, 1], [], []>} : vector<16x288xbf16>, vector<288x256xbf16>, vector<16x256xf32> -> vector<16x256xf32>
    %c0_4 = arith.constant 0 : index
    %c0_5 = arith.constant 0 : index
    %4 = vector.load %arg3[%c0_4, %c0_5] : memref<16x1xf32, #tpu.memory_space<vmem>>, vector<16x1xf32>
    %5 = vector.broadcast %4 : vector<16x1xf32> to vector<16x256xf32>
    %6 = arith.addf %3, %5 : vector<16x256xf32>
    %cst_6 = arith.constant 0.000000e+00 : f32
    %7 = vector.broadcast %cst_6 : f32 to vector<16x256xf32>
    %8 = arith.maximumf %6, %7 : vector<16x256xf32>
    %9 = arith.truncf %8 : vector<16x256xf32> to vector<16x256xbf16>
    %c0_7 = arith.constant 0 : index
    %c0_8 = arith.constant 0 : index
    %c0_9 = arith.constant 0 : index
    %10 = vector.load %arg4[%c0_7, %c0_8, %c0_9] : memref<1x16x256xbf16, #tpu.memory_space<vmem>>, vector<1x16x256xbf16>
    %11 = vector.shape_cast %10 : vector<1x16x256xbf16> to vector<16x256xbf16>
    %12 = vector.shape_cast %9 : vector<16x256xbf16> to vector<1x16x256xbf16>
    tpu.vector_store %arg4[%c0_7, %c0_8, %c0_9], %12 {strides = array<i32>} : memref<1x16x256xbf16, #tpu.memory_space<vmem>>, vector<1x16x256xbf16>,
    return
  }
  func.func @transform_0(%arg0: i32) -> (i32, i32) {
    %c0_i32 = arith.constant 0 : i32
    %c0_i32_0 = arith.constant 0 : i32
    %c0_i32_1 = arith.constant 0 : i32
    return %c0_i32, %c0_i32_0 : i32, i32
  }
  func.func @transform_1(%arg0: i32) -> (i32, i32, i32) {
    %c0_i32 = arith.constant 0 : i32
    %c0_i32_0 = arith.constant 0 : i32
    %c0_i32_1 = arith.constant 0 : i32
    return %arg0, %c0_i32, %c0_i32_0 : i32, i32, i32
  }
  func.func @transform_2(%arg0: i32) -> (i32, i32) {
    %c0_i32 = arith.constant 0 : i32
    %c0_i32_0 = arith.constant 0 : i32
    %c0_i32_1 = arith.constant 0 : i32
    return %c0_i32, %c0_i32_0 : i32, i32
  }
  func.func @transform_3(%arg0: i32) -> (i32, i32, i32) {
    %c0_i32 = arith.constant 0 : i32
    %c0_i32_0 = arith.constant 0 : i32
    %c0_i32_1 = arith.constant 0 : i32
    return %arg0, %c0_i32, %c0_i32_0 : i32, i32, i32
  }
}

module attributes {stable_mosaic.version = 11 : i64} {
  func.func @_conv_mm_kernel(%arg0: i32, %arg1: memref<8x144xbf16, #tpu.memory_space<vmem>>, %arg2: memref<1x144x1024xbf16, #tpu.memory_space<vmem>>, %arg3: memref<8x1xf32, #tpu.memory_space<vmem>>, %arg4: memref<1x8x1024xbf16, #tpu.memory_space<vmem>>) attributes {dimension_semantics = [#tpu.dimension_semantics<parallel>], iteration_bounds = array<i64: 8>, scalar_prefetch = 0 : i64, scratch_operands = 0 : i64, tpu.core_type = #tpu.core_type<tc>, window_params = [{pipeline_mode = #tpu.pipeline_mode<synchronous>, transform_indices = @transform_0, window_bounds = array<i64: 8, 144>}, {transform_indices = @transform_1, window_bounds = array<i64: 1, 144, 1024>}, {pipeline_mode = #tpu.pipeline_mode<synchronous>, transform_indices = @transform_2, window_bounds = array<i64: 8, 1>}, {transform_indices = @transform_3, window_bounds = array<i64: 1, 8, 1024>}]} {
    %c0 = arith.constant 0 : index
    %c0_0 = arith.constant 0 : index
    %0 = vector.load %arg1[%c0, %c0_0] : memref<8x144xbf16, #tpu.memory_space<vmem>>, vector<8x144xbf16>
    %c0_1 = arith.constant 0 : index
    %c0_2 = arith.constant 0 : index
    %c0_3 = arith.constant 0 : index
    %1 = vector.load %arg2[%c0_1, %c0_2, %c0_3] : memref<1x144x1024xbf16, #tpu.memory_space<vmem>>, vector<1x144x1024xbf16>
    %2 = vector.shape_cast %1 : vector<1x144x1024xbf16> to vector<144x1024xbf16>
    %cst = arith.constant dense<0.000000e+00> : vector<8x1024xf32>
    %3 = tpu.matmul %0, %2, %cst {dimension_numbers = #tpu.dot_dimension_numbers<[1], [0], [0], [1], [0, 0, 1, 1], [], []>} : vector<8x144xbf16>, vector<144x1024xbf16>, vector<8x1024xf32> -> vector<8x1024xf32>
    %c0_4 = arith.constant 0 : index
    %c0_5 = arith.constant 0 : index
    %4 = vector.load %arg3[%c0_4, %c0_5] : memref<8x1xf32, #tpu.memory_space<vmem>>, vector<8x1xf32>
    %5 = vector.broadcast %4 : vector<8x1xf32> to vector<8x1024xf32>
    %6 = arith.addf %3, %5 : vector<8x1024xf32>
    %cst_6 = arith.constant 0.000000e+00 : f32
    %7 = vector.broadcast %cst_6 : f32 to vector<8x1024xf32>
    %8 = arith.maximumf %6, %7 : vector<8x1024xf32>
    %9 = arith.truncf %8 : vector<8x1024xf32> to vector<8x1024xbf16>
    %c0_7 = arith.constant 0 : index
    %c0_8 = arith.constant 0 : index
    %c0_9 = arith.constant 0 : index
    %10 = vector.load %arg4[%c0_7, %c0_8, %c0_9] : memref<1x8x1024xbf16, #tpu.memory_space<vmem>>, vector<1x8x1024xbf16>
    %11 = vector.shape_cast %10 : vector<1x8x1024xbf16> to vector<8x1024xbf16>
    %12 = vector.shape_cast %9 : vector<8x1024xbf16> to vector<1x8x1024xbf16>
    tpu.vector_store %arg4[%c0_7, %c0_8, %c0_9], %12 {strides = array<i32>} : memref<1x8x1024xbf16, #tpu.memory_space<vmem>>, vector<1x8x1024xbf16>,
    return
  }
  func.func @transform_0(%arg0: i32) -> (i32, i32) {
    %c0_i32 = arith.constant 0 : i32
    %c0_i32_0 = arith.constant 0 : i32
    %c0_i32_1 = arith.constant 0 : i32
    return %c0_i32, %c0_i32_0 : i32, i32
  }
  func.func @transform_1(%arg0: i32) -> (i32, i32, i32) {
    %c0_i32 = arith.constant 0 : i32
    %c0_i32_0 = arith.constant 0 : i32
    %c0_i32_1 = arith.constant 0 : i32
    return %arg0, %c0_i32, %c0_i32_0 : i32, i32, i32
  }
  func.func @transform_2(%arg0: i32) -> (i32, i32) {
    %c0_i32 = arith.constant 0 : i32
    %c0_i32_0 = arith.constant 0 : i32
    %c0_i32_1 = arith.constant 0 : i32
    return %c0_i32, %c0_i32_0 : i32, i32
  }
  func.func @transform_3(%arg0: i32) -> (i32, i32, i32) {
    %c0_i32 = arith.constant 0 : i32
    %c0_i32_0 = arith.constant 0 : i32
    %c0_i32_1 = arith.constant 0 : i32
    return %arg0, %c0_i32, %c0_i32_0 : i32, i32, i32
  }
}

module attributes {stable_mosaic.version = 11 : i64} {
  func.func @_conv_mm_kernel(%arg0: i32, %arg1: memref<3x72xbf16, #tpu.memory_space<vmem>>, %arg2: memref<1x72x4096xbf16, #tpu.memory_space<vmem>>, %arg3: memref<3x1xf32, #tpu.memory_space<vmem>>, %arg4: memref<1x3x4096xf32, #tpu.memory_space<vmem>>) attributes {dimension_semantics = [#tpu.dimension_semantics<parallel>], iteration_bounds = array<i64: 8>, scalar_prefetch = 0 : i64, scratch_operands = 0 : i64, tpu.core_type = #tpu.core_type<tc>, window_params = [{pipeline_mode = #tpu.pipeline_mode<synchronous>, transform_indices = @transform_0, window_bounds = array<i64: 3, 72>}, {transform_indices = @transform_1, window_bounds = array<i64: 1, 72, 4096>}, {pipeline_mode = #tpu.pipeline_mode<synchronous>, transform_indices = @transform_2, window_bounds = array<i64: 3, 1>}, {transform_indices = @transform_3, window_bounds = array<i64: 1, 3, 4096>}]} {
    %c0 = arith.constant 0 : index
    %c0_0 = arith.constant 0 : index
    %0 = vector.load %arg1[%c0, %c0_0] : memref<3x72xbf16, #tpu.memory_space<vmem>>, vector<3x72xbf16>
    %c0_1 = arith.constant 0 : index
    %c0_2 = arith.constant 0 : index
    %c0_3 = arith.constant 0 : index
    %1 = vector.load %arg2[%c0_1, %c0_2, %c0_3] : memref<1x72x4096xbf16, #tpu.memory_space<vmem>>, vector<1x72x4096xbf16>
    %2 = vector.shape_cast %1 : vector<1x72x4096xbf16> to vector<72x4096xbf16>
    %cst = arith.constant dense<0.000000e+00> : vector<3x4096xf32>
    %3 = tpu.matmul %0, %2, %cst {dimension_numbers = #tpu.dot_dimension_numbers<[1], [0], [0], [1], [0, 0, 1, 1], [], []>} : vector<3x72xbf16>, vector<72x4096xbf16>, vector<3x4096xf32> -> vector<3x4096xf32>
    %c0_4 = arith.constant 0 : index
    %c0_5 = arith.constant 0 : index
    %4 = vector.load %arg3[%c0_4, %c0_5] : memref<3x1xf32, #tpu.memory_space<vmem>>, vector<3x1xf32>
    %5 = vector.broadcast %4 : vector<3x1xf32> to vector<3x4096xf32>
    %6 = arith.addf %3, %5 : vector<3x4096xf32>
    %7 = arith.negf %6 : vector<3x4096xf32>
    %8 = math.exp %7 : vector<3x4096xf32>
    %cst_6 = arith.constant 1.000000e+00 : f32
    %9 = vector.broadcast %cst_6 : f32 to vector<3x4096xf32>
    %10 = arith.addf %9, %8 : vector<3x4096xf32>
    %11 = arith.divf %9, %10 : vector<3x4096xf32>
    %c0_7 = arith.constant 0 : index
    %c0_8 = arith.constant 0 : index
    %c0_9 = arith.constant 0 : index
    %12 = vector.load %arg4[%c0_7, %c0_8, %c0_9] : memref<1x3x4096xf32, #tpu.memory_space<vmem>>, vector<1x3x4096xf32>
    %13 = vector.shape_cast %12 : vector<1x3x4096xf32> to vector<3x4096xf32>
    %14 = vector.shape_cast %11 : vector<3x4096xf32> to vector<1x3x4096xf32>
    tpu.vector_store %arg4[%c0_7, %c0_8, %c0_9], %14 {strides = array<i32>} : memref<1x3x4096xf32, #tpu.memory_space<vmem>>, vector<1x3x4096xf32>,
    return
  }
  func.func @transform_0(%arg0: i32) -> (i32, i32) {
    %c0_i32 = arith.constant 0 : i32
    %c0_i32_0 = arith.constant 0 : i32
    %c0_i32_1 = arith.constant 0 : i32
    return %c0_i32, %c0_i32_0 : i32, i32
  }
  func.func @transform_1(%arg0: i32) -> (i32, i32, i32) {
    %c0_i32 = arith.constant 0 : i32
    %c0_i32_0 = arith.constant 0 : i32
    %c0_i32_1 = arith.constant 0 : i32
    return %arg0, %c0_i32, %c0_i32_0 : i32, i32, i32
  }
  func.func @transform_2(%arg0: i32) -> (i32, i32) {
    %c0_i32 = arith.constant 0 : i32
    %c0_i32_0 = arith.constant 0 : i32
    %c0_i32_1 = arith.constant 0 : i32
    return %c0_i32, %c0_i32_0 : i32, i32
  }
  func.func @transform_3(%arg0: i32) -> (i32, i32, i32) {
    %c0_i32 = arith.constant 0 : i32
    %c0_i32_0 = arith.constant 0 : i32
    %c0_i32_1 = arith.constant 0 : i32
    return %arg0, %c0_i32, %c0_i32_0 : i32, i32, i32
  }
}

</mosaic_0001>

<llo_original>
// kernel: im2im_forward.8
$region0: #{im2im_forward.8}
  #allocation0 [shape = 'u32[]', space=smem, size = 0x4, offset = 0x4, fixed_abs, tag = 'smem constant byte address 0x4 - core index']
  #allocation1 [shape = 'u32[144,128]{1,0:T(1,128)}', space=vmem, size = 0x12000, scoped, tag = 'internal scratch']
  %s0 = inlined_call_operand.vmem [shape: bf16[8,27], index: 0, kind: input, shape index: {}]
  %s1 = inlined_call_operand.vmem [shape: bf16[8,27,1024], index: 1, kind: input, shape index: {}]
  %s2 = inlined_call_operand.vmem [shape: f32[8,1], index: 2, kind: input, shape index: {}]
  %s3 = inlined_call_operand.vmem [shape: bf16[8,8,1024], index: 3, kind: output, shape index: {}]
  %s4 = sld [smem:[#allocation0]]
  $region45: #{im2im_forward.8} parent=0
    _
  %s6 = ssub.s32 1, %s4
  %s7 = scalar_select 0, %s6, %s4
  loop: start=0, step=1, limit=10
  $region2: #{im2im_forward.8} parent=0 // loop_pre_header
    _
  $region3: #{im2im_forward.8} parent=0 // loop_header
    %s9 = sphi 0, %s13
    %p10 = scmp.ge.s32.totalorder %s9, 10
    %s17 = sphi 0, %s17
    %s19 = sphi 0, %s17
    %s20 = sphi 0, %s19
    %s34 = sphi 0, %s20
    %s40 = sphi 0, %s42
    %s43 = sphi 0, %s40
    %s44 = sphi 0, %s43
    %s60 = sphi 0, %s44
    %s64 = sphi 0, %s64
    %s66 = sphi 0, %s64
    %s67 = sphi 0, %s66
    %s81 = sphi 0, %s67
    %s87 = sphi 0, %s89
    %s90 = sphi 0, %s87
    %s91 = sphi 0, %s90
    %s107 = sphi 0, %s91
  $region4: #{im2im_forward.8} parent=0 // loop_header_branch
    %12 = sbr.rel (%p10) target = $region8
  $region5: #{im2im_forward.8} parent=0 // loop_body
    %s14 = ssub.s32 %s9, 1
    %s15 = ssub.s32 %s9, 2
    %s16 = sadd.s32 %s9, 1
    %s18 = sadd.s32 %s17, 1
    %p21 = scmp.eq.s32.totalorder %s9, 7
    %p22 = scmp.ne.s32.totalorder %s17, %s19
    %p23 = scmp.eq.s32.totalorder %s9, 0
    %p24 = por %p22, %p23
    %p25 = scmp.ne.s32.totalorder %s17, %s19
    %p26 = scmp.eq.s32.totalorder %s14, 7
    %p27 = por %p25, %p26
    %p28 = scmp.ne.s32.totalorder %s19, %s20
    %p29 = scmp.eq.s32.totalorder %s14, 0
    %p30 = por %p28, %p29
    %p31 = scmp.ne.s32.totalorder %s19, %s20
    %p32 = scmp.eq.s32.totalorder %s15, 7
    %p33 = por %p31, %p32
    %p35 = scmp.ne.s32.totalorder %s20, %s34
    %p36 = scmp.eq.s32.totalorder %s15, 0
    %p37 = por %p35, %p36
    %s38 = ssub.s32 %s9, %s16
    %p39 = scmp.eq.s32.totalorder %s38, 0
    %s41 = sadd.s32 %s40, 1
    %s42 = scalar_select %p39, %s40, %s41
    %p45 = pneg %p39
    %p46 = scmp.eq.s32.totalorder %s9, 7
    %p47 = por %p45, %p46
    %p48 = scmp.ne.s32.totalorder %s40, %s43
    %p49 = scmp.eq.s32.totalorder %s9, 0
    %p50 = por %p48, %p49
    %p51 = scmp.ne.s32.totalorder %s40, %s43
    %p52 = scmp.eq.s32.totalorder %s14, 7
    %p53 = por %p51, %p52
    %p54 = scmp.ne.s32.totalorder %s43, %s44
    %p55 = scmp.eq.s32.totalorder %s14, 0
    %p56 = por %p54, %p55
    %p57 = scmp.ne.s32.totalorder %s43, %s44
    %p58 = scmp.eq.s32.totalorder %s15, 7
    %p59 = por %p57, %p58
    %p61 = scmp.ne.s32.totalorder %s44, %s60
    %p62 = scmp.eq.s32.totalorder %s15, 0
    %p63 = por %p61, %p62
    %s65 = sadd.s32 %s64, 1
    %p68 = scmp.eq.s32.totalorder %s9, 7
    %p69 = scmp.ne.s32.totalorder %s64, %s66
    %p70 = scmp.eq.s32.totalorder %s9, 0
    %p71 = por %p69, %p70
    %p72 = scmp.ne.s32.totalorder %s64, %s66
    %p73 = scmp.eq.s32.totalorder %s14, 7
    %p74 = por %p72, %p73
    %p75 = scmp.ne.s32.totalorder %s66, %s67
    %p76 = scmp.eq.s32.totalorder %s14, 0
    %p77 = por %p75, %p76
    %p78 = scmp.ne.s32.totalorder %s66, %s67
    %p79 = scmp.eq.s32.totalorder %s15, 7
    %p80 = por %p78, %p79
    %p82 = scmp.ne.s32.totalorder %s67, %s81
    %p83 = scmp.eq.s32.totalorder %s15, 0
    %p84 = por %p82, %p83
    %s85 = ssub.s32 %s9, %s16
    %p86 = scmp.eq.s32.totalorder %s85, 0
    %s88 = sadd.s32 %s87, 1
    %s89 = scalar_select %p86, %s87, %s88
    %p92 = pneg %p86
    %p93 = scmp.eq.s32.totalorder %s9, 7
    %p94 = por %p92, %p93
    %p95 = scmp.ne.s32.totalorder %s87, %s90
    %p96 = scmp.eq.s32.totalorder %s9, 0
    %p97 = por %p95, %p96
    %p98 = scmp.ne.s32.totalorder %s87, %s90
    %p99 = scmp.eq.s32.totalorder %s14, 7
    %p100 = por %p98, %p99
    %p101 = scmp.ne.s32.totalorder %s90, %s91
    %p102 = scmp.eq.s32.totalorder %s14, 0
    %p103 = por %p101, %p102
    %p104 = scmp.ne.s32.totalorder %s90, %s91
    %p105 = scmp.eq.s32.totalorder %s15, 7
    %p106 = por %p104, %p105
    %p108 = scmp.ne.s32.totalorder %s91, %s107
    %p109 = scmp.eq.s32.totalorder %s15, 0
    %p110 = por %p108, %p109
    %p111 = scmp.le.s32.totalorder 1, %s9
    %p112 = scmp.lt.s32.totalorder %s9, 9
    %p113 = pnand %p111, %p112
    %p114 = pneg %p113
    // Predicated region
    $region9: #{im2im_forward.8} parent=5 // pred_check
      _
    $region10: #{im2im_forward.8} parent=5 // pred_check_branch
      %116 = sbr.rel (%p113) target = $region12
    $region11: #{im2im_forward.8} parent=5 // pred_region
      %s117 = ssub.s32 %s9, 1
      // Predicated region
      $region13: #{im2im_forward.8} parent=11 // pred_check
        %p118 = pneg %p30
      $region14: #{im2im_forward.8} parent=11 // pred_check_branch
        %120 = sbr.rel (%p118) target = $region16
      $region15: #{im2im_forward.8} parent=11 // pred_region
        _
      $region16: #{im2im_forward.8} parent=11 // pred_fallthru
        _
      // Predicated region
      $region17: #{im2im_forward.8} parent=11 // pred_check
        %p121 = pneg %p77
      $region18: #{im2im_forward.8} parent=11 // pred_check_branch
        %123 = sbr.rel (%p121) target = $region20
      $region19: #{im2im_forward.8} parent=11 // pred_region
        _
      $region20: #{im2im_forward.8} parent=11 // pred_fallthru
        _
    $region12: #{im2im_forward.8} parent=5 // pred_fallthru
      _
    %p124 = scmp.lt.s32.totalorder %s9, 8
    // Predicated region
    $region21: #{im2im_forward.8} parent=5 // pred_check
      %p125 = pneg %p124
    $region22: #{im2im_forward.8} parent=5 // pred_check_branch
      %127 = sbr.rel (%p125) target = $region24
    $region23: #{im2im_forward.8} parent=5 // pred_region
      // Predicated region
      $region25: #{im2im_forward.8} parent=23 // pred_check
        %p128 = pneg %p50
      $region26: #{im2im_forward.8} parent=23 // pred_check_branch
        %130 = sbr.rel (%p128) target = $region28
      $region27: #{im2im_forward.8} parent=23 // pred_region
        %p131 = scmp.lt.s32.totalorder %s9, 7
        %s132 = scalar_select %p131, %s9, 7
        %s133 = smul.addr %s132, 32
        %s134 = smul.addr %s133, 4
        %s135 = scalar_lea.vmem %s1, %s134
      $region28: #{im2im_forward.8} parent=23 // pred_fallthru
        _
    $region24: #{im2im_forward.8} parent=5 // pred_fallthru
      _
    %p136 = scmp.le.s32.totalorder 1, %s9
    %p137 = scmp.lt.s32.totalorder %s9, 9
    %p138 = pnand %p136, %p137
    %p139 = pneg %p138
    // Predicated region
    $region29: #{im2im_forward.8} parent=5 // pred_check
      _
    $region30: #{im2im_forward.8} parent=5 // pred_check_branch
      %141 = sbr.rel (%p138) target = $region32
    $region31: #{im2im_forward.8} parent=5 // pred_region
      %s142 = ssub.s32 %s9, 1
      %p143 = pneg %p30
      %p144 = pneg %p27
      %p145 = scmp.lt.s32.totalorder %s14, 7
      %s146 = scalar_select %p145, %s14, 7
      %s147 = smul.addr %s146, 32
      %s148 = smul.addr %s147, 4
      %s149 = scalar_lea.vmem %s1, %s148
      %p150 = pneg %p56
      %p151 = pneg %p53
      %p152 = pneg %p77
      %p153 = pneg %p74
      %p154 = pneg %p103
      %p155 = pneg %p100
      %p156 = scmp.lt.s32.totalorder %s14, 7
      %s157 = scalar_select %p156, %s14, 7
      %s158 = smul.addr %s157, 8
      %s159 = smul.addr %s158, 4
      %s160 = scalar_lea.vmem %s3, %s159
      %p161 = scmp.lt.s32.totalorder %s14, 7
      %s162 = scalar_select %p161, %s14, 7
      %s163 = smul.addr %s162, 32
      %s164 = smul.addr %s163, 4
      %s165 = scalar_lea.vmem %s1, %s164
      %p166 = scmp.lt.s32.totalorder %s14, 7
      %s167 = scalar_select %p166, %s14, 7
      %s168 = smul.addr %s167, 8
      %s169 = smul.addr %s168, 4
      %s170 = scalar_lea.vmem %s3, %s169
      %v172 = vld [vmem:[%s0] sm:$0xf]
      %v173 = vld [vmem:[%s165] sm:$0xff]
      %v174 = vld [vmem:[%s165 + $0x8] sm:$0xff]
      %v175 = vld [vmem:[%s165 + $0x10] sm:$0xff]
      %v176 = vld [vmem:[%s165 + $0x18] sm:$0xff]
      %v177 = vld [vmem:[%s165 + $0x20] sm:$0xff]
      %v178 = vld [vmem:[%s165 + $0x28] sm:$0xff]
      %v179 = vld [vmem:[%s165 + $0x30] sm:$0xff]
      %v180 = vld [vmem:[%s165 + $0x38] sm:$0xff]
      %v181 = vld [vmem:[%s165 + $0x40] sm:$0xff]
      %v182 = vld [vmem:[%s165 + $0x48] sm:$0xff]
      %v183 = vld [vmem:[%s165 + $0x50] sm:$0xff]
      %v184 = vld [vmem:[%s165 + $0x58] sm:$0xff]
      %v185 = vld [vmem:[%s165 + $0x60] sm:$0x33]
      %v186 = vld [vmem:[%s165 + $0x68] sm:$0x33]
      %v187 = vld [vmem:[%s165 + $0x70] sm:$0x33]
      %v188 = vld [vmem:[%s165 + $0x78] sm:$0x33]
      %v189 = vld [vmem:[%s2] sm:$0xff]
      %191 = vset.pattern.permute.xlu0 0
      %192 = vperm.xlu0 %191, %v189
      %v193 = vpop.permute.xlu0 %192
      %v211 = vunpack.c.l.b16 %v173
      %v212 = vunpack.c.h.b16 %v173
      %v213 = vunpack.c.l.b16 %v174
      %v214 = vunpack.c.h.b16 %v174
      %v215 = vunpack.c.l.b16 %v175
      %v216 = vunpack.c.h.b16 %v175
      %v217 = vunpack.c.l.b16 %v176
      %v218 = vunpack.c.h.b16 %v176
      %v219 = vunpack.c.l.b16 %v177
      %v220 = vunpack.c.h.b16 %v177
      %v221 = vunpack.c.l.b16 %v178
      %v222 = vunpack.c.h.b16 %v178
      %v223 = vunpack.c.l.b16 %v179
      %v224 = vunpack.c.h.b16 %v179
      %v225 = vunpack.c.l.b16 %v180
      %v226 = vunpack.c.h.b16 %v180
      %v227 = vunpack.c.l.b16 %v181
      %v228 = vunpack.c.h.b16 %v181
      %v229 = vunpack.c.l.b16 %v182
      %v230 = vunpack.c.h.b16 %v182
      %v231 = vunpack.c.l.b16 %v183
      %v232 = vunpack.c.h.b16 %v183
      %v233 = vunpack.c.l.b16 %v184
      %v234 = vunpack.c.h.b16 %v184
      %v235 = vunpack.c.l.b16 %v185
      %v236 = vunpack.c.h.b16 %v185
      %v237 = vunpack.c.l.b16 %v186
      %v238 = vunpack.c.h.b16 %v186
      %v239 = vunpack.c.l.b16 %v187
      %v240 = vunpack.c.h.b16 %v187
      %v241 = vunpack.c.l.b16 %v188
      %v242 = vunpack.c.h.b16 %v188
      %v243 = vpack.c.b16 %v219, %v211
      %v244 = vpack.c.b16 %v220, %v212
      %v245 = vpack.c.b16 %v221, %v213
      %v246 = vpack.c.b16 %v222, %v214
      %v247 = vpack.c.b16 %v223, %v215
      %v248 = vpack.c.b16 %v224, %v216
      %v249 = vpack.c.b16 %v225, %v217
      %v250 = vpack.c.b16 %v226, %v218
      %v251 = vpack.c.b16 %v235, %v227
      %v252 = vpack.c.b16 %v236, %v228
      %v253 = vpack.c.b16 %v237, %v229
      %v254 = vpack.c.b16 %v238, %v230
      %v255 = vpack.c.b16 %v239, %v231
      %v256 = vpack.c.b16 %v240, %v232
      %v257 = vpack.c.b16 %v241, %v233
      %v258 = vpack.c.b16 %v242, %v234
      %vm267 = vcmask 220160
      %v269 = vsel %vm267, %v172, 0
      %vm271 = vcmask 1044480
      %vm272 = vcmask 1045504
      %v273 = vsel %vm271, 4294967295, 65535
      %v274 = vsel %vm272, %v273, 0
      %v276 = vand.u32 %v251, %v274
      %v279 = vand.u32 %v252, %v274
      %v282 = vand.u32 %v253, %v274
      %v285 = vand.u32 %v254, %v274
      %v288 = vand.u32 %v255, %v274
      %v291 = vand.u32 %v256, %v274
      %v294 = vand.u32 %v257, %v274
      %v297 = vand.u32 %v258, %v274
      %299 = vmatprep.subr.bf16.mxu0 %v244
      %300 = vmatpush1.bf16.msra.mxu0 %v243
      %301 = vmatprep.subr.bf16.mxu0 %v279
      %302 = vmatpush1.bf16.msra.mxu0 %v276
      %303 = vmatprep.subr.bf16.mxu0 0
      %304 = vmatpush1.bf16.msra.mxu0 0
      %305 = vmatprep.subr.bf16.mxu0 0
      %306 = vmatpush1.bf16.msra.mxu0 0
      %307 = vmatprep.subr.bf16.mxu0 0
      %308 = vmatpush1.bf16.msra.mxu0 0
      %309 = vmatprep.subr.bf16.mxu0 0
      %310 = vmatpush1.bf16.msra.mxu0 0
      %311 = vmatprep.subr.bf16.mxu0 0
      %312 = vmatpush1.bf16.msra.mxu0 0
      %313 = vmatprep.subr.bf16.mxu0 0
      %314 = vmatpush1.bf16.msra.mxu0 0
      %315 = vmatprep.subr.bf16.mxu0 0
      %316 = vmatpush1.bf16.msra.mxu0 0
      %317 = vmatprep.subr.bf16.mxu0 0
      %318 = vmatpush1.bf16.msra.mxu0 0
      %319 = vmatprep.subr.bf16.mxu0 0
      %320 = vmatpush1.bf16.msra.mxu0 0
      %321 = vmatprep.subr.bf16.mxu0 0
      %322 = vmatpush1.bf16.msra.mxu0 0
      %323 = vmatprep.subr.bf16.mxu0 0
      %324 = vmatpush1.bf16.msra.mxu0 0
      %325 = vmatprep.subr.bf16.mxu0 0
      %326 = vmatpush1.bf16.msra.mxu0 0
      %327 = vmatprep.subr.bf16.mxu0 0
      %328 = vmatpush1.bf16.msra.mxu0 0
      %329 = vmatprep.subr.bf16.mxu0 0
      %330 = vmatpush1.bf16.msra.mxu0 0
      %331 = vmatprep.mubr.bf16.mxu0 0
      %332 = vmatmul.mubr.bf16.gmra.mrb[0].mxu0 %v269
      %v333 = vpop.f32.mrb[0].mxu0
      %v334 = vadd.f32 %v193, %v333
      %v335 = vpop.f32.mrb[0].mxu0
      %v336 = vadd.f32 %v193, %v335
      %v337 = vpop.f32.mrb[0].mxu0
      %v338 = vpop.f32.mrb[0].mxu0
      %339 = vdwg.mxu0
      %340 = vmatprep.subr.bf16.mxu0 %v246
      %341 = vmatpush1.bf16.msra.mxu0 %v245
      %342 = vmatprep.subr.bf16.mxu0 %v285
      %343 = vmatpush1.bf16.msra.mxu0 %v282
      %344 = vmatprep.subr.bf16.mxu0 0
      %345 = vmatpush1.bf16.msra.mxu0 0
      %346 = vmatprep.subr.bf16.mxu0 0
      %347 = vmatpush1.bf16.msra.mxu0 0
      %348 = vmatprep.subr.bf16.mxu0 0
      %349 = vmatpush1.bf16.msra.mxu0 0
      %350 = vmatprep.subr.bf16.mxu0 0
      %351 = vmatpush1.bf16.msra.mxu0 0
      %352 = vmatprep.subr.bf16.mxu0 0
      %353 = vmatpush1.bf16.msra.mxu0 0
      %354 = vmatprep.subr.bf16.mxu0 0
      %355 = vmatpush1.bf16.msra.mxu0 0
      %356 = vmatprep.subr.bf16.mxu0 0
      %357 = vmatpush1.bf16.msra.mxu0 0
      %358 = vmatprep.subr.bf16.mxu0 0
      %359 = vmatpush1.bf16.msra.mxu0 0
      %360 = vmatprep.subr.bf16.mxu0 0
      %361 = vmatpush1.bf16.msra.mxu0 0
      %362 = vmatprep.subr.bf16.mxu0 0
      %363 = vmatpush1.bf16.msra.mxu0 0
      %364 = vmatprep.subr.bf16.mxu0 0
      %365 = vmatpush1.bf16.msra.mxu0 0
      %366 = vmatprep.subr.bf16.mxu0 0
      %367 = vmatpush1.bf16.msra.mxu0 0
      %368 = vmatprep.subr.bf16.mxu0 0
      %369 = vmatpush1.bf16.msra.mxu0 0
      %370 = vmatprep.subr.bf16.mxu0 0
      %371 = vmatpush1.bf16.msra.mxu0 0
      %372 = vmatprep.mubr.bf16.mxu0 0
      %373 = vmatmul.mubr.bf16.gmra.mrb[0].mxu0 %v269
      %v374 = vpop.f32.mrb[0].mxu0
      %v375 = vadd.f32 %v193, %v374
      %v376 = vpop.f32.mrb[0].mxu0
      %v377 = vadd.f32 %v193, %v376
      %v378 = vpop.f32.mrb[0].mxu0
      %v379 = vpop.f32.mrb[0].mxu0
      %380 = vdwg.mxu0
      %381 = vmatprep.subr.bf16.mxu0 %v248
      %382 = vmatpush1.bf16.msra.mxu0 %v247
      %383 = vmatprep.subr.bf16.mxu0 %v291
      %384 = vmatpush1.bf16.msra.mxu0 %v288
      %385 = vmatprep.subr.bf16.mxu0 0
      %386 = vmatpush1.bf16.msra.mxu0 0
      %387 = vmatprep.subr.bf16.mxu0 0
      %388 = vmatpush1.bf16.msra.mxu0 0
      %389 = vmatprep.subr.bf16.mxu0 0
      %390 = vmatpush1.bf16.msra.mxu0 0
      %391 = vmatprep.subr.bf16.mxu0 0
      %392 = vmatpush1.bf16.msra.mxu0 0
      %393 = vmatprep.subr.bf16.mxu0 0
      %394 = vmatpush1.bf16.msra.mxu0 0
      %395 = vmatprep.subr.bf16.mxu0 0
      %396 = vmatpush1.bf16.msra.mxu0 0
      %397 = vmatprep.subr.bf16.mxu0 0
      %398 = vmatpush1.bf16.msra.mxu0 0
      %399 = vmatprep.subr.bf16.mxu0 0
      %400 = vmatpush1.bf16.msra.mxu0 0
      %401 = vmatprep.subr.bf16.mxu0 0
      %402 = vmatpush1.bf16.msra.mxu0 0
      %403 = vmatprep.subr.bf16.mxu0 0
      %404 = vmatpush1.bf16.msra.mxu0 0
      %405 = vmatprep.subr.bf16.mxu0 0
      %406 = vmatpush1.bf16.msra.mxu0 0
      %407 = vmatprep.subr.bf16.mxu0 0
      %408 = vmatpush1.bf16.msra.mxu0 0
      %409 = vmatprep.subr.bf16.mxu0 0
      %410 = vmatpush1.bf16.msra.mxu0 0
      %411 = vmatprep.subr.bf16.mxu0 0
      %412 = vmatpush1.bf16.msra.mxu0 0
      %413 = vmatprep.mubr.bf16.mxu0 0
      %414 = vmatmul.mubr.bf16.gmra.mrb[0].mxu0 %v269
      %v415 = vpop.f32.mrb[0].mxu0
      %v416 = vadd.f32 %v193, %v415
      %v417 = vpop.f32.mrb[0].mxu0
      %v418 = vadd.f32 %v193, %v417
      %v419 = vpop.f32.mrb[0].mxu0
      %v420 = vpop.f32.mrb[0].mxu0
      %421 = vdwg.mxu0
      %422 = vmatprep.subr.bf16.mxu0 %v250
      %423 = vmatpush1.bf16.msra.mxu0 %v249
      %424 = vmatprep.subr.bf16.mxu0 %v297
      %425 = vmatpush1.bf16.msra.mxu0 %v294
      %426 = vmatprep.subr.bf16.mxu0 0
      %427 = vmatpush1.bf16.msra.mxu0 0
      %428 = vmatprep.subr.bf16.mxu0 0
      %429 = vmatpush1.bf16.msra.mxu0 0
      %430 = vmatprep.subr.bf16.mxu0 0
      %431 = vmatpush1.bf16.msra.mxu0 0
      %432 = vmatprep.subr.bf16.mxu0 0
      %433 = vmatpush1.bf16.msra.mxu0 0
      %434 = vmatprep.subr.bf16.mxu0 0
      %435 = vmatpush1.bf16.msra.mxu0 0
      %436 = vmatprep.subr.bf16.mxu0 0
      %437 = vmatpush1.bf16.msra.mxu0 0
      %438 = vmatprep.subr.bf16.mxu0 0
      %439 = vmatpush1.bf16.msra.mxu0 0
      %440 = vmatprep.subr.bf16.mxu0 0
      %441 = vmatpush1.bf16.msra.mxu0 0
      %442 = vmatprep.subr.bf16.mxu0 0
      %443 = vmatpush1.bf16.msra.mxu0 0
      %444 = vmatprep.subr.bf16.mxu0 0
      %445 = vmatpush1.bf16.msra.mxu0 0
      %446 = vmatprep.subr.bf16.mxu0 0
      %447 = vmatpush1.bf16.msra.mxu0 0
      %448 = vmatprep.subr.bf16.mxu0 0
      %449 = vmatpush1.bf16.msra.mxu0 0
      %450 = vmatprep.subr.bf16.mxu0 0
      %451 = vmatpush1.bf16.msra.mxu0 0
      %452 = vmatprep.subr.bf16.mxu0 0
      %453 = vmatpush1.bf16.msra.mxu0 0
      %454 = vmatprep.mubr.bf16.mxu0 0
      %455 = vmatmul.mubr.bf16.gmra.mrb[0].mxu0 %v269
      %v456 = vpop.f32.mrb[0].mxu0
      %v457 = vadd.f32 %v193, %v456
      %v458 = vpop.f32.mrb[0].mxu0
      %v459 = vadd.f32 %v193, %v458
      %v460 = vpop.f32.mrb[0].mxu0
      %v461 = vpop.f32.mrb[0].mxu0
      %462 = vdwg.mxu0
      %v463 = vmax.f32 %v334, 0.0
      %v464 = vmax.f32 %v336, 0.0
      %v465 = vmax.f32 %v375, 0.0
      %v466 = vmax.f32 %v377, 0.0
      %v467 = vmax.f32 %v416, 0.0
      %v468 = vmax.f32 %v418, 0.0
      %v469 = vmax.f32 %v457, 0.0
      %v470 = vmax.f32 %v459, 0.0
      %v471 = vpack.c.bf16 %v463, %v463
      %v472 = vpack.c.bf16 %v464, %v464
      %v473 = vpack.c.bf16 %v465, %v465
      %v474 = vpack.c.bf16 %v466, %v466
      %v475 = vpack.c.bf16 %v467, %v467
      %v476 = vpack.c.bf16 %v468, %v468
      %v477 = vpack.c.bf16 %v469, %v469
      %v478 = vpack.c.bf16 %v470, %v470
      %v487 = vunpack.c.l.b16 %v471
      %v488 = vunpack.c.l.b16 %v472
      %v489 = vunpack.c.l.b16 %v473
      %v490 = vunpack.c.l.b16 %v474
      %v491 = vunpack.c.l.b16 %v475
      %v492 = vunpack.c.l.b16 %v476
      %v493 = vunpack.c.l.b16 %v477
      %v494 = vunpack.c.l.b16 %v478
      %v495 = vpack.c.b16 %v488, %v487
      %v496 = vpack.c.b16 %v490, %v489
      %v497 = vpack.c.b16 %v492, %v491
      %v498 = vpack.c.b16 %v494, %v493
      %503 = vst [vmem:[%s170] sm:$0xff] %v495
      %504 = vst [vmem:[%s170 + $0x8] sm:$0xff] %v496
      %505 = vst [vmem:[%s170 + $0x10] sm:$0xff] %v497
      %506 = vst [vmem:[%s170 + $0x18] sm:$0xff] %v498
      %p507 = scmp.lt.s32.totalorder %s14, 7
      %s508 = scalar_select %p507, %s14, 7
      %s509 = smul.addr %s508, 8
      %s510 = smul.addr %s509, 4
      %s511 = scalar_lea.vmem %s3, %s510
      // Predicated region
      $region33: #{im2im_forward.8} parent=31 // pred_check
        %p512 = pneg %p100
      $region34: #{im2im_forward.8} parent=31 // pred_check_branch
        %514 = sbr.rel (%p512) target = $region36
      $region35: #{im2im_forward.8} parent=31 // pred_region
        _
      $region36: #{im2im_forward.8} parent=31 // pred_fallthru
        _
    $region32: #{im2im_forward.8} parent=5 // pred_fallthru
      _
    %p515 = scmp.le.s32.totalorder 2, %s9
    // Predicated region
    $region37: #{im2im_forward.8} parent=5 // pred_check
      %p516 = pneg %p515
    $region38: #{im2im_forward.8} parent=5 // pred_check_branch
      %518 = sbr.rel (%p516) target = $region40
    $region39: #{im2im_forward.8} parent=5 // pred_region
      %s519 = ssub.s32 %s9, 2
      // Predicated region
      $region41: #{im2im_forward.8} parent=39 // pred_check
        %p520 = pneg %p106
      $region42: #{im2im_forward.8} parent=39 // pred_check_branch
        %522 = sbr.rel (%p520) target = $region44
      $region43: #{im2im_forward.8} parent=39 // pred_region
        %p523 = scmp.lt.s32.totalorder %s15, 7
        %s524 = scalar_select %p523, %s15, 7
        %s525 = smul.addr %s524, 8
        %s526 = smul.addr %s525, 4
        %s527 = scalar_lea.vmem %s3, %s526
      $region44: #{im2im_forward.8} parent=39 // pred_fallthru
        _
    $region40: #{im2im_forward.8} parent=5 // pred_fallthru
      _
  $region6: #{im2im_forward.8} parent=0 // loop_footer
    %s13 = sadd.s32 1, %s9
  $region7: #{im2im_forward.8} parent=0 // loop_footer_branch
    %8 = sbr.rel target = $region3
  $region8: #{im2im_forward.8} parent=0 // loop_exit
    _

// kernel: im2im_forward.9
$region0: #{im2im_forward.9}
  #allocation0 [shape = 'u32[]', space=smem, size = 0x4, offset = 0x4, fixed_abs, tag = 'smem constant byte address 0x4 - core index']
  #allocation1 [shape = 'u32[144,128]{1,0:T(1,128)}', space=vmem, size = 0x12000, scoped, tag = 'internal scratch']
  %s0 = inlined_call_operand.vmem [shape: bf16[16,72], index: 0, kind: input, shape index: {}]
  %s1 = inlined_call_operand.vmem [shape: bf16[8,72,256], index: 1, kind: input, shape index: {}]
  %s2 = inlined_call_operand.vmem [shape: f32[16,1], index: 2, kind: input, shape index: {}]
  %s3 = inlined_call_operand.vmem [shape: bf16[8,16,256], index: 3, kind: output, shape index: {}]
  %s4 = sld [smem:[#allocation0]]
  $region45: #{im2im_forward.9} parent=0
    _
  %s6 = ssub.s32 1, %s4
  %s7 = scalar_select 0, %s6, %s4
  loop: start=0, step=1, limit=10
  $region2: #{im2im_forward.9} parent=0 // loop_pre_header
    _
  $region3: #{im2im_forward.9} parent=0 // loop_header
    %s9 = sphi 0, %s13
    %p10 = scmp.ge.s32.totalorder %s9, 10
    %s17 = sphi 0, %s17
    %s19 = sphi 0, %s17
    %s20 = sphi 0, %s19
    %s34 = sphi 0, %s20
    %s40 = sphi 0, %s42
    %s43 = sphi 0, %s40
    %s44 = sphi 0, %s43
    %s60 = sphi 0, %s44
    %s64 = sphi 0, %s64
    %s66 = sphi 0, %s64
    %s67 = sphi 0, %s66
    %s81 = sphi 0, %s67
    %s87 = sphi 0, %s89
    %s90 = sphi 0, %s87
    %s91 = sphi 0, %s90
    %s107 = sphi 0, %s91
  $region4: #{im2im_forward.9} parent=0 // loop_header_branch
    %12 = sbr.rel (%p10) target = $region8
  $region5: #{im2im_forward.9} parent=0 // loop_body
    %s14 = ssub.s32 %s9, 1
    %s15 = ssub.s32 %s9, 2
    %s16 = sadd.s32 %s9, 1
    %s18 = sadd.s32 %s17, 1
    %p21 = scmp.eq.s32.totalorder %s9, 7
    %p22 = scmp.ne.s32.totalorder %s17, %s19
    %p23 = scmp.eq.s32.totalorder %s9, 0
    %p24 = por %p22, %p23
    %p25 = scmp.ne.s32.totalorder %s17, %s19
    %p26 = scmp.eq.s32.totalorder %s14, 7
    %p27 = por %p25, %p26
    %p28 = scmp.ne.s32.totalorder %s19, %s20
    %p29 = scmp.eq.s32.totalorder %s14, 0
    %p30 = por %p28, %p29
    %p31 = scmp.ne.s32.totalorder %s19, %s20
    %p32 = scmp.eq.s32.totalorder %s15, 7
    %p33 = por %p31, %p32
    %p35 = scmp.ne.s32.totalorder %s20, %s34
    %p36 = scmp.eq.s32.totalorder %s15, 0
    %p37 = por %p35, %p36
    %s38 = ssub.s32 %s9, %s16
    %p39 = scmp.eq.s32.totalorder %s38, 0
    %s41 = sadd.s32 %s40, 1
    %s42 = scalar_select %p39, %s40, %s41
    %p45 = pneg %p39
    %p46 = scmp.eq.s32.totalorder %s9, 7
    %p47 = por %p45, %p46
    %p48 = scmp.ne.s32.totalorder %s40, %s43
    %p49 = scmp.eq.s32.totalorder %s9, 0
    %p50 = por %p48, %p49
    %p51 = scmp.ne.s32.totalorder %s40, %s43
    %p52 = scmp.eq.s32.totalorder %s14, 7
    %p53 = por %p51, %p52
    %p54 = scmp.ne.s32.totalorder %s43, %s44
    %p55 = scmp.eq.s32.totalorder %s14, 0
    %p56 = por %p54, %p55
    %p57 = scmp.ne.s32.totalorder %s43, %s44
    %p58 = scmp.eq.s32.totalorder %s15, 7
    %p59 = por %p57, %p58
    %p61 = scmp.ne.s32.totalorder %s44, %s60
    %p62 = scmp.eq.s32.totalorder %s15, 0
    %p63 = por %p61, %p62
    %s65 = sadd.s32 %s64, 1
    %p68 = scmp.eq.s32.totalorder %s9, 7
    %p69 = scmp.ne.s32.totalorder %s64, %s66
    %p70 = scmp.eq.s32.totalorder %s9, 0
    %p71 = por %p69, %p70
    %p72 = scmp.ne.s32.totalorder %s64, %s66
    %p73 = scmp.eq.s32.totalorder %s14, 7
    %p74 = por %p72, %p73
    %p75 = scmp.ne.s32.totalorder %s66, %s67
    %p76 = scmp.eq.s32.totalorder %s14, 0
    %p77 = por %p75, %p76
    %p78 = scmp.ne.s32.totalorder %s66, %s67
    %p79 = scmp.eq.s32.totalorder %s15, 7
    %p80 = por %p78, %p79
    %p82 = scmp.ne.s32.totalorder %s67, %s81
    %p83 = scmp.eq.s32.totalorder %s15, 0
    %p84 = por %p82, %p83
    %s85 = ssub.s32 %s9, %s16
    %p86 = scmp.eq.s32.totalorder %s85, 0
    %s88 = sadd.s32 %s87, 1
    %s89 = scalar_select %p86, %s87, %s88
    %p92 = pneg %p86
    %p93 = scmp.eq.s32.totalorder %s9, 7
    %p94 = por %p92, %p93
    %p95 = scmp.ne.s32.totalorder %s87, %s90
    %p96 = scmp.eq.s32.totalorder %s9, 0
    %p97 = por %p95, %p96
    %p98 = scmp.ne.s32.totalorder %s87, %s90
    %p99 = scmp.eq.s32.totalorder %s14, 7
    %p100 = por %p98, %p99
    %p101 = scmp.ne.s32.totalorder %s90, %s91
    %p102 = scmp.eq.s32.totalorder %s14, 0
    %p103 = por %p101, %p102
    %p104 = scmp.ne.s32.totalorder %s90, %s91
    %p105 = scmp.eq.s32.totalorder %s15, 7
    %p106 = por %p104, %p105
    %p108 = scmp.ne.s32.totalorder %s91, %s107
    %p109 = scmp.eq.s32.totalorder %s15, 0
    %p110 = por %p108, %p109
    %p111 = scmp.le.s32.totalorder 1, %s9
    %p112 = scmp.lt.s32.totalorder %s9, 9
    %p113 = pnand %p111, %p112
    %p114 = pneg %p113
    // Predicated region
    $region9: #{im2im_forward.9} parent=5 // pred_check
      _
    $region10: #{im2im_forward.9} parent=5 // pred_check_branch
      %116 = sbr.rel (%p113) target = $region12
    $region11: #{im2im_forward.9} parent=5 // pred_region
      %s117 = ssub.s32 %s9, 1
      // Predicated region
      $region13: #{im2im_forward.9} parent=11 // pred_check
        %p118 = pneg %p30
      $region14: #{im2im_forward.9} parent=11 // pred_check_branch
        %120 = sbr.rel (%p118) target = $region16
      $region15: #{im2im_forward.9} parent=11 // pred_region
        _
      $region16: #{im2im_forward.9} parent=11 // pred_fallthru
        _
      // Predicated region
      $region17: #{im2im_forward.9} parent=11 // pred_check
        %p121 = pneg %p77
      $region18: #{im2im_forward.9} parent=11 // pred_check_branch
        %123 = sbr.rel (%p121) target = $region20
      $region19: #{im2im_forward.9} parent=11 // pred_region
        _
      $region20: #{im2im_forward.9} parent=11 // pred_fallthru
        _
    $region12: #{im2im_forward.9} parent=5 // pred_fallthru
      _
    %p124 = scmp.lt.s32.totalorder %s9, 8
    // Predicated region
    $region21: #{im2im_forward.9} parent=5 // pred_check
      %p125 = pneg %p124
    $region22: #{im2im_forward.9} parent=5 // pred_check_branch
      %127 = sbr.rel (%p125) target = $region24
    $region23: #{im2im_forward.9} parent=5 // pred_region
      // Predicated region
      $region25: #{im2im_forward.9} parent=23 // pred_check
        %p128 = pneg %p50
      $region26: #{im2im_forward.9} parent=23 // pred_check_branch
        %130 = sbr.rel (%p128) target = $region28
      $region27: #{im2im_forward.9} parent=23 // pred_region
        %p131 = scmp.lt.s32.totalorder %s9, 7
        %s132 = scalar_select %p131, %s9, 7
        %s133 = smul.addr %s132, 18
        %s134 = smul.addr %s133, 4
        %s135 = scalar_lea.vmem %s1, %s134
      $region28: #{im2im_forward.9} parent=23 // pred_fallthru
        _
    $region24: #{im2im_forward.9} parent=5 // pred_fallthru
      _
    %p136 = scmp.le.s32.totalorder 1, %s9
    %p137 = scmp.lt.s32.totalorder %s9, 9
    %p138 = pnand %p136, %p137
    %p139 = pneg %p138
    // Predicated region
    $region29: #{im2im_forward.9} parent=5 // pred_check
      _
    $region30: #{im2im_forward.9} parent=5 // pred_check_branch
      %141 = sbr.rel (%p138) target = $region32
    $region31: #{im2im_forward.9} parent=5 // pred_region
      %s142 = ssub.s32 %s9, 1
      %p143 = pneg %p30
      %p144 = pneg %p27
      %p145 = scmp.lt.s32.totalorder %s14, 7
      %s146 = scalar_select %p145, %s14, 7
      %s147 = smul.addr %s146, 18
      %s148 = smul.addr %s147, 4
      %s149 = scalar_lea.vmem %s1, %s148
      %p150 = pneg %p56
      %p151 = pneg %p53
      %p152 = pneg %p77
      %p153 = pneg %p74
      %p154 = pneg %p103
      %p155 = pneg %p100
      %p156 = scmp.lt.s32.totalorder %s14, 7
      %s157 = scalar_select %p156, %s14, 7
      %s158 = smul.addr %s157, 4
      %s159 = smul.addr %s158, 4
      %s160 = scalar_lea.vmem %s3, %s159
      %p161 = scmp.lt.s32.totalorder %s14, 7
      %s162 = scalar_select %p161, %s14, 7
      %s163 = smul.addr %s162, 18
      %s164 = smul.addr %s163, 4
      %s165 = scalar_lea.vmem %s1, %s164
      %p166 = scmp.lt.s32.totalorder %s14, 7
      %s167 = scalar_select %p166, %s14, 7
      %s168 = smul.addr %s167, 4
      %s169 = smul.addr %s168, 4
      %s170 = scalar_lea.vmem %s3, %s169
      %v172 = vld [vmem:[%s0] sm:$0xf]
      %v173 = vld [vmem:[%s0 + $0x4] sm:$0xf]
      %v174 = vld [vmem:[%s165] sm:$0xff]
      %v175 = vld [vmem:[%s165 + $0x8] sm:$0xff]
      %v176 = vld [vmem:[%s165 + $0x10] sm:$0xff]
      %v177 = vld [vmem:[%s165 + $0x18] sm:$0xff]
      %v178 = vld [vmem:[%s165 + $0x20] sm:$0xff]
      %v179 = vld [vmem:[%s165 + $0x28] sm:$0xff]
      %v180 = vld [vmem:[%s165 + $0x30] sm:$0xff]
      %v181 = vld [vmem:[%s165 + $0x38] sm:$0xff]
      %v182 = vld [vmem:[%s165 + $0x40] sm:$0xff]
      %v183 = vld [vmem:[%s2] sm:$0xff]
      %v184 = vld [vmem:[%s2 + $0x8] sm:$0xff]
      %186 = vset.pattern.permute.xlu0 0
      %187 = vperm.xlu0 %186, %v183
      %v188 = vpop.permute.xlu0 %187
      %191 = vset.pattern.permute.xlu0 0
      %192 = vperm.xlu0 %191, %v184
      %v193 = vpop.permute.xlu0 %192
      %v197 = vunpack.c.l.b16 %v172
      %v198 = vunpack.c.l.b16 %v173
      %v199 = vpack.c.b16 %v198, %v197
      %v209 = vunpack.c.l.b16 %v174
      %v210 = vunpack.c.h.b16 %v174
      %v211 = vunpack.c.l.b16 %v175
      %v212 = vunpack.c.h.b16 %v175
      %v213 = vunpack.c.l.b16 %v176
      %v214 = vunpack.c.h.b16 %v176
      %v215 = vunpack.c.l.b16 %v177
      %v216 = vunpack.c.h.b16 %v177
      %v217 = vunpack.c.l.b16 %v178
      %v218 = vunpack.c.h.b16 %v178
      %v219 = vunpack.c.l.b16 %v179
      %v220 = vunpack.c.h.b16 %v179
      %v221 = vunpack.c.l.b16 %v180
      %v222 = vunpack.c.h.b16 %v180
      %v223 = vunpack.c.l.b16 %v181
      %v224 = vunpack.c.h.b16 %v181
      %v225 = vunpack.c.l.b16 %v182
      %v226 = vunpack.c.h.b16 %v182
      %v227 = vpack.c.b16 %v211, %v209
      %v228 = vpack.c.b16 %v212, %v210
      %v229 = vpack.c.b16 %v215, %v213
      %v230 = vpack.c.b16 %v216, %v214
      %v231 = vpack.c.b16 %v219, %v217
      %v232 = vpack.c.b16 %v220, %v218
      %v233 = vpack.c.b16 %v223, %v221
      %v234 = vpack.c.b16 %v224, %v222
      %v235 = vpack.c.b16 %v225, %v225
      %v236 = vpack.c.b16 %v226, %v226
      %vm245 = vcmask 588800
      %v247 = vsel %vm245, %v199, 0
      %vm249 = vcmask 1043456
      %v251 = vsel %vm249, %v235, 0
      %v254 = vsel %vm249, %v236, 0
      %256 = vmatprep.subr.bf16.mxu0 %v228
      %257 = vmatpush1.bf16.msra.mxu0 %v227
      %258 = vmatprep.subr.bf16.mxu0 %v230
      %259 = vmatpush1.bf16.msra.mxu0 %v229
      %260 = vmatprep.subr.bf16.mxu0 %v232
      %261 = vmatpush1.bf16.msra.mxu0 %v231
      %262 = vmatprep.subr.bf16.mxu0 %v234
      %263 = vmatpush1.bf16.msra.mxu0 %v233
      %264 = vmatprep.subr.bf16.mxu0 %v254
      %265 = vmatpush1.bf16.msra.mxu0 %v251
      %266 = vmatprep.subr.bf16.mxu0 0
      %267 = vmatpush1.bf16.msra.mxu0 0
      %268 = vmatprep.subr.bf16.mxu0 0
      %269 = vmatpush1.bf16.msra.mxu0 0
      %270 = vmatprep.subr.bf16.mxu0 0
      %271 = vmatpush1.bf16.msra.mxu0 0
      %272 = vmatprep.subr.bf16.mxu0 0
      %273 = vmatpush1.bf16.msra.mxu0 0
      %274 = vmatprep.subr.bf16.mxu0 0
      %275 = vmatpush1.bf16.msra.mxu0 0
      %276 = vmatprep.subr.bf16.mxu0 0
      %277 = vmatpush1.bf16.msra.mxu0 0
      %278 = vmatprep.subr.bf16.mxu0 0
      %279 = vmatpush1.bf16.msra.mxu0 0
      %280 = vmatprep.subr.bf16.mxu0 0
      %281 = vmatpush1.bf16.msra.mxu0 0
      %282 = vmatprep.subr.bf16.mxu0 0
      %283 = vmatpush1.bf16.msra.mxu0 0
      %284 = vmatprep.subr.bf16.mxu0 0
      %285 = vmatpush1.bf16.msra.mxu0 0
      %286 = vmatprep.subr.bf16.mxu0 0
      %287 = vmatpush1.bf16.msra.mxu0 0
      %288 = vmatprep.mubr.bf16.mxu0 0
      %289 = vmatmul.mubr.bf16.gmra.mrb[0].mxu0 %v247
      %v290 = vpop.f32.mrb[0].mxu0
      %v291 = vadd.f32 %v188, %v290
      %v292 = vpop.f32.mrb[0].mxu0
      %v293 = vadd.f32 %v188, %v292
      %v294 = vpop.f32.mrb[0].mxu0
      %v295 = vadd.f32 %v193, %v294
      %v296 = vpop.f32.mrb[0].mxu0
      %v297 = vadd.f32 %v193, %v296
      %298 = vdwg.mxu0
      %v299 = vmax.f32 %v291, 0.0
      %v300 = vmax.f32 %v293, 0.0
      %v301 = vmax.f32 %v295, 0.0
      %v302 = vmax.f32 %v297, 0.0
      %v303 = vpack.c.bf16 %v301, %v299
      %v304 = vpack.c.bf16 %v302, %v300
      %v307 = vunpack.c.l.b16 %v303
      %v308 = vunpack.c.l.b16 %v304
      %v309 = vunpack.c.h.b16 %v303
      %v310 = vunpack.c.h.b16 %v304
      %v311 = vpack.c.b16 %v308, %v307
      %v312 = vpack.c.b16 %v310, %v309
      %315 = vst [vmem:[%s170] sm:$0xff] %v311
      %316 = vst [vmem:[%s170 + $0x8] sm:$0xff] %v312
      %p317 = scmp.lt.s32.totalorder %s14, 7
      %s318 = scalar_select %p317, %s14, 7
      %s319 = smul.addr %s318, 4
      %s320 = smul.addr %s319, 4
      %s321 = scalar_lea.vmem %s3, %s320
      // Predicated region
      $region33: #{im2im_forward.9} parent=31 // pred_check
        %p322 = pneg %p100
      $region34: #{im2im_forward.9} parent=31 // pred_check_branch
        %324 = sbr.rel (%p322) target = $region36
      $region35: #{im2im_forward.9} parent=31 // pred_region
        _
      $region36: #{im2im_forward.9} parent=31 // pred_fallthru
        _
    $region32: #{im2im_forward.9} parent=5 // pred_fallthru
      _
    %p325 = scmp.le.s32.totalorder 2, %s9
    // Predicated region
    $region37: #{im2im_forward.9} parent=5 // pred_check
      %p326 = pneg %p325
    $region38: #{im2im_forward.9} parent=5 // pred_check_branch
      %328 = sbr.rel (%p326) target = $region40
    $region39: #{im2im_forward.9} parent=5 // pred_region
      %s329 = ssub.s32 %s9, 2
      // Predicated region
      $region41: #{im2im_forward.9} parent=39 // pred_check
        %p330 = pneg %p106
      $region42: #{im2im_forward.9} parent=39 // pred_check_branch
        %332 = sbr.rel (%p330) target = $region44
      $region43: #{im2im_forward.9} parent=39 // pred_region
        %p333 = scmp.lt.s32.totalorder %s15, 7
        %s334 = scalar_select %p333, %s15, 7
        %s335 = smul.addr %s334, 4
        %s336 = smul.addr %s335, 4
        %s337 = scalar_lea.vmem %s3, %s336
      $region44: #{im2im_forward.9} parent=39 // pred_fallthru
        _
    $region40: #{im2im_forward.9} parent=5 // pred_fallthru
      _
  $region6: #{im2im_forward.9} parent=0 // loop_footer
    %s13 = sadd.s32 1, %s9
  $region7: #{im2im_forward.9} parent=0 // loop_footer_branch
    %8 = sbr.rel target = $region3
  $region8: #{im2im_forward.9} parent=0 // loop_exit
    _

// kernel: im2im_forward.10
$region0: #{im2im_forward.10}
  #allocation0 [shape = 'u32[]', space=smem, size = 0x4, offset = 0x4, fixed_abs, tag = 'smem constant byte address 0x4 - core index']
  #allocation1 [shape = 'u32[144,128]{1,0:T(1,128)}', space=vmem, size = 0x12000, scoped, tag = 'internal scratch']
  %s0 = inlined_call_operand.vmem [shape: bf16[32,144], index: 0, kind: input, shape index: {}]
  %s1 = inlined_call_operand.vmem [shape: bf16[8,144,64], index: 1, kind: input, shape index: {}]
  %s2 = inlined_call_operand.vmem [shape: f32[32,1], index: 2, kind: input, shape index: {}]
  %s3 = inlined_call_operand.vmem [shape: bf16[8,32,64], index: 3, kind: output, shape index: {}]
  %s4 = sld [smem:[#allocation0]]
  $region45: #{im2im_forward.10} parent=0
    _
  %s6 = ssub.s32 1, %s4
  %s7 = scalar_select 0, %s6, %s4
  loop: start=0, step=1, limit=10
  $region2: #{im2im_forward.10} parent=0 // loop_pre_header
    _
  $region3: #{im2im_forward.10} parent=0 // loop_header
    %s9 = sphi 0, %s13
    %p10 = scmp.ge.s32.totalorder %s9, 10
    %s17 = sphi 0, %s17
    %s19 = sphi 0, %s17
    %s20 = sphi 0, %s19
    %s34 = sphi 0, %s20
    %s40 = sphi 0, %s42
    %s43 = sphi 0, %s40
    %s44 = sphi 0, %s43
    %s60 = sphi 0, %s44
    %s64 = sphi 0, %s64
    %s66 = sphi 0, %s64
    %s67 = sphi 0, %s66
    %s81 = sphi 0, %s67
    %s87 = sphi 0, %s89
    %s90 = sphi 0, %s87
    %s91 = sphi 0, %s90
    %s107 = sphi 0, %s91
  $region4: #{im2im_forward.10} parent=0 // loop_header_branch
    %12 = sbr.rel (%p10) target = $region8
  $region5: #{im2im_forward.10} parent=0 // loop_body
    %s14 = ssub.s32 %s9, 1
    %s15 = ssub.s32 %s9, 2
    %s16 = sadd.s32 %s9, 1
    %s18 = sadd.s32 %s17, 1
    %p21 = scmp.eq.s32.totalorder %s9, 7
    %p22 = scmp.ne.s32.totalorder %s17, %s19
    %p23 = scmp.eq.s32.totalorder %s9, 0
    %p24 = por %p22, %p23
    %p25 = scmp.ne.s32.totalorder %s17, %s19
    %p26 = scmp.eq.s32.totalorder %s14, 7
    %p27 = por %p25, %p26
    %p28 = scmp.ne.s32.totalorder %s19, %s20
    %p29 = scmp.eq.s32.totalorder %s14, 0
    %p30 = por %p28, %p29
    %p31 = scmp.ne.s32.totalorder %s19, %s20
    %p32 = scmp.eq.s32.totalorder %s15, 7
    %p33 = por %p31, %p32
    %p35 = scmp.ne.s32.totalorder %s20, %s34
    %p36 = scmp.eq.s32.totalorder %s15, 0
    %p37 = por %p35, %p36
    %s38 = ssub.s32 %s9, %s16
    %p39 = scmp.eq.s32.totalorder %s38, 0
    %s41 = sadd.s32 %s40, 1
    %s42 = scalar_select %p39, %s40, %s41
    %p45 = pneg %p39
    %p46 = scmp.eq.s32.totalorder %s9, 7
    %p47 = por %p45, %p46
    %p48 = scmp.ne.s32.totalorder %s40, %s43
    %p49 = scmp.eq.s32.totalorder %s9, 0
    %p50 = por %p48, %p49
    %p51 = scmp.ne.s32.totalorder %s40, %s43
    %p52 = scmp.eq.s32.totalorder %s14, 7
    %p53 = por %p51, %p52
    %p54 = scmp.ne.s32.totalorder %s43, %s44
    %p55 = scmp.eq.s32.totalorder %s14, 0
    %p56 = por %p54, %p55
    %p57 = scmp.ne.s32.totalorder %s43, %s44
    %p58 = scmp.eq.s32.totalorder %s15, 7
    %p59 = por %p57, %p58
    %p61 = scmp.ne.s32.totalorder %s44, %s60
    %p62 = scmp.eq.s32.totalorder %s15, 0
    %p63 = por %p61, %p62
    %s65 = sadd.s32 %s64, 1
    %p68 = scmp.eq.s32.totalorder %s9, 7
    %p69 = scmp.ne.s32.totalorder %s64, %s66
    %p70 = scmp.eq.s32.totalorder %s9, 0
    %p71 = por %p69, %p70
    %p72 = scmp.ne.s32.totalorder %s64, %s66
    %p73 = scmp.eq.s32.totalorder %s14, 7
    %p74 = por %p72, %p73
    %p75 = scmp.ne.s32.totalorder %s66, %s67
    %p76 = scmp.eq.s32.totalorder %s14, 0
    %p77 = por %p75, %p76
    %p78 = scmp.ne.s32.totalorder %s66, %s67
    %p79 = scmp.eq.s32.totalorder %s15, 7
    %p80 = por %p78, %p79
    %p82 = scmp.ne.s32.totalorder %s67, %s81
    %p83 = scmp.eq.s32.totalorder %s15, 0
    %p84 = por %p82, %p83
    %s85 = ssub.s32 %s9, %s16
    %p86 = scmp.eq.s32.totalorder %s85, 0
    %s88 = sadd.s32 %s87, 1
    %s89 = scalar_select %p86, %s87, %s88
    %p92 = pneg %p86
    %p93 = scmp.eq.s32.totalorder %s9, 7
    %p94 = por %p92, %p93
    %p95 = scmp.ne.s32.totalorder %s87, %s90
    %p96 = scmp.eq.s32.totalorder %s9, 0
    %p97 = por %p95, %p96
    %p98 = scmp.ne.s32.totalorder %s87, %s90
    %p99 = scmp.eq.s32.totalorder %s14, 7
    %p100 = por %p98, %p99
    %p101 = scmp.ne.s32.totalorder %s90, %s91
    %p102 = scmp.eq.s32.totalorder %s14, 0
    %p103 = por %p101, %p102
    %p104 = scmp.ne.s32.totalorder %s90, %s91
    %p105 = scmp.eq.s32.totalorder %s15, 7
    %p106 = por %p104, %p105
    %p108 = scmp.ne.s32.totalorder %s91, %s107
    %p109 = scmp.eq.s32.totalorder %s15, 0
    %p110 = por %p108, %p109
    %p111 = scmp.le.s32.totalorder 1, %s9
    %p112 = scmp.lt.s32.totalorder %s9, 9
    %p113 = pnand %p111, %p112
    %p114 = pneg %p113
    // Predicated region
    $region9: #{im2im_forward.10} parent=5 // pred_check
      _
    $region10: #{im2im_forward.10} parent=5 // pred_check_branch
      %116 = sbr.rel (%p113) target = $region12
    $region11: #{im2im_forward.10} parent=5 // pred_region
      %s117 = ssub.s32 %s9, 1
      // Predicated region
      $region13: #{im2im_forward.10} parent=11 // pred_check
        %p118 = pneg %p30
      $region14: #{im2im_forward.10} parent=11 // pred_check_branch
        %120 = sbr.rel (%p118) target = $region16
      $region15: #{im2im_forward.10} parent=11 // pred_region
        _
      $region16: #{im2im_forward.10} parent=11 // pred_fallthru
        _
      // Predicated region
      $region17: #{im2im_forward.10} parent=11 // pred_check
        %p121 = pneg %p77
      $region18: #{im2im_forward.10} parent=11 // pred_check_branch
        %123 = sbr.rel (%p121) target = $region20
      $region19: #{im2im_forward.10} parent=11 // pred_region
        _
      $region20: #{im2im_forward.10} parent=11 // pred_fallthru
        _
    $region12: #{im2im_forward.10} parent=5 // pred_fallthru
      _
    %p124 = scmp.lt.s32.totalorder %s9, 8
    // Predicated region
    $region21: #{im2im_forward.10} parent=5 // pred_check
      %p125 = pneg %p124
    $region22: #{im2im_forward.10} parent=5 // pred_check_branch
      %127 = sbr.rel (%p125) target = $region24
    $region23: #{im2im_forward.10} parent=5 // pred_region
      // Predicated region
      $region25: #{im2im_forward.10} parent=23 // pred_check
        %p128 = pneg %p50
      $region26: #{im2im_forward.10} parent=23 // pred_check_branch
        %130 = sbr.rel (%p128) target = $region28
      $region27: #{im2im_forward.10} parent=23 // pred_region
        %p131 = scmp.lt.s32.totalorder %s9, 7
        %s132 = scalar_select %p131, %s9, 7
        %s133 = smul.addr %s132, 18
        %s134 = smul.addr %s133, 4
        %s135 = scalar_lea.vmem %s1, %s134
      $region28: #{im2im_forward.10} parent=23 // pred_fallthru
        _
    $region24: #{im2im_forward.10} parent=5 // pred_fallthru
      _
    %p136 = scmp.le.s32.totalorder 1, %s9
    %p137 = scmp.lt.s32.totalorder %s9, 9
    %p138 = pnand %p136, %p137
    %p139 = pneg %p138
    // Predicated region
    $region29: #{im2im_forward.10} parent=5 // pred_check
      _
    $region30: #{im2im_forward.10} parent=5 // pred_check_branch
      %141 = sbr.rel (%p138) target = $region32
    $region31: #{im2im_forward.10} parent=5 // pred_region
      %s142 = ssub.s32 %s9, 1
      %p143 = pneg %p30
      %p144 = pneg %p27
      %p145 = scmp.lt.s32.totalorder %s14, 7
      %s146 = scalar_select %p145, %s14, 7
      %s147 = smul.addr %s146, 18
      %s148 = smul.addr %s147, 4
      %s149 = scalar_lea.vmem %s1, %s148
      %p150 = pneg %p56
      %p151 = pneg %p53
      %p152 = pneg %p77
      %p153 = pneg %p74
      %p154 = pneg %p103
      %p155 = pneg %p100
      %p156 = scmp.lt.s32.totalorder %s14, 7
      %s157 = scalar_select %p156, %s14, 7
      %s158 = smul.addr %s157, 4
      %s159 = smul.addr %s158, 4
      %s160 = scalar_lea.vmem %s3, %s159
      %p161 = scmp.lt.s32.totalorder %s14, 7
      %s162 = scalar_select %p161, %s14, 7
      %s163 = smul.addr %s162, 18
      %s164 = smul.addr %s163, 4
      %s165 = scalar_lea.vmem %s1, %s164
      %p166 = scmp.lt.s32.totalorder %s14, 7
      %s167 = scalar_select %p166, %s14, 7
      %s168 = smul.addr %s167, 4
      %s169 = smul.addr %s168, 4
      %s170 = scalar_lea.vmem %s3, %s169
      %v172 = vld [vmem:[%s0] sm:$0xff]
      %v173 = vld [vmem:[%s0 + $0x8] sm:$0xff]
      %v174 = vld [vmem:[%s0 + $0x10] sm:$0xff]
      %v175 = vld [vmem:[%s0 + $0x18] sm:$0xff]
      %v176 = vld [vmem:[%s165] sm:$0xf]
      %v177 = vld [vmem:[%s165 + $0x4] sm:$0xf]
      %v178 = vld [vmem:[%s165 + $0x8] sm:$0xf]
      %v179 = vld [vmem:[%s165 + $0xc] sm:$0xf]
      %v180 = vld [vmem:[%s165 + $0x10] sm:$0xf]
      %v181 = vld [vmem:[%s165 + $0x14] sm:$0xf]
      %v182 = vld [vmem:[%s165 + $0x18] sm:$0xf]
      %v183 = vld [vmem:[%s165 + $0x1c] sm:$0xf]
      %v184 = vld [vmem:[%s165 + $0x20] sm:$0xf]
      %v185 = vld [vmem:[%s165 + $0x24] sm:$0xf]
      %v186 = vld [vmem:[%s165 + $0x28] sm:$0xf]
      %v187 = vld [vmem:[%s165 + $0x2c] sm:$0xf]
      %v188 = vld [vmem:[%s165 + $0x30] sm:$0xf]
      %v189 = vld [vmem:[%s165 + $0x34] sm:$0xf]
      %v190 = vld [vmem:[%s165 + $0x38] sm:$0xf]
      %v191 = vld [vmem:[%s165 + $0x3c] sm:$0xf]
      %v192 = vld [vmem:[%s165 + $0x40] sm:$0xf]
      %v193 = vld [vmem:[%s165 + $0x44] sm:$0xf]
      %v194 = vld [vmem:[%s2] sm:$0xff]
      %v195 = vld [vmem:[%s2 + $0x8] sm:$0xff]
      %v196 = vld [vmem:[%s2 + $0x10] sm:$0xff]
      %v197 = vld [vmem:[%s2 + $0x18] sm:$0xff]
      %199 = vset.pattern.permute.xlu0 0
      %200 = vperm.xlu0 %199, %v194
      %v201 = vpop.permute.xlu0 %200
      %204 = vset.pattern.permute.xlu0 0
      %205 = vperm.xlu0 %204, %v195
      %v206 = vpop.permute.xlu0 %205
      %209 = vset.pattern.permute.xlu0 0
      %210 = vperm.xlu0 %209, %v196
      %v211 = vpop.permute.xlu0 %210
      %214 = vset.pattern.permute.xlu0 0
      %215 = vperm.xlu0 %214, %v197
      %v216 = vpop.permute.xlu0 %215
      %v222 = vunpack.c.l.b16 %v172
      %v223 = vunpack.c.h.b16 %v172
      %v224 = vunpack.c.l.b16 %v173
      %v225 = vunpack.c.h.b16 %v173
      %v226 = vunpack.c.l.b16 %v174
      %v227 = vunpack.c.h.b16 %v174
      %v228 = vunpack.c.l.b16 %v175
      %v229 = vunpack.c.h.b16 %v175
      %v230 = vpack.c.b16 %v224, %v222
      %v231 = vpack.c.b16 %v225, %v223
      %v232 = vpack.c.b16 %v228, %v226
      %v233 = vpack.c.b16 %v229, %v227
      %v254 = vunpack.c.l.b16 %v176
      %v255 = vunpack.c.l.b16 %v177
      %v256 = vunpack.c.l.b16 %v178
      %v257 = vunpack.c.l.b16 %v179
      %v258 = vunpack.c.l.b16 %v180
      %v259 = vunpack.c.l.b16 %v181
      %v260 = vunpack.c.l.b16 %v182
      %v261 = vunpack.c.l.b16 %v183
      %v262 = vunpack.c.l.b16 %v184
      %v263 = vunpack.c.l.b16 %v185
      %v264 = vunpack.c.l.b16 %v186
      %v265 = vunpack.c.l.b16 %v187
      %v266 = vunpack.c.l.b16 %v188
      %v267 = vunpack.c.l.b16 %v189
      %v268 = vunpack.c.l.b16 %v190
      %v269 = vunpack.c.l.b16 %v191
      %v270 = vunpack.c.l.b16 %v192
      %v271 = vunpack.c.l.b16 %v193
      %v272 = vpack.c.b16 %v255, %v254
      %v273 = vpack.c.b16 %v257, %v256
      %v274 = vpack.c.b16 %v259, %v258
      %v275 = vpack.c.b16 %v261, %v260
      %v276 = vpack.c.b16 %v263, %v262
      %v277 = vpack.c.b16 %v265, %v264
      %v278 = vpack.c.b16 %v267, %v266
      %v279 = vpack.c.b16 %v269, %v268
      %v280 = vpack.c.b16 %v271, %v270
      %vm290 = vcmask 130048
      %v292 = vsel %vm290, %v231, 0
      %v295 = vsel %vm290, %v233, 0
      %297 = vmatprep.subr.bf16.mxu0 0
      %298 = vmatpush1.bf16.msra.mxu0 %v272
      %299 = vmatprep.subr.bf16.mxu0 0
      %300 = vmatpush1.bf16.msra.mxu0 %v273
      %301 = vmatprep.subr.bf16.mxu0 0
      %302 = vmatpush1.bf16.msra.mxu0 %v274
      %303 = vmatprep.subr.bf16.mxu0 0
      %304 = vmatpush1.bf16.msra.mxu0 %v275
      %305 = vmatprep.subr.bf16.mxu0 0
      %306 = vmatpush1.bf16.msra.mxu0 %v276
      %307 = vmatprep.subr.bf16.mxu0 0
      %308 = vmatpush1.bf16.msra.mxu0 %v277
      %309 = vmatprep.subr.bf16.mxu0 0
      %310 = vmatpush1.bf16.msra.mxu0 %v278
      %311 = vmatprep.subr.bf16.mxu0 0
      %312 = vmatpush1.bf16.msra.mxu0 %v279
      %313 = vmatprep.subr.bf16.mxu0 0
      %314 = vmatpush1.bf16.msra.mxu0 %v280
      %315 = vmatprep.subr.bf16.mxu0 0
      %316 = vmatpush1.bf16.msra.mxu0 0
      %317 = vmatprep.subr.bf16.mxu0 0
      %318 = vmatpush1.bf16.msra.mxu0 0
      %319 = vmatprep.subr.bf16.mxu0 0
      %320 = vmatpush1.bf16.msra.mxu0 0
      %321 = vmatprep.subr.bf16.mxu0 0
      %322 = vmatpush1.bf16.msra.mxu0 0
      %323 = vmatprep.subr.bf16.mxu0 0
      %324 = vmatpush1.bf16.msra.mxu0 0
      %325 = vmatprep.subr.bf16.mxu0 0
      %326 = vmatpush1.bf16.msra.mxu0 0
      %327 = vmatprep.subr.bf16.mxu0 0
      %328 = vmatpush1.bf16.msra.mxu0 0
      %329 = vmatprep.mubr.bf16.mxu0 %v292
      %330 = vmatmul.mubr.bf16.gmra.mrb[0].mxu0 %v230
      %v331 = vpop.f32.mrb[0].mxu0
      %v332 = vadd.f32 %v201, %v331
      %v333 = vpop.f32.mrb[0].mxu0
      %v334 = vpop.f32.mrb[0].mxu0
      %v335 = vadd.f32 %v206, %v334
      %v336 = vpop.f32.mrb[0].mxu0
      %337 = vmatprep.mubr.bf16.mxu0 %v295
      %338 = vmatmul.mubr.bf16.gmra.mrb[0].mxu0 %v232
      %v339 = vpop.f32.mrb[0].mxu0
      %v340 = vadd.f32 %v211, %v339
      %v341 = vpop.f32.mrb[0].mxu0
      %v342 = vpop.f32.mrb[0].mxu0
      %v343 = vadd.f32 %v216, %v342
      %v344 = vpop.f32.mrb[0].mxu0
      %345 = vdwg.mxu0
      %v346 = vmax.f32 %v332, 0.0
      %v347 = vmax.f32 %v335, 0.0
      %v348 = vmax.f32 %v340, 0.0
      %v349 = vmax.f32 %v343, 0.0
      %v350 = vpack.c.bf16 %v347, %v346
      %v351 = vpack.c.bf16 %v349, %v348
      %v354 = vunpack.c.l.b16 %v350
      %v355 = vunpack.c.h.b16 %v350
      %v356 = vunpack.c.l.b16 %v351
      %v357 = vunpack.c.h.b16 %v351
      %v358 = vpack.c.b16 %v354, %v354
      %v359 = vpack.c.b16 %v355, %v355
      %v360 = vpack.c.b16 %v356, %v356
      %v361 = vpack.c.b16 %v357, %v357
      %vm366 = vcmask 519168
      %367 = vst.msk [vmem:[%s170] sm:$0xf] %vm366, %v358
      %368 = vst.msk [vmem:[%s170 + $0x4] sm:$0xf] %vm366, %v359
      %369 = vst.msk [vmem:[%s170 + $0x8] sm:$0xf] %vm366, %v360
      %370 = vst.msk [vmem:[%s170 + $0xc] sm:$0xf] %vm366, %v361
      %p371 = scmp.lt.s32.totalorder %s14, 7
      %s372 = scalar_select %p371, %s14, 7
      %s373 = smul.addr %s372, 4
      %s374 = smul.addr %s373, 4
      %s375 = scalar_lea.vmem %s3, %s374
      // Predicated region
      $region33: #{im2im_forward.10} parent=31 // pred_check
        %p376 = pneg %p100
      $region34: #{im2im_forward.10} parent=31 // pred_check_branch
        %378 = sbr.rel (%p376) target = $region36
      $region35: #{im2im_forward.10} parent=31 // pred_region
        _
      $region36: #{im2im_forward.10} parent=31 // pred_fallthru
        _
    $region32: #{im2im_forward.10} parent=5 // pred_fallthru
      _
    %p379 = scmp.le.s32.totalorder 2, %s9
    // Predicated region
    $region37: #{im2im_forward.10} parent=5 // pred_check
      %p380 = pneg %p379
    $region38: #{im2im_forward.10} parent=5 // pred_check_branch
      %382 = sbr.rel (%p380) target = $region40
    $region39: #{im2im_forward.10} parent=5 // pred_region
      %s383 = ssub.s32 %s9, 2
      // Predicated region
      $region41: #{im2im_forward.10} parent=39 // pred_check
        %p384 = pneg %p106
      $region42: #{im2im_forward.10} parent=39 // pred_check_branch
        %386 = sbr.rel (%p384) target = $region44
      $region43: #{im2im_forward.10} parent=39 // pred_region
        %p387 = scmp.lt.s32.totalorder %s15, 7
        %s388 = scalar_select %p387, %s15, 7
        %s389 = smul.addr %s388, 4
        %s390 = smul.addr %s389, 4
        %s391 = scalar_lea.vmem %s3, %s390
      $region44: #{im2im_forward.10} parent=39 // pred_fallthru
        _
    $region40: #{im2im_forward.10} parent=5 // pred_fallthru
      _
  $region6: #{im2im_forward.10} parent=0 // loop_footer
    %s13 = sadd.s32 1, %s9
  $region7: #{im2im_forward.10} parent=0 // loop_footer_branch
    %8 = sbr.rel target = $region3
  $region8: #{im2im_forward.10} parent=0 // loop_exit
    _

// kernel: im2im_forward.11
$region0: #{im2im_forward.11}
  #allocation0 [shape = 'u32[]', space=smem, size = 0x4, offset = 0x4, fixed_abs, tag = 'smem constant byte address 0x4 - core index']
  #allocation1 [shape = 'u32[144,128]{1,0:T(1,128)}', space=vmem, size = 0x12000, scoped, tag = 'internal scratch']
  #allocation2 [shape = 'f32[2,128]{1,0:T(2,128)}', space=vmem, size = 0x400, scoped, tag = 'scratch operand']
  #allocation3 [shape = 'f32[2,128]{1,0:T(2,128)}', space=vmem, size = 0x400, scoped, tag = 'scratch operand']
  %s0 = inlined_call_operand.vmem [shape: f32[4,2,512], index: 0, kind: input, shape index: {}]
  %s1 = inlined_call_operand.vmem [shape: f32[128,512], index: 1, kind: input, shape index: {}]
  %s2 = inlined_call_operand.vmem [shape: f32[4,2,128], index: 2, kind: output, shape index: {}]
  %s3 = sld [smem:[#allocation0]]
  $region45: #{im2im_forward.11} parent=0
    _
  %s5 = ssub.s32 1, %s3
  %s6 = scalar_select 0, %s5, %s3
  loop: start=0, step=1, limit=6
  $region2: #{im2im_forward.11} parent=0 // loop_pre_header
    _
  $region3: #{im2im_forward.11} parent=0 // loop_header
    %s8 = sphi 0, %s12
    %p9 = scmp.ge.s32.totalorder %s8, 6
    %s18 = sphi 0, %s20
    %s21 = sphi 0, %s18
    %s22 = sphi 0, %s21
    %s38 = sphi 0, %s22
    %s42 = sphi 0, %s42
    %s44 = sphi 0, %s42
    %s45 = sphi 0, %s44
    %s59 = sphi 0, %s45
    %s65 = sphi 0, %s67
    %s68 = sphi 0, %s65
    %s69 = sphi 0, %s68
    %s85 = sphi 0, %s69
  $region4: #{im2im_forward.11} parent=0 // loop_header_branch
    %11 = sbr.rel (%p9) target = $region8
  $region5: #{im2im_forward.11} parent=0 // loop_body
    %s13 = ssub.s32 %s8, 1
    %s14 = ssub.s32 %s8, 2
    %s15 = sadd.s32 %s8, 1
    %s16 = ssub.s32 %s8, %s15
    %p17 = scmp.eq.s32.totalorder %s16, 0
    %s19 = sadd.s32 %s18, 1
    %s20 = scalar_select %p17, %s18, %s19
    %p23 = pneg %p17
    %p24 = scmp.eq.s32.totalorder %s8, 3
    %p25 = por %p23, %p24
    %p26 = scmp.ne.s32.totalorder %s18, %s21
    %p27 = scmp.eq.s32.totalorder %s8, 0
    %p28 = por %p26, %p27
    %p29 = scmp.ne.s32.totalorder %s18, %s21
    %p30 = scmp.eq.s32.totalorder %s13, 3
    %p31 = por %p29, %p30
    %p32 = scmp.ne.s32.totalorder %s21, %s22
    %p33 = scmp.eq.s32.totalorder %s13, 0
    %p34 = por %p32, %p33
    %p35 = scmp.ne.s32.totalorder %s21, %s22
    %p36 = scmp.eq.s32.totalorder %s14, 3
    %p37 = por %p35, %p36
    %p39 = scmp.ne.s32.totalorder %s22, %s38
    %p40 = scmp.eq.s32.totalorder %s14, 0
    %p41 = por %p39, %p40
    %s43 = sadd.s32 %s42, 1
    %p46 = scmp.eq.s32.totalorder %s8, 3
    %p47 = scmp.ne.s32.totalorder %s42, %s44
    %p48 = scmp.eq.s32.totalorder %s8, 0
    %p49 = por %p47, %p48
    %p50 = scmp.ne.s32.totalorder %s42, %s44
    %p51 = scmp.eq.s32.totalorder %s13, 3
    %p52 = por %p50, %p51
    %p53 = scmp.ne.s32.totalorder %s44, %s45
    %p54 = scmp.eq.s32.totalorder %s13, 0
    %p55 = por %p53, %p54
    %p56 = scmp.ne.s32.totalorder %s44, %s45
    %p57 = scmp.eq.s32.totalorder %s14, 3
    %p58 = por %p56, %p57
    %p60 = scmp.ne.s32.totalorder %s45, %s59
    %p61 = scmp.eq.s32.totalorder %s14, 0
    %p62 = por %p60, %p61
    %s63 = ssub.s32 %s8, %s15
    %p64 = scmp.eq.s32.totalorder %s63, 0
    %s66 = sadd.s32 %s65, 1
    %s67 = scalar_select %p64, %s65, %s66
    %p70 = pneg %p64
    %p71 = scmp.eq.s32.totalorder %s8, 3
    %p72 = por %p70, %p71
    %p73 = scmp.ne.s32.totalorder %s65, %s68
    %p74 = scmp.eq.s32.totalorder %s8, 0
    %p75 = por %p73, %p74
    %p76 = scmp.ne.s32.totalorder %s65, %s68
    %p77 = scmp.eq.s32.totalorder %s13, 3
    %p78 = por %p76, %p77
    %p79 = scmp.ne.s32.totalorder %s68, %s69
    %p80 = scmp.eq.s32.totalorder %s13, 0
    %p81 = por %p79, %p80
    %p82 = scmp.ne.s32.totalorder %s68, %s69
    %p83 = scmp.eq.s32.totalorder %s14, 3
    %p84 = por %p82, %p83
    %p86 = scmp.ne.s32.totalorder %s69, %s85
    %p87 = scmp.eq.s32.totalorder %s14, 0
    %p88 = por %p86, %p87
    %p89 = scmp.le.s32.totalorder 1, %s8
    %p90 = scmp.lt.s32.totalorder %s8, 5
    %p91 = pnand %p89, %p90
    %p92 = pneg %p91
    // Predicated region
    $region9: #{im2im_forward.11} parent=5 // pred_check
      _
    $region10: #{im2im_forward.11} parent=5 // pred_check_branch
      %94 = sbr.rel (%p91) target = $region12
    $region11: #{im2im_forward.11} parent=5 // pred_region
      %s95 = ssub.s32 %s8, 1
      // Predicated region
      $region13: #{im2im_forward.11} parent=11 // pred_check
        %p96 = pneg %p55
      $region14: #{im2im_forward.11} parent=11 // pred_check_branch
        %98 = sbr.rel (%p96) target = $region16
      $region15: #{im2im_forward.11} parent=11 // pred_region
        _
      $region16: #{im2im_forward.11} parent=11 // pred_fallthru
        _
    $region12: #{im2im_forward.11} parent=5 // pred_fallthru
      _
    %p99 = scmp.lt.s32.totalorder %s8, 4
    // Predicated region
    $region17: #{im2im_forward.11} parent=5 // pred_check
      %p100 = pneg %p99
    $region18: #{im2im_forward.11} parent=5 // pred_check_branch
      %102 = sbr.rel (%p100) target = $region20
    $region19: #{im2im_forward.11} parent=5 // pred_region
      // Predicated region
      $region21: #{im2im_forward.11} parent=19 // pred_check
        %p103 = pneg %p28
      $region22: #{im2im_forward.11} parent=19 // pred_check_branch
        %105 = sbr.rel (%p103) target = $region24
      $region23: #{im2im_forward.11} parent=19 // pred_region
        %p106 = scmp.lt.s32.totalorder %s8, 3
        %s107 = scalar_select %p106, %s8, 3
        %s108 = smul.addr %s107, 4
        %s109 = smul.addr %s108, 2
        %s110 = scalar_lea.vmem %s0, %s109
      $region24: #{im2im_forward.11} parent=19 // pred_fallthru
        _
    $region20: #{im2im_forward.11} parent=5 // pred_fallthru
      _
    %p111 = scmp.le.s32.totalorder 1, %s8
    %p112 = scmp.lt.s32.totalorder %s8, 5
    %p113 = pnand %p111, %p112
    %p114 = pneg %p113
    // Predicated region
    $region25: #{im2im_forward.11} parent=5 // pred_check
      _
    $region26: #{im2im_forward.11} parent=5 // pred_check_branch
      %116 = sbr.rel (%p113) target = $region28
    $region27: #{im2im_forward.11} parent=5 // pred_region
      %s117 = ssub.s32 %s8, 1
      %p118 = scmp.lt.s32.totalorder %s13, 3
      %s119 = scalar_select %p118, %s13, 3
      %s120 = smul.addr %s119, 4
      %s121 = smul.addr %s120, 2
      %s122 = scalar_lea.vmem %s0, %s121
      %p123 = pneg %p34
      %p124 = pneg %p31
      %p125 = pneg %p55
      %p126 = pneg %p52
      %p127 = pneg %p81
      %p128 = pneg %p78
      %p129 = scmp.lt.s32.totalorder %s13, 3
      %s130 = scalar_select %p129, %s13, 3
      %s131 = smul.addr %s130, 2
      %s132 = scalar_lea.vmem %s2, %s131
      %p133 = scmp.lt.s32.totalorder %s13, 3
      %s134 = scalar_select %p133, %s13, 3
      %s135 = smul.addr %s134, 4
      %s136 = smul.addr %s135, 2
      %s137 = scalar_lea.vmem %s0, %s136
      %p138 = scmp.lt.s32.totalorder %s13, 3
      %s139 = scalar_select %p138, %s13, 3
      %s140 = smul.addr %s139, 2
      %s141 = scalar_lea.vmem %s2, %s140
      %p142 = scmp.eq.s32.totalorder %s13, 0
      // Predicated region
      $region29: #{im2im_forward.11} parent=27 // pred_check
        %p143 = pneg %p142
      $region30: #{im2im_forward.11} parent=27 // pred_check_branch
        %145 = sbr.rel (%p143) target = $region32
      $region31: #{im2im_forward.11} parent=27 // pred_region
        %146 = vst [vmem:[#allocation2] sm:$0x3] 0.0
        %147 = vst [vmem:[#allocation3] sm:$0x3] 0.0
      $region32: #{im2im_forward.11} parent=27 // pred_fallthru
        _
      %v148 = vld [vmem:[%s137] sm:$0xff]
      %v149 = vld [vmem:[#allocation2] sm:$0x3]
      %v150 = vld [vmem:[%s1] sm:$0xff]
      %v151 = vld [vmem:[%s1 + $0x8] sm:$0xff]
      %v152 = vld [vmem:[%s1 + $0x10] sm:$0xff]
      %v153 = vld [vmem:[%s1 + $0x18] sm:$0xff]
      %v154 = vld [vmem:[%s1 + $0x20] sm:$0xff]
      %v155 = vld [vmem:[%s1 + $0x28] sm:$0xff]
      %v156 = vld [vmem:[%s1 + $0x30] sm:$0xff]
      %v157 = vld [vmem:[%s1 + $0x38] sm:$0xff]
      %v158 = vld [vmem:[%s1 + $0x40] sm:$0xff]
      %v159 = vld [vmem:[%s1 + $0x48] sm:$0xff]
      %v160 = vld [vmem:[%s1 + $0x50] sm:$0xff]
      %v161 = vld [vmem:[%s1 + $0x58] sm:$0xff]
      %v162 = vld [vmem:[%s1 + $0x60] sm:$0xff]
      %v163 = vld [vmem:[%s1 + $0x68] sm:$0xff]
      %v164 = vld [vmem:[%s1 + $0x70] sm:$0xff]
      %v165 = vld [vmem:[%s1 + $0x78] sm:$0xff]
      %v166 = vld [vmem:[%s1 + $0x80] sm:$0xff]
      %v167 = vld [vmem:[%s1 + $0x88] sm:$0xff]
      %v168 = vld [vmem:[%s1 + $0x90] sm:$0xff]
      %v169 = vld [vmem:[%s1 + $0x98] sm:$0xff]
      %v170 = vld [vmem:[%s1 + $0xa0] sm:$0xff]
      %v171 = vld [vmem:[%s1 + $0xa8] sm:$0xff]
      %v172 = vld [vmem:[%s1 + $0xb0] sm:$0xff]
      %v173 = vld [vmem:[%s1 + $0xb8] sm:$0xff]
      %v174 = vld [vmem:[%s1 + $0xc0] sm:$0xff]
      %v175 = vld [vmem:[%s1 + $0xc8] sm:$0xff]
      %v176 = vld [vmem:[%s1 + $0xd0] sm:$0xff]
      %v177 = vld [vmem:[%s1 + $0xd8] sm:$0xff]
      %v178 = vld [vmem:[%s1 + $0xe0] sm:$0xff]
      %v179 = vld [vmem:[%s1 + $0xe8] sm:$0xff]
      %v180 = vld [vmem:[%s1 + $0xf0] sm:$0xff]
      %v181 = vld [vmem:[%s1 + $0xf8] sm:$0xff]
      %v182 = vld [vmem:[%s1 + $0x100] sm:$0xff]
      %v183 = vld [vmem:[%s1 + $0x108] sm:$0xff]
      %v184 = vld [vmem:[%s1 + $0x110] sm:$0xff]
      %v185 = vld [vmem:[%s1 + $0x118] sm:$0xff]
      %v186 = vld [vmem:[%s1 + $0x120] sm:$0xff]
      %v187 = vld [vmem:[%s1 + $0x128] sm:$0xff]
      %v188 = vld [vmem:[%s1 + $0x130] sm:$0xff]
      %v189 = vld [vmem:[%s1 + $0x138] sm:$0xff]
      %v190 = vld [vmem:[%s1 + $0x140] sm:$0xff]
      %v191 = vld [vmem:[%s1 + $0x148] sm:$0xff]
      %v192 = vld [vmem:[%s1 + $0x150] sm:$0xff]
      %v193 = vld [vmem:[%s1 + $0x158] sm:$0xff]
      %v194 = vld [vmem:[%s1 + $0x160] sm:$0xff]
      %v195 = vld [vmem:[%s1 + $0x168] sm:$0xff]
      %v196 = vld [vmem:[%s1 + $0x170] sm:$0xff]
      %v197 = vld [vmem:[%s1 + $0x178] sm:$0xff]
      %v198 = vld [vmem:[%s1 + $0x180] sm:$0xff]
      %v199 = vld [vmem:[%s1 + $0x188] sm:$0xff]
      %v200 = vld [vmem:[%s1 + $0x190] sm:$0xff]
      %v201 = vld [vmem:[%s1 + $0x198] sm:$0xff]
      %v202 = vld [vmem:[%s1 + $0x1a0] sm:$0xff]
      %v203 = vld [vmem:[%s1 + $0x1a8] sm:$0xff]
      %v204 = vld [vmem:[%s1 + $0x1b0] sm:$0xff]
      %v205 = vld [vmem:[%s1 + $0x1b8] sm:$0xff]
      %v206 = vld [vmem:[%s1 + $0x1c0] sm:$0xff]
      %v207 = vld [vmem:[%s1 + $0x1c8] sm:$0xff]
      %v208 = vld [vmem:[%s1 + $0x1d0] sm:$0xff]
      %v209 = vld [vmem:[%s1 + $0x1d8] sm:$0xff]
      %v210 = vld [vmem:[%s1 + $0x1e0] sm:$0xff]
      %v211 = vld [vmem:[%s1 + $0x1e8] sm:$0xff]
      %v212 = vld [vmem:[%s1 + $0x1f0] sm:$0xff]
      %v213 = vld [vmem:[%s1 + $0x1f8] sm:$0xff]
      %214 = vmatprep.subr.mxu0 %v151
      %215 = vmatpush1.msra.mxu0 %v150
      %216 = vmatprep.subr.mxu0 %v155
      %217 = vmatpush1.msra.mxu0 %v154
      %218 = vmatprep.subr.mxu0 %v159
      %219 = vmatpush1.msra.mxu0 %v158
      %220 = vmatprep.subr.mxu0 %v163
      %221 = vmatpush1.msra.mxu0 %v162
      %222 = vmatprep.subr.mxu0 %v167
      %223 = vmatpush1.msra.mxu0 %v166
      %224 = vmatprep.subr.mxu0 %v171
      %225 = vmatpush1.msra.mxu0 %v170
      %226 = vmatprep.subr.mxu0 %v175
      %227 = vmatpush1.msra.mxu0 %v174
      %228 = vmatprep.subr.mxu0 %v179
      %229 = vmatpush1.msra.mxu0 %v178
      %230 = vmatprep.subr.mxu0 %v183
      %231 = vmatpush1.msra.mxu0 %v182
      %232 = vmatprep.subr.mxu0 %v187
      %233 = vmatpush1.msra.mxu0 %v186
      %234 = vmatprep.subr.mxu0 %v191
      %235 = vmatpush1.msra.mxu0 %v190
      %236 = vmatprep.subr.mxu0 %v195
      %237 = vmatpush1.msra.mxu0 %v194
      %238 = vmatprep.subr.mxu0 %v199
      %239 = vmatpush1.msra.mxu0 %v198
      %240 = vmatprep.subr.mxu0 %v203
      %241 = vmatpush1.msra.mxu0 %v202
      %242 = vmatprep.subr.mxu0 %v207
      %243 = vmatpush1.msra.mxu0 %v206
      %244 = vmatprep.subr.mxu0 %v211
      %245 = vmatpush1.msra.mxu0 %v210
      %246 = vmatprep.subr.mxu0 0.0
      %247 = vmatpush1.msra.mxu0 0.0
      %248 = vmatprep.subr.mxu0 0.0
      %249 = vmatpush1.msra.mxu0 0.0
      %250 = vmatprep.subr.mxu0 0.0
      %251 = vmatpush1.msra.mxu0 0.0
      %252 = vmatprep.subr.mxu0 0.0
      %253 = vmatpush1.msra.mxu0 0.0
      %254 = vmatprep.subr.mxu0 0.0
      %255 = vmatpush1.msra.mxu0 0.0
      %256 = vmatprep.subr.mxu0 0.0
      %257 = vmatpush1.msra.mxu0 0.0
      %258 = vmatprep.subr.mxu0 0.0
      %259 = vmatpush1.msra.mxu0 0.0
      %260 = vmatprep.subr.mxu0 0.0
      %261 = vmatpush1.msra.mxu0 0.0
      %262 = vmatprep.subr.mxu0 0.0
      %263 = vmatpush1.msra.mxu0 0.0
      %264 = vmatprep.subr.mxu0 0.0
      %265 = vmatpush1.msra.mxu0 0.0
      %266 = vmatprep.subr.mxu0 0.0
      %267 = vmatpush1.msra.mxu0 0.0
      %268 = vmatprep.subr.mxu0 0.0
      %269 = vmatpush1.msra.mxu0 0.0
      %270 = vmatprep.subr.mxu0 0.0
      %271 = vmatpush1.msra.mxu0 0.0
      %272 = vmatprep.subr.mxu0 0.0
      %273 = vmatpush1.msra.mxu0 0.0
      %274 = vmatprep.subr.mxu0 0.0
      %275 = vmatpush1.msra.mxu0 0.0
      %276 = vmatprep.subr.mxu0 0.0
      %277 = vmatpush1.msra.mxu0 0.0
      %278 = vmatprep.mubr.f32.mxu0 0.0
      %279 = vmatmul.mubr.f32.gmra.mrb[0].mxu0 %v149
      %v280 = vpop.f32.mrb[0].mxu0
      %v281 = vadd.f32 0.0, %v280
      %v282 = vpop.f32.mrb[0].mxu0
      %v283 = vadd.f32 0.0, %v282
      %284 = vdwg.mxu0
      %285 = vmatprep.subr.mxu0 %v153
      %286 = vmatpush1.msra.mxu0 %v152
      %287 = vmatprep.subr.mxu0 %v157
      %288 = vmatpush1.msra.mxu0 %v156
      %289 = vmatprep.subr.mxu0 %v161
      %290 = vmatpush1.msra.mxu0 %v160
      %291 = vmatprep.subr.mxu0 %v165
      %292 = vmatpush1.msra.mxu0 %v164
      %293 = vmatprep.subr.mxu0 %v169
      %294 = vmatpush1.msra.mxu0 %v168
      %295 = vmatprep.subr.mxu0 %v173
      %296 = vmatpush1.msra.mxu0 %v172
      %297 = vmatprep.subr.mxu0 %v177
      %298 = vmatpush1.msra.mxu0 %v176
      %299 = vmatprep.subr.mxu0 %v181
      %300 = vmatpush1.msra.mxu0 %v180
      %301 = vmatprep.subr.mxu0 %v185
      %302 = vmatpush1.msra.mxu0 %v184
      %303 = vmatprep.subr.mxu0 %v189
      %304 = vmatpush1.msra.mxu0 %v188
      %305 = vmatprep.subr.mxu0 %v193
      %306 = vmatpush1.msra.mxu0 %v192
      %307 = vmatprep.subr.mxu0 %v197
      %308 = vmatpush1.msra.mxu0 %v196
      %309 = vmatprep.subr.mxu0 %v201
      %310 = vmatpush1.msra.mxu0 %v200
      %311 = vmatprep.subr.mxu0 %v205
      %312 = vmatpush1.msra.mxu0 %v204
      %313 = vmatprep.subr.mxu0 %v209
      %314 = vmatpush1.msra.mxu0 %v208
      %315 = vmatprep.subr.mxu0 %v213
      %316 = vmatpush1.msra.mxu0 %v212
      %317 = vmatprep.subr.mxu0 0.0
      %318 = vmatpush1.msra.mxu0 0.0
      %319 = vmatprep.subr.mxu0 0.0
      %320 = vmatpush1.msra.mxu0 0.0
      %321 = vmatprep.subr.mxu0 0.0
      %322 = vmatpush1.msra.mxu0 0.0
      %323 = vmatprep.subr.mxu0 0.0
      %324 = vmatpush1.msra.mxu0 0.0
      %325 = vmatprep.subr.mxu0 0.0
      %326 = vmatpush1.msra.mxu0 0.0
      %327 = vmatprep.subr.mxu0 0.0
      %328 = vmatpush1.msra.mxu0 0.0
      %329 = vmatprep.subr.mxu0 0.0
      %330 = vmatpush1.msra.mxu0 0.0
      %331 = vmatprep.subr.mxu0 0.0
      %332 = vmatpush1.msra.mxu0 0.0
      %333 = vmatprep.subr.mxu0 0.0
      %334 = vmatpush1.msra.mxu0 0.0
      %335 = vmatprep.subr.mxu0 0.0
      %336 = vmatpush1.msra.mxu0 0.0
      %337 = vmatprep.subr.mxu0 0.0
      %338 = vmatpush1.msra.mxu0 0.0
      %339 = vmatprep.subr.mxu0 0.0
      %340 = vmatpush1.msra.mxu0 0.0
      %341 = vmatprep.subr.mxu0 0.0
      %342 = vmatpush1.msra.mxu0 0.0
      %343 = vmatprep.subr.mxu0 0.0
      %344 = vmatpush1.msra.mxu0 0.0
      %345 = vmatprep.subr.mxu0 0.0
      %346 = vmatpush1.msra.mxu0 0.0
      %347 = vmatprep.subr.mxu0 0.0
      %348 = vmatpush1.msra.mxu0 0.0
      %349 = vmatprep.mubr.f32.mxu0 0.0
      %350 = vmatmul.mubr.f32.gmra.mrb[0].mxu0 %v149
      %v351 = vpop.f32.mrb[0].mxu0
      %v352 = vadd.f32 0.0, %v351
      %v353 = vpop.f32.mrb[0].mxu0
      %v354 = vadd.f32 0.0, %v353
      %355 = vdwg.mxu0
      %v360 = vcombine.low %v281, %v283
      %v361 = vcombine.low %v352, %v354
      %v363 = vunpack.c.l.s4 1983009808
      %v364 = vunpack.c.0.s8 %v363
      %v365 = vlaneseq
      %v366 = vshrl.u32 %v365, 7
      %v367 = vsub.s32 %v364, %v366
      %v368 = vrot.slane %v360, %v367
      %v370 = vunpack.c.l.s4 1983009808
      %v371 = vunpack.c.0.s8 %v370
      %v372 = vlaneseq
      %v373 = vshrl.u32 %v372, 7
      %v374 = vsub.s32 %v371, %v373
      %v375 = vrot.slane %v361, %v374
      %v376 = vcombine.low %v368, %v375
      %v378 = vadd.f32 %v148, %v376
      %v379 = vxor.u32 %v378, 2147483648
      %v380 = vmul.f32 %v379, 1.442695
      %v381 = vpow.pop %v380
      %v382 = vadd.f32 %v381, 1.0
      %v383 = vrcp.pop %v382
      %v384 = vmul.f32 1.0, %v383
      %v386 = vrot.slane %v378, 2
      %v388 = vxor.u32 %v386, 2147483648
      %v389 = vmul.f32 %v388, 1.442695
      %v390 = vpow.pop %v389
      %v391 = vadd.f32 %v390, 1.0
      %v392 = vrcp.pop %v391
      %v393 = vmul.f32 1.0, %v392
      %v394 = vrot.slane %v378, 4
      %v396 = vtanh.pop %v394
      %v397 = vrot.slane %v378, 6
      %v399 = vxor.u32 %v397, 2147483648
      %v400 = vmul.f32 %v399, 1.442695
      %v401 = vpow.pop %v400
      %v402 = vadd.f32 %v401, 1.0
      %v403 = vrcp.pop %v402
      %v404 = vmul.f32 1.0, %v403
      %v405 = vld [vmem:[#allocation3] sm:$0x3]
      %v406 = vmul.f32 %v393, %v405
      %v407 = vmul.f32 %v384, %v396
      %v408 = vadd.f32 %v406, %v407
      %v409 = vtanh.pop %v408
      %v410 = vmul.f32 %v404, %v409
      %411 = vst [vmem:[#allocation3] sm:$0x3] %v408
      %412 = vst [vmem:[#allocation2] sm:$0x3] %v410
      %413 = vst [vmem:[%s141] sm:$0x3] %v410
      %p414 = scmp.lt.s32.totalorder %s13, 3
      %s415 = scalar_select %p414, %s13, 3
      %s416 = smul.addr %s415, 2
      %s417 = scalar_lea.vmem %s2, %s416
      // Predicated region
      $region33: #{im2im_forward.11} parent=27 // pred_check
        %p418 = pneg %p78
      $region34: #{im2im_forward.11} parent=27 // pred_check_branch
        %420 = sbr.rel (%p418) target = $region36
      $region35: #{im2im_forward.11} parent=27 // pred_region
        _
      $region36: #{im2im_forward.11} parent=27 // pred_fallthru
        _
    $region28: #{im2im_forward.11} parent=5 // pred_fallthru
      _
    %p421 = scmp.le.s32.totalorder 2, %s8
    // Predicated region
    $region37: #{im2im_forward.11} parent=5 // pred_check
      %p422 = pneg %p421
    $region38: #{im2im_forward.11} parent=5 // pred_check_branch
      %424 = sbr.rel (%p422) target = $region40
    $region39: #{im2im_forward.11} parent=5 // pred_region
      %s425 = ssub.s32 %s8, 2
      // Predicated region
      $region41: #{im2im_forward.11} parent=39 // pred_check
        %p426 = pneg %p84
      $region42: #{im2im_forward.11} parent=39 // pred_check_branch
        %428 = sbr.rel (%p426) target = $region44
      $region43: #{im2im_forward.11} parent=39 // pred_region
        %p429 = scmp.lt.s32.totalorder %s14, 3
        %s430 = scalar_select %p429, %s14, 3
        %s431 = smul.addr %s430, 2
        %s432 = scalar_lea.vmem %s2, %s431
      $region44: #{im2im_forward.11} parent=39 // pred_fallthru
        _
    $region40: #{im2im_forward.11} parent=5 // pred_fallthru
      _
  $region6: #{im2im_forward.11} parent=0 // loop_footer
    %s12 = sadd.s32 1, %s8
  $region7: #{im2im_forward.11} parent=0 // loop_footer_branch
    %7 = sbr.rel target = $region3
  $region8: #{im2im_forward.11} parent=0 // loop_exit
    _

// kernel: im2im_forward.13
$region0: #{im2im_forward.13}
  #allocation0 [shape = 'u32[]', space=smem, size = 0x4, offset = 0x4, fixed_abs, tag = 'smem constant byte address 0x4 - core index']
  #allocation1 [shape = 'u32[144,128]{1,0:T(1,128)}', space=vmem, size = 0x12000, scoped, tag = 'internal scratch']
  %s0 = inlined_call_operand.vmem [shape: bf16[16,288], index: 0, kind: input, shape index: {}]
  %s1 = inlined_call_operand.vmem [shape: bf16[8,288,256], index: 1, kind: input, shape index: {}]
  %s2 = inlined_call_operand.vmem [shape: f32[16,1], index: 2, kind: input, shape index: {}]
  %s3 = inlined_call_operand.vmem [shape: bf16[8,16,256], index: 3, kind: output, shape index: {}]
  %s4 = sld [smem:[#allocation0]]
  $region45: #{im2im_forward.13} parent=0
    _
  %s6 = ssub.s32 1, %s4
  %s7 = scalar_select 0, %s6, %s4
  loop: start=0, step=1, limit=10
  $region2: #{im2im_forward.13} parent=0 // loop_pre_header
    _
  $region3: #{im2im_forward.13} parent=0 // loop_header
    %s9 = sphi 0, %s13
    %p10 = scmp.ge.s32.totalorder %s9, 10
    %s17 = sphi 0, %s17
    %s19 = sphi 0, %s17
    %s20 = sphi 0, %s19
    %s34 = sphi 0, %s20
    %s40 = sphi 0, %s42
    %s43 = sphi 0, %s40
    %s44 = sphi 0, %s43
    %s60 = sphi 0, %s44
    %s64 = sphi 0, %s64
    %s66 = sphi 0, %s64
    %s67 = sphi 0, %s66
    %s81 = sphi 0, %s67
    %s87 = sphi 0, %s89
    %s90 = sphi 0, %s87
    %s91 = sphi 0, %s90
    %s107 = sphi 0, %s91
  $region4: #{im2im_forward.13} parent=0 // loop_header_branch
    %12 = sbr.rel (%p10) target = $region8
  $region5: #{im2im_forward.13} parent=0 // loop_body
    %s14 = ssub.s32 %s9, 1
    %s15 = ssub.s32 %s9, 2
    %s16 = sadd.s32 %s9, 1
    %s18 = sadd.s32 %s17, 1
    %p21 = scmp.eq.s32.totalorder %s9, 7
    %p22 = scmp.ne.s32.totalorder %s17, %s19
    %p23 = scmp.eq.s32.totalorder %s9, 0
    %p24 = por %p22, %p23
    %p25 = scmp.ne.s32.totalorder %s17, %s19
    %p26 = scmp.eq.s32.totalorder %s14, 7
    %p27 = por %p25, %p26
    %p28 = scmp.ne.s32.totalorder %s19, %s20
    %p29 = scmp.eq.s32.totalorder %s14, 0
    %p30 = por %p28, %p29
    %p31 = scmp.ne.s32.totalorder %s19, %s20
    %p32 = scmp.eq.s32.totalorder %s15, 7
    %p33 = por %p31, %p32
    %p35 = scmp.ne.s32.totalorder %s20, %s34
    %p36 = scmp.eq.s32.totalorder %s15, 0
    %p37 = por %p35, %p36
    %s38 = ssub.s32 %s9, %s16
    %p39 = scmp.eq.s32.totalorder %s38, 0
    %s41 = sadd.s32 %s40, 1
    %s42 = scalar_select %p39, %s40, %s41
    %p45 = pneg %p39
    %p46 = scmp.eq.s32.totalorder %s9, 7
    %p47 = por %p45, %p46
    %p48 = scmp.ne.s32.totalorder %s40, %s43
    %p49 = scmp.eq.s32.totalorder %s9, 0
    %p50 = por %p48, %p49
    %p51 = scmp.ne.s32.totalorder %s40, %s43
    %p52 = scmp.eq.s32.totalorder %s14, 7
    %p53 = por %p51, %p52
    %p54 = scmp.ne.s32.totalorder %s43, %s44
    %p55 = scmp.eq.s32.totalorder %s14, 0
    %p56 = por %p54, %p55
    %p57 = scmp.ne.s32.totalorder %s43, %s44
    %p58 = scmp.eq.s32.totalorder %s15, 7
    %p59 = por %p57, %p58
    %p61 = scmp.ne.s32.totalorder %s44, %s60
    %p62 = scmp.eq.s32.totalorder %s15, 0
    %p63 = por %p61, %p62
    %s65 = sadd.s32 %s64, 1
    %p68 = scmp.eq.s32.totalorder %s9, 7
    %p69 = scmp.ne.s32.totalorder %s64, %s66
    %p70 = scmp.eq.s32.totalorder %s9, 0
    %p71 = por %p69, %p70
    %p72 = scmp.ne.s32.totalorder %s64, %s66
    %p73 = scmp.eq.s32.totalorder %s14, 7
    %p74 = por %p72, %p73
    %p75 = scmp.ne.s32.totalorder %s66, %s67
    %p76 = scmp.eq.s32.totalorder %s14, 0
    %p77 = por %p75, %p76
    %p78 = scmp.ne.s32.totalorder %s66, %s67
    %p79 = scmp.eq.s32.totalorder %s15, 7
    %p80 = por %p78, %p79
    %p82 = scmp.ne.s32.totalorder %s67, %s81
    %p83 = scmp.eq.s32.totalorder %s15, 0
    %p84 = por %p82, %p83
    %s85 = ssub.s32 %s9, %s16
    %p86 = scmp.eq.s32.totalorder %s85, 0
    %s88 = sadd.s32 %s87, 1
    %s89 = scalar_select %p86, %s87, %s88
    %p92 = pneg %p86
    %p93 = scmp.eq.s32.totalorder %s9, 7
    %p94 = por %p92, %p93
    %p95 = scmp.ne.s32.totalorder %s87, %s90
    %p96 = scmp.eq.s32.totalorder %s9, 0
    %p97 = por %p95, %p96
    %p98 = scmp.ne.s32.totalorder %s87, %s90
    %p99 = scmp.eq.s32.totalorder %s14, 7
    %p100 = por %p98, %p99
    %p101 = scmp.ne.s32.totalorder %s90, %s91
    %p102 = scmp.eq.s32.totalorder %s14, 0
    %p103 = por %p101, %p102
    %p104 = scmp.ne.s32.totalorder %s90, %s91
    %p105 = scmp.eq.s32.totalorder %s15, 7
    %p106 = por %p104, %p105
    %p108 = scmp.ne.s32.totalorder %s91, %s107
    %p109 = scmp.eq.s32.totalorder %s15, 0
    %p110 = por %p108, %p109
    %p111 = scmp.le.s32.totalorder 1, %s9
    %p112 = scmp.lt.s32.totalorder %s9, 9
    %p113 = pnand %p111, %p112
    %p114 = pneg %p113
    // Predicated region
    $region9: #{im2im_forward.13} parent=5 // pred_check
      _
    $region10: #{im2im_forward.13} parent=5 // pred_check_branch
      %116 = sbr.rel (%p113) target = $region12
    $region11: #{im2im_forward.13} parent=5 // pred_region
      %s117 = ssub.s32 %s9, 1
      // Predicated region
      $region13: #{im2im_forward.13} parent=11 // pred_check
        %p118 = pneg %p30
      $region14: #{im2im_forward.13} parent=11 // pred_check_branch
        %120 = sbr.rel (%p118) target = $region16
      $region15: #{im2im_forward.13} parent=11 // pred_region
        _
      $region16: #{im2im_forward.13} parent=11 // pred_fallthru
        _
      // Predicated region
      $region17: #{im2im_forward.13} parent=11 // pred_check
        %p121 = pneg %p77
      $region18: #{im2im_forward.13} parent=11 // pred_check_branch
        %123 = sbr.rel (%p121) target = $region20
      $region19: #{im2im_forward.13} parent=11 // pred_region
        _
      $region20: #{im2im_forward.13} parent=11 // pred_fallthru
        _
    $region12: #{im2im_forward.13} parent=5 // pred_fallthru
      _
    %p124 = scmp.lt.s32.totalorder %s9, 8
    // Predicated region
    $region21: #{im2im_forward.13} parent=5 // pred_check
      %p125 = pneg %p124
    $region22: #{im2im_forward.13} parent=5 // pred_check_branch
      %127 = sbr.rel (%p125) target = $region24
    $region23: #{im2im_forward.13} parent=5 // pred_region
      // Predicated region
      $region25: #{im2im_forward.13} parent=23 // pred_check
        %p128 = pneg %p50
      $region26: #{im2im_forward.13} parent=23 // pred_check_branch
        %130 = sbr.rel (%p128) target = $region28
      $region27: #{im2im_forward.13} parent=23 // pred_region
        %p131 = scmp.lt.s32.totalorder %s9, 7
        %s132 = scalar_select %p131, %s9, 7
        %s133 = smul.addr %s132, 72
        %s134 = smul.addr %s133, 4
        %s135 = scalar_lea.vmem %s1, %s134
      $region28: #{im2im_forward.13} parent=23 // pred_fallthru
        _
    $region24: #{im2im_forward.13} parent=5 // pred_fallthru
      _
    %p136 = scmp.le.s32.totalorder 1, %s9
    %p137 = scmp.lt.s32.totalorder %s9, 9
    %p138 = pnand %p136, %p137
    %p139 = pneg %p138
    // Predicated region
    $region29: #{im2im_forward.13} parent=5 // pred_check
      _
    $region30: #{im2im_forward.13} parent=5 // pred_check_branch
      %141 = sbr.rel (%p138) target = $region32
    $region31: #{im2im_forward.13} parent=5 // pred_region
      %s142 = ssub.s32 %s9, 1
      %p143 = pneg %p30
      %p144 = pneg %p27
      %p145 = scmp.lt.s32.totalorder %s14, 7
      %s146 = scalar_select %p145, %s14, 7
      %s147 = smul.addr %s146, 72
      %s148 = smul.addr %s147, 4
      %s149 = scalar_lea.vmem %s1, %s148
      %p150 = pneg %p56
      %p151 = pneg %p53
      %p152 = pneg %p77
      %p153 = pneg %p74
      %p154 = pneg %p103
      %p155 = pneg %p100
      %p156 = scmp.lt.s32.totalorder %s14, 7
      %s157 = scalar_select %p156, %s14, 7
      %s158 = smul.addr %s157, 4
      %s159 = smul.addr %s158, 4
      %s160 = scalar_lea.vmem %s3, %s159
      %p161 = scmp.lt.s32.totalorder %s14, 7
      %s162 = scalar_select %p161, %s14, 7
      %s163 = smul.addr %s162, 72
      %s164 = smul.addr %s163, 4
      %s165 = scalar_lea.vmem %s1, %s164
      %p166 = scmp.lt.s32.totalorder %s14, 7
      %s167 = scalar_select %p166, %s14, 7
      %s168 = smul.addr %s167, 4
      %s169 = smul.addr %s168, 4
      %s170 = scalar_lea.vmem %s3, %s169
      %v172 = vld [vmem:[%s0] sm:$0xff]
      %v173 = vld [vmem:[%s0 + $0x8] sm:$0xf]
      %v174 = vld [vmem:[%s0 + $0xc] sm:$0xff]
      %v175 = vld [vmem:[%s0 + $0x14] sm:$0xf]
      %v176 = vld [vmem:[%s165] sm:$0xff]
      %v177 = vld [vmem:[%s165 + $0x8] sm:$0xff]
      %v178 = vld [vmem:[%s165 + $0x10] sm:$0xff]
      %v179 = vld [vmem:[%s165 + $0x18] sm:$0xff]
      %v180 = vld [vmem:[%s165 + $0x20] sm:$0xff]
      %v181 = vld [vmem:[%s165 + $0x28] sm:$0xff]
      %v182 = vld [vmem:[%s165 + $0x30] sm:$0xff]
      %v183 = vld [vmem:[%s165 + $0x38] sm:$0xff]
      %v184 = vld [vmem:[%s165 + $0x40] sm:$0xff]
      %v185 = vld [vmem:[%s165 + $0x48] sm:$0xff]
      %v186 = vld [vmem:[%s165 + $0x50] sm:$0xff]
      %v187 = vld [vmem:[%s165 + $0x58] sm:$0xff]
      %v188 = vld [vmem:[%s165 + $0x60] sm:$0xff]
      %v189 = vld [vmem:[%s165 + $0x68] sm:$0xff]
      %v190 = vld [vmem:[%s165 + $0x70] sm:$0xff]
      %v191 = vld [vmem:[%s165 + $0x78] sm:$0xff]
      %v192 = vld [vmem:[%s165 + $0x80] sm:$0xff]
      %v193 = vld [vmem:[%s165 + $0x88] sm:$0xff]
      %v194 = vld [vmem:[%s165 + $0x90] sm:$0xff]
      %v195 = vld [vmem:[%s165 + $0x98] sm:$0xff]
      %v196 = vld [vmem:[%s165 + $0xa0] sm:$0xff]
      %v197 = vld [vmem:[%s165 + $0xa8] sm:$0xff]
      %v198 = vld [vmem:[%s165 + $0xb0] sm:$0xff]
      %v199 = vld [vmem:[%s165 + $0xb8] sm:$0xff]
      %v200 = vld [vmem:[%s165 + $0xc0] sm:$0xff]
      %v201 = vld [vmem:[%s165 + $0xc8] sm:$0xff]
      %v202 = vld [vmem:[%s165 + $0xd0] sm:$0xff]
      %v203 = vld [vmem:[%s165 + $0xd8] sm:$0xff]
      %v204 = vld [vmem:[%s165 + $0xe0] sm:$0xff]
      %v205 = vld [vmem:[%s165 + $0xe8] sm:$0xff]
      %v206 = vld [vmem:[%s165 + $0xf0] sm:$0xff]
      %v207 = vld [vmem:[%s165 + $0xf8] sm:$0xff]
      %v208 = vld [vmem:[%s165 + $0x100] sm:$0xff]
      %v209 = vld [vmem:[%s165 + $0x108] sm:$0xff]
      %v210 = vld [vmem:[%s165 + $0x110] sm:$0xff]
      %v211 = vld [vmem:[%s165 + $0x118] sm:$0xff]
      %v212 = vld [vmem:[%s2] sm:$0xff]
      %v213 = vld [vmem:[%s2 + $0x8] sm:$0xff]
      %215 = vset.pattern.permute.xlu0 0
      %216 = vperm.xlu0 %215, %v212
      %v217 = vpop.permute.xlu0 %216
      %220 = vset.pattern.permute.xlu0 0
      %221 = vperm.xlu0 %220, %v213
      %v222 = vpop.permute.xlu0 %221
      %v228 = vunpack.c.l.b16 %v172
      %v229 = vunpack.c.h.b16 %v172
      %v230 = vunpack.c.l.b16 %v173
      %v231 = vunpack.c.l.b16 %v174
      %v232 = vunpack.c.h.b16 %v174
      %v233 = vunpack.c.l.b16 %v175
      %v234 = vpack.c.b16 %v231, %v228
      %v235 = vpack.c.b16 %v232, %v229
      %v236 = vpack.c.b16 %v233, %v230
      %v275 = vunpack.c.l.b16 %v176
      %v276 = vunpack.c.h.b16 %v176
      %v277 = vunpack.c.l.b16 %v177
      %v278 = vunpack.c.h.b16 %v177
      %v279 = vunpack.c.l.b16 %v178
      %v280 = vunpack.c.h.b16 %v178
      %v281 = vunpack.c.l.b16 %v179
      %v282 = vunpack.c.h.b16 %v179
      %v283 = vunpack.c.l.b16 %v180
      %v284 = vunpack.c.h.b16 %v180
      %v285 = vunpack.c.l.b16 %v181
      %v286 = vunpack.c.h.b16 %v181
      %v287 = vunpack.c.l.b16 %v182
      %v288 = vunpack.c.h.b16 %v182
      %v289 = vunpack.c.l.b16 %v183
      %v290 = vunpack.c.h.b16 %v183
      %v291 = vunpack.c.l.b16 %v184
      %v292 = vunpack.c.h.b16 %v184
      %v293 = vunpack.c.l.b16 %v185
      %v294 = vunpack.c.h.b16 %v185
      %v295 = vunpack.c.l.b16 %v186
      %v296 = vunpack.c.h.b16 %v186
      %v297 = vunpack.c.l.b16 %v187
      %v298 = vunpack.c.h.b16 %v187
      %v299 = vunpack.c.l.b16 %v188
      %v300 = vunpack.c.h.b16 %v188
      %v301 = vunpack.c.l.b16 %v189
      %v302 = vunpack.c.h.b16 %v189
      %v303 = vunpack.c.l.b16 %v190
      %v304 = vunpack.c.h.b16 %v190
      %v305 = vunpack.c.l.b16 %v191
      %v306 = vunpack.c.h.b16 %v191
      %v307 = vunpack.c.l.b16 %v192
      %v308 = vunpack.c.h.b16 %v192
      %v309 = vunpack.c.l.b16 %v193
      %v310 = vunpack.c.h.b16 %v193
      %v311 = vunpack.c.l.b16 %v194
      %v312 = vunpack.c.h.b16 %v194
      %v313 = vunpack.c.l.b16 %v195
      %v314 = vunpack.c.h.b16 %v195
      %v315 = vunpack.c.l.b16 %v196
      %v316 = vunpack.c.h.b16 %v196
      %v317 = vunpack.c.l.b16 %v197
      %v318 = vunpack.c.h.b16 %v197
      %v319 = vunpack.c.l.b16 %v198
      %v320 = vunpack.c.h.b16 %v198
      %v321 = vunpack.c.l.b16 %v199
      %v322 = vunpack.c.h.b16 %v199
      %v323 = vunpack.c.l.b16 %v200
      %v324 = vunpack.c.h.b16 %v200
      %v325 = vunpack.c.l.b16 %v201
      %v326 = vunpack.c.h.b16 %v201
      %v327 = vunpack.c.l.b16 %v202
      %v328 = vunpack.c.h.b16 %v202
      %v329 = vunpack.c.l.b16 %v203
      %v330 = vunpack.c.h.b16 %v203
      %v331 = vunpack.c.l.b16 %v204
      %v332 = vunpack.c.h.b16 %v204
      %v333 = vunpack.c.l.b16 %v205
      %v334 = vunpack.c.h.b16 %v205
      %v335 = vunpack.c.l.b16 %v206
      %v336 = vunpack.c.h.b16 %v206
      %v337 = vunpack.c.l.b16 %v207
      %v338 = vunpack.c.h.b16 %v207
      %v339 = vunpack.c.l.b16 %v208
      %v340 = vunpack.c.h.b16 %v208
      %v341 = vunpack.c.l.b16 %v209
      %v342 = vunpack.c.h.b16 %v209
      %v343 = vunpack.c.l.b16 %v210
      %v344 = vunpack.c.h.b16 %v210
      %v345 = vunpack.c.l.b16 %v211
      %v346 = vunpack.c.h.b16 %v211
      %v347 = vpack.c.b16 %v277, %v275
      %v348 = vpack.c.b16 %v278, %v276
      %v349 = vpack.c.b16 %v281, %v279
      %v350 = vpack.c.b16 %v282, %v280
      %v351 = vpack.c.b16 %v285, %v283
      %v352 = vpack.c.b16 %v286, %v284
      %v353 = vpack.c.b16 %v289, %v287
      %v354 = vpack.c.b16 %v290, %v288
      %v355 = vpack.c.b16 %v293, %v291
      %v356 = vpack.c.b16 %v294, %v292
      %v357 = vpack.c.b16 %v297, %v295
      %v358 = vpack.c.b16 %v298, %v296
      %v359 = vpack.c.b16 %v301, %v299
      %v360 = vpack.c.b16 %v302, %v300
      %v361 = vpack.c.b16 %v305, %v303
      %v362 = vpack.c.b16 %v306, %v304
      %v363 = vpack.c.b16 %v309, %v307
      %v364 = vpack.c.b16 %v310, %v308
      %v365 = vpack.c.b16 %v313, %v311
      %v366 = vpack.c.b16 %v314, %v312
      %v367 = vpack.c.b16 %v317, %v315
      %v368 = vpack.c.b16 %v318, %v316
      %v369 = vpack.c.b16 %v321, %v319
      %v370 = vpack.c.b16 %v322, %v320
      %v371 = vpack.c.b16 %v325, %v323
      %v372 = vpack.c.b16 %v326, %v324
      %v373 = vpack.c.b16 %v329, %v327
      %v374 = vpack.c.b16 %v330, %v328
      %v375 = vpack.c.b16 %v333, %v331
      %v376 = vpack.c.b16 %v334, %v332
      %v377 = vpack.c.b16 %v337, %v335
      %v378 = vpack.c.b16 %v338, %v336
      %v379 = vpack.c.b16 %v341, %v339
      %v380 = vpack.c.b16 %v342, %v340
      %v381 = vpack.c.b16 %v345, %v343
      %v382 = vpack.c.b16 %v346, %v344
      %vm419 = vcmask 261120
      %v421 = vsel %vm419, %v236, 0
      %423 = vmatprep.subr.bf16.mxu0 %v348
      %424 = vmatpush1.bf16.msra.mxu0 %v347
      %425 = vmatprep.subr.bf16.mxu0 %v350
      %426 = vmatpush1.bf16.msra.mxu0 %v349
      %427 = vmatprep.subr.bf16.mxu0 %v352
      %428 = vmatpush1.bf16.msra.mxu0 %v351
      %429 = vmatprep.subr.bf16.mxu0 %v354
      %430 = vmatpush1.bf16.msra.mxu0 %v353
      %431 = vmatprep.subr.bf16.mxu0 %v356
      %432 = vmatpush1.bf16.msra.mxu0 %v355
      %433 = vmatprep.subr.bf16.mxu0 %v358
      %434 = vmatpush1.bf16.msra.mxu0 %v357
      %435 = vmatprep.subr.bf16.mxu0 %v360
      %436 = vmatpush1.bf16.msra.mxu0 %v359
      %437 = vmatprep.subr.bf16.mxu0 %v362
      %438 = vmatpush1.bf16.msra.mxu0 %v361
      %439 = vmatprep.subr.bf16.mxu0 %v364
      %440 = vmatpush1.bf16.msra.mxu0 %v363
      %441 = vmatprep.subr.bf16.mxu0 %v366
      %442 = vmatpush1.bf16.msra.mxu0 %v365
      %443 = vmatprep.subr.bf16.mxu0 %v368
      %444 = vmatpush1.bf16.msra.mxu0 %v367
      %445 = vmatprep.subr.bf16.mxu0 %v370
      %446 = vmatpush1.bf16.msra.mxu0 %v369
      %447 = vmatprep.subr.bf16.mxu0 %v372
      %448 = vmatpush1.bf16.msra.mxu0 %v371
      %449 = vmatprep.subr.bf16.mxu0 %v374
      %450 = vmatpush1.bf16.msra.mxu0 %v373
      %451 = vmatprep.subr.bf16.mxu0 %v376
      %452 = vmatpush1.bf16.msra.mxu0 %v375
      %453 = vmatprep.subr.bf16.mxu0 %v378
      %454 = vmatpush1.bf16.msra.mxu0 %v377
      %455 = vmatprep.mubr.bf16.mxu0 %v235
      %456 = vmatmul.mubr.bf16.gmra.mrb[0].mxu0 %v234
      %v457 = vpop.f32.mrb[0].mxu0
      %v458 = vadd.f32 %v217, %v457
      %v459 = vpop.f32.mrb[0].mxu0
      %v460 = vadd.f32 %v217, %v459
      %v461 = vpop.f32.mrb[0].mxu0
      %v462 = vadd.f32 %v222, %v461
      %v463 = vpop.f32.mrb[0].mxu0
      %v464 = vadd.f32 %v222, %v463
      %465 = vdwg.mxu0
      %466 = vmatprep.subr.bf16.mxu0 %v380
      %467 = vmatpush1.bf16.msra.mxu0 %v379
      %468 = vmatprep.subr.bf16.mxu0 %v382
      %469 = vmatpush1.bf16.msra.mxu0 %v381
      %470 = vmatprep.subr.bf16.mxu0 0
      %471 = vmatpush1.bf16.msra.mxu0 0
      %472 = vmatprep.subr.bf16.mxu0 0
      %473 = vmatpush1.bf16.msra.mxu0 0
      %474 = vmatprep.subr.bf16.mxu0 0
      %475 = vmatpush1.bf16.msra.mxu0 0
      %476 = vmatprep.subr.bf16.mxu0 0
      %477 = vmatpush1.bf16.msra.mxu0 0
      %478 = vmatprep.subr.bf16.mxu0 0
      %479 = vmatpush1.bf16.msra.mxu0 0
      %480 = vmatprep.subr.bf16.mxu0 0
      %481 = vmatpush1.bf16.msra.mxu0 0
      %482 = vmatprep.subr.bf16.mxu0 0
      %483 = vmatpush1.bf16.msra.mxu0 0
      %484 = vmatprep.subr.bf16.mxu0 0
      %485 = vmatpush1.bf16.msra.mxu0 0
      %486 = vmatprep.subr.bf16.mxu0 0
      %487 = vmatpush1.bf16.msra.mxu0 0
      %488 = vmatprep.subr.bf16.mxu0 0
      %489 = vmatpush1.bf16.msra.mxu0 0
      %490 = vmatprep.subr.bf16.mxu0 0
      %491 = vmatpush1.bf16.msra.mxu0 0
      %492 = vmatprep.subr.bf16.mxu0 0
      %493 = vmatpush1.bf16.msra.mxu0 0
      %494 = vmatprep.subr.bf16.mxu0 0
      %495 = vmatpush1.bf16.msra.mxu0 0
      %496 = vmatprep.subr.bf16.mxu0 0
      %497 = vmatpush1.bf16.msra.mxu0 0
      %498 = vmatprep.mubr.bf16.mxu0 0
      %499 = vmatmul.mubr.bf16.gmra.mrb[0].mxu0 %v421
      %v500 = vpop.f32.mrb[0].mxu0
      %v501 = vadd.f32 %v458, %v500
      %v502 = vpop.f32.mrb[0].mxu0
      %v503 = vadd.f32 %v460, %v502
      %v504 = vpop.f32.mrb[0].mxu0
      %v505 = vadd.f32 %v462, %v504
      %v506 = vpop.f32.mrb[0].mxu0
      %v507 = vadd.f32 %v464, %v506
      %508 = vdwg.mxu0
      %v509 = vmax.f32 %v501, 0.0
      %v510 = vmax.f32 %v503, 0.0
      %v511 = vmax.f32 %v505, 0.0
      %v512 = vmax.f32 %v507, 0.0
      %v513 = vpack.c.bf16 %v511, %v509
      %v514 = vpack.c.bf16 %v512, %v510
      %v517 = vunpack.c.l.b16 %v513
      %v518 = vunpack.c.l.b16 %v514
      %v519 = vunpack.c.h.b16 %v513
      %v520 = vunpack.c.h.b16 %v514
      %v521 = vpack.c.b16 %v518, %v517
      %v522 = vpack.c.b16 %v520, %v519
      %525 = vst [vmem:[%s170] sm:$0xff] %v521
      %526 = vst [vmem:[%s170 + $0x8] sm:$0xff] %v522
      %p527 = scmp.lt.s32.totalorder %s14, 7
      %s528 = scalar_select %p527, %s14, 7
      %s529 = smul.addr %s528, 4
      %s530 = smul.addr %s529, 4
      %s531 = scalar_lea.vmem %s3, %s530
      // Predicated region
      $region33: #{im2im_forward.13} parent=31 // pred_check
        %p532 = pneg %p100
      $region34: #{im2im_forward.13} parent=31 // pred_check_branch
        %534 = sbr.rel (%p532) target = $region36
      $region35: #{im2im_forward.13} parent=31 // pred_region
        _
      $region36: #{im2im_forward.13} parent=31 // pred_fallthru
        _
    $region32: #{im2im_forward.13} parent=5 // pred_fallthru
      _
    %p535 = scmp.le.s32.totalorder 2, %s9
    // Predicated region
    $region37: #{im2im_forward.13} parent=5 // pred_check
      %p536 = pneg %p535
    $region38: #{im2im_forward.13} parent=5 // pred_check_branch
      %538 = sbr.rel (%p536) target = $region40
    $region39: #{im2im_forward.13} parent=5 // pred_region
      %s539 = ssub.s32 %s9, 2
      // Predicated region
      $region41: #{im2im_forward.13} parent=39 // pred_check
        %p540 = pneg %p106
      $region42: #{im2im_forward.13} parent=39 // pred_check_branch
        %542 = sbr.rel (%p540) target = $region44
      $region43: #{im2im_forward.13} parent=39 // pred_region
        %p543 = scmp.lt.s32.totalorder %s15, 7
        %s544 = scalar_select %p543, %s15, 7
        %s545 = smul.addr %s544, 4
        %s546 = smul.addr %s545, 4
        %s547 = scalar_lea.vmem %s3, %s546
      $region44: #{im2im_forward.13} parent=39 // pred_fallthru
        _
    $region40: #{im2im_forward.13} parent=5 // pred_fallthru
      _
  $region6: #{im2im_forward.13} parent=0 // loop_footer
    %s13 = sadd.s32 1, %s9
  $region7: #{im2im_forward.13} parent=0 // loop_footer_branch
    %8 = sbr.rel target = $region3
  $region8: #{im2im_forward.13} parent=0 // loop_exit
    _

// kernel: im2im_forward.14
$region0: #{im2im_forward.14}
  #allocation0 [shape = 'u32[]', space=smem, size = 0x4, offset = 0x4, fixed_abs, tag = 'smem constant byte address 0x4 - core index']
  #allocation1 [shape = 'u32[144,128]{1,0:T(1,128)}', space=vmem, size = 0x12000, scoped, tag = 'internal scratch']
  %s0 = inlined_call_operand.vmem [shape: bf16[8,144], index: 0, kind: input, shape index: {}]
  %s1 = inlined_call_operand.vmem [shape: bf16[8,144,1024], index: 1, kind: input, shape index: {}]
  %s2 = inlined_call_operand.vmem [shape: f32[8,1], index: 2, kind: input, shape index: {}]
  %s3 = inlined_call_operand.vmem [shape: bf16[8,8,1024], index: 3, kind: output, shape index: {}]
  %s4 = sld [smem:[#allocation0]]
  $region45: #{im2im_forward.14} parent=0
    _
  %s6 = ssub.s32 1, %s4
  %s7 = scalar_select 0, %s6, %s4
  loop: start=0, step=1, limit=10
  $region2: #{im2im_forward.14} parent=0 // loop_pre_header
    _
  $region3: #{im2im_forward.14} parent=0 // loop_header
    %s9 = sphi 0, %s13
    %p10 = scmp.ge.s32.totalorder %s9, 10
    %s17 = sphi 0, %s17
    %s19 = sphi 0, %s17
    %s20 = sphi 0, %s19
    %s34 = sphi 0, %s20
    %s40 = sphi 0, %s42
    %s43 = sphi 0, %s40
    %s44 = sphi 0, %s43
    %s60 = sphi 0, %s44
    %s64 = sphi 0, %s64
    %s66 = sphi 0, %s64
    %s67 = sphi 0, %s66
    %s81 = sphi 0, %s67
    %s87 = sphi 0, %s89
    %s90 = sphi 0, %s87
    %s91 = sphi 0, %s90
    %s107 = sphi 0, %s91
  $region4: #{im2im_forward.14} parent=0 // loop_header_branch
    %12 = sbr.rel (%p10) target = $region8
  $region5: #{im2im_forward.14} parent=0 // loop_body
    %s14 = ssub.s32 %s9, 1
    %s15 = ssub.s32 %s9, 2
    %s16 = sadd.s32 %s9, 1
    %s18 = sadd.s32 %s17, 1
    %p21 = scmp.eq.s32.totalorder %s9, 7
    %p22 = scmp.ne.s32.totalorder %s17, %s19
    %p23 = scmp.eq.s32.totalorder %s9, 0
    %p24 = por %p22, %p23
    %p25 = scmp.ne.s32.totalorder %s17, %s19
    %p26 = scmp.eq.s32.totalorder %s14, 7
    %p27 = por %p25, %p26
    %p28 = scmp.ne.s32.totalorder %s19, %s20
    %p29 = scmp.eq.s32.totalorder %s14, 0
    %p30 = por %p28, %p29
    %p31 = scmp.ne.s32.totalorder %s19, %s20
    %p32 = scmp.eq.s32.totalorder %s15, 7
    %p33 = por %p31, %p32
    %p35 = scmp.ne.s32.totalorder %s20, %s34
    %p36 = scmp.eq.s32.totalorder %s15, 0
    %p37 = por %p35, %p36
    %s38 = ssub.s32 %s9, %s16
    %p39 = scmp.eq.s32.totalorder %s38, 0
    %s41 = sadd.s32 %s40, 1
    %s42 = scalar_select %p39, %s40, %s41
    %p45 = pneg %p39
    %p46 = scmp.eq.s32.totalorder %s9, 7
    %p47 = por %p45, %p46
    %p48 = scmp.ne.s32.totalorder %s40, %s43
    %p49 = scmp.eq.s32.totalorder %s9, 0
    %p50 = por %p48, %p49
    %p51 = scmp.ne.s32.totalorder %s40, %s43
    %p52 = scmp.eq.s32.totalorder %s14, 7
    %p53 = por %p51, %p52
    %p54 = scmp.ne.s32.totalorder %s43, %s44
    %p55 = scmp.eq.s32.totalorder %s14, 0
    %p56 = por %p54, %p55
    %p57 = scmp.ne.s32.totalorder %s43, %s44
    %p58 = scmp.eq.s32.totalorder %s15, 7
    %p59 = por %p57, %p58
    %p61 = scmp.ne.s32.totalorder %s44, %s60
    %p62 = scmp.eq.s32.totalorder %s15, 0
    %p63 = por %p61, %p62
    %s65 = sadd.s32 %s64, 1
    %p68 = scmp.eq.s32.totalorder %s9, 7
    %p69 = scmp.ne.s32.totalorder %s64, %s66
    %p70 = scmp.eq.s32.totalorder %s9, 0
    %p71 = por %p69, %p70
    %p72 = scmp.ne.s32.totalorder %s64, %s66
    %p73 = scmp.eq.s32.totalorder %s14, 7
    %p74 = por %p72, %p73
    %p75 = scmp.ne.s32.totalorder %s66, %s67
    %p76 = scmp.eq.s32.totalorder %s14, 0
    %p77 = por %p75, %p76
    %p78 = scmp.ne.s32.totalorder %s66, %s67
    %p79 = scmp.eq.s32.totalorder %s15, 7
    %p80 = por %p78, %p79
    %p82 = scmp.ne.s32.totalorder %s67, %s81
    %p83 = scmp.eq.s32.totalorder %s15, 0
    %p84 = por %p82, %p83
    %s85 = ssub.s32 %s9, %s16
    %p86 = scmp.eq.s32.totalorder %s85, 0
    %s88 = sadd.s32 %s87, 1
    %s89 = scalar_select %p86, %s87, %s88
    %p92 = pneg %p86
    %p93 = scmp.eq.s32.totalorder %s9, 7
    %p94 = por %p92, %p93
    %p95 = scmp.ne.s32.totalorder %s87, %s90
    %p96 = scmp.eq.s32.totalorder %s9, 0
    %p97 = por %p95, %p96
    %p98 = scmp.ne.s32.totalorder %s87, %s90
    %p99 = scmp.eq.s32.totalorder %s14, 7
    %p100 = por %p98, %p99
    %p101 = scmp.ne.s32.totalorder %s90, %s91
    %p102 = scmp.eq.s32.totalorder %s14, 0
    %p103 = por %p101, %p102
    %p104 = scmp.ne.s32.totalorder %s90, %s91
    %p105 = scmp.eq.s32.totalorder %s15, 7
    %p106 = por %p104, %p105
    %p108 = scmp.ne.s32.totalorder %s91, %s107
    %p109 = scmp.eq.s32.totalorder %s15, 0
    %p110 = por %p108, %p109
    %p111 = scmp.le.s32.totalorder 1, %s9
    %p112 = scmp.lt.s32.totalorder %s9, 9
    %p113 = pnand %p111, %p112
    %p114 = pneg %p113
    // Predicated region
    $region9: #{im2im_forward.14} parent=5 // pred_check
      _
    $region10: #{im2im_forward.14} parent=5 // pred_check_branch
      %116 = sbr.rel (%p113) target = $region12
    $region11: #{im2im_forward.14} parent=5 // pred_region
      %s117 = ssub.s32 %s9, 1
      // Predicated region
      $region13: #{im2im_forward.14} parent=11 // pred_check
        %p118 = pneg %p30
      $region14: #{im2im_forward.14} parent=11 // pred_check_branch
        %120 = sbr.rel (%p118) target = $region16
      $region15: #{im2im_forward.14} parent=11 // pred_region
        _
      $region16: #{im2im_forward.14} parent=11 // pred_fallthru
        _
      // Predicated region
      $region17: #{im2im_forward.14} parent=11 // pred_check
        %p121 = pneg %p77
      $region18: #{im2im_forward.14} parent=11 // pred_check_branch
        %123 = sbr.rel (%p121) target = $region20
      $region19: #{im2im_forward.14} parent=11 // pred_region
        _
      $region20: #{im2im_forward.14} parent=11 // pred_fallthru
        _
    $region12: #{im2im_forward.14} parent=5 // pred_fallthru
      _
    %p124 = scmp.lt.s32.totalorder %s9, 8
    // Predicated region
    $region21: #{im2im_forward.14} parent=5 // pred_check
      %p125 = pneg %p124
    $region22: #{im2im_forward.14} parent=5 // pred_check_branch
      %127 = sbr.rel (%p125) target = $region24
    $region23: #{im2im_forward.14} parent=5 // pred_region
      // Predicated region
      $region25: #{im2im_forward.14} parent=23 // pred_check
        %p128 = pneg %p50
      $region26: #{im2im_forward.14} parent=23 // pred_check_branch
        %130 = sbr.rel (%p128) target = $region28
      $region27: #{im2im_forward.14} parent=23 // pred_region
        %p131 = scmp.lt.s32.totalorder %s9, 7
        %s132 = scalar_select %p131, %s9, 7
        %s133 = smul.addr %s132, 144
        %s134 = smul.addr %s133, 4
        %s135 = scalar_lea.vmem %s1, %s134
      $region28: #{im2im_forward.14} parent=23 // pred_fallthru
        _
    $region24: #{im2im_forward.14} parent=5 // pred_fallthru
      _
    %p136 = scmp.le.s32.totalorder 1, %s9
    %p137 = scmp.lt.s32.totalorder %s9, 9
    %p138 = pnand %p136, %p137
    %p139 = pneg %p138
    // Predicated region
    $region29: #{im2im_forward.14} parent=5 // pred_check
      _
    $region30: #{im2im_forward.14} parent=5 // pred_check_branch
      %141 = sbr.rel (%p138) target = $region32
    $region31: #{im2im_forward.14} parent=5 // pred_region
      %s142 = ssub.s32 %s9, 1
      %p143 = pneg %p30
      %p144 = pneg %p27
      %p145 = scmp.lt.s32.totalorder %s14, 7
      %s146 = scalar_select %p145, %s14, 7
      %s147 = smul.addr %s146, 144
      %s148 = smul.addr %s147, 4
      %s149 = scalar_lea.vmem %s1, %s148
      %p150 = pneg %p56
      %p151 = pneg %p53
      %p152 = pneg %p77
      %p153 = pneg %p74
      %p154 = pneg %p103
      %p155 = pneg %p100
      %p156 = scmp.lt.s32.totalorder %s14, 7
      %s157 = scalar_select %p156, %s14, 7
      %s158 = smul.addr %s157, 8
      %s159 = smul.addr %s158, 4
      %s160 = scalar_lea.vmem %s3, %s159
      %p161 = scmp.lt.s32.totalorder %s14, 7
      %s162 = scalar_select %p161, %s14, 7
      %s163 = smul.addr %s162, 144
      %s164 = smul.addr %s163, 4
      %s165 = scalar_lea.vmem %s1, %s164
      %p166 = scmp.lt.s32.totalorder %s14, 7
      %s167 = scalar_select %p166, %s14, 7
      %s168 = smul.addr %s167, 8
      %s169 = smul.addr %s168, 4
      %s170 = scalar_lea.vmem %s3, %s169
      %v172 = vld [vmem:[%s0] sm:$0xff]
      %v173 = vld [vmem:[%s165] sm:$0xff]
      %v174 = vld [vmem:[%s165 + $0x8] sm:$0xff]
      %v175 = vld [vmem:[%s165 + $0x10] sm:$0xff]
      %v176 = vld [vmem:[%s165 + $0x18] sm:$0xff]
      %v177 = vld [vmem:[%s165 + $0x20] sm:$0xff]
      %v178 = vld [vmem:[%s165 + $0x28] sm:$0xff]
      %v179 = vld [vmem:[%s165 + $0x30] sm:$0xff]
      %v180 = vld [vmem:[%s165 + $0x38] sm:$0xff]
      %v181 = vld [vmem:[%s165 + $0x40] sm:$0xff]
      %v182 = vld [vmem:[%s165 + $0x48] sm:$0xff]
      %v183 = vld [vmem:[%s165 + $0x50] sm:$0xff]
      %v184 = vld [vmem:[%s165 + $0x58] sm:$0xff]
      %v185 = vld [vmem:[%s165 + $0x60] sm:$0xff]
      %v186 = vld [vmem:[%s165 + $0x68] sm:$0xff]
      %v187 = vld [vmem:[%s165 + $0x70] sm:$0xff]
      %v188 = vld [vmem:[%s165 + $0x78] sm:$0xff]
      %v189 = vld [vmem:[%s165 + $0x80] sm:$0xff]
      %v190 = vld [vmem:[%s165 + $0x88] sm:$0xff]
      %v191 = vld [vmem:[%s165 + $0x90] sm:$0xff]
      %v192 = vld [vmem:[%s165 + $0x98] sm:$0xff]
      %v193 = vld [vmem:[%s165 + $0xa0] sm:$0xff]
      %v194 = vld [vmem:[%s165 + $0xa8] sm:$0xff]
      %v195 = vld [vmem:[%s165 + $0xb0] sm:$0xff]
      %v196 = vld [vmem:[%s165 + $0xb8] sm:$0xff]
      %v197 = vld [vmem:[%s165 + $0xc0] sm:$0xff]
      %v198 = vld [vmem:[%s165 + $0xc8] sm:$0xff]
      %v199 = vld [vmem:[%s165 + $0xd0] sm:$0xff]
      %v200 = vld [vmem:[%s165 + $0xd8] sm:$0xff]
      %v201 = vld [vmem:[%s165 + $0xe0] sm:$0xff]
      %v202 = vld [vmem:[%s165 + $0xe8] sm:$0xff]
      %v203 = vld [vmem:[%s165 + $0xf0] sm:$0xff]
      %v204 = vld [vmem:[%s165 + $0xf8] sm:$0xff]
      %v205 = vld [vmem:[%s165 + $0x100] sm:$0xff]
      %v206 = vld [vmem:[%s165 + $0x108] sm:$0xff]
      %v207 = vld [vmem:[%s165 + $0x110] sm:$0xff]
      %v208 = vld [vmem:[%s165 + $0x118] sm:$0xff]
      %v209 = vld [vmem:[%s165 + $0x120] sm:$0xff]
      %v210 = vld [vmem:[%s165 + $0x128] sm:$0xff]
      %v211 = vld [vmem:[%s165 + $0x130] sm:$0xff]
      %v212 = vld [vmem:[%s165 + $0x138] sm:$0xff]
      %v213 = vld [vmem:[%s165 + $0x140] sm:$0xff]
      %v214 = vld [vmem:[%s165 + $0x148] sm:$0xff]
      %v215 = vld [vmem:[%s165 + $0x150] sm:$0xff]
      %v216 = vld [vmem:[%s165 + $0x158] sm:$0xff]
      %v217 = vld [vmem:[%s165 + $0x160] sm:$0xff]
      %v218 = vld [vmem:[%s165 + $0x168] sm:$0xff]
      %v219 = vld [vmem:[%s165 + $0x170] sm:$0xff]
      %v220 = vld [vmem:[%s165 + $0x178] sm:$0xff]
      %v221 = vld [vmem:[%s165 + $0x180] sm:$0xff]
      %v222 = vld [vmem:[%s165 + $0x188] sm:$0xff]
      %v223 = vld [vmem:[%s165 + $0x190] sm:$0xff]
      %v224 = vld [vmem:[%s165 + $0x198] sm:$0xff]
      %v225 = vld [vmem:[%s165 + $0x1a0] sm:$0xff]
      %v226 = vld [vmem:[%s165 + $0x1a8] sm:$0xff]
      %v227 = vld [vmem:[%s165 + $0x1b0] sm:$0xff]
      %v228 = vld [vmem:[%s165 + $0x1b8] sm:$0xff]
      %v229 = vld [vmem:[%s165 + $0x1c0] sm:$0xff]
      %v230 = vld [vmem:[%s165 + $0x1c8] sm:$0xff]
      %v231 = vld [vmem:[%s165 + $0x1d0] sm:$0xff]
      %v232 = vld [vmem:[%s165 + $0x1d8] sm:$0xff]
      %v233 = vld [vmem:[%s165 + $0x1e0] sm:$0xff]
      %v234 = vld [vmem:[%s165 + $0x1e8] sm:$0xff]
      %v235 = vld [vmem:[%s165 + $0x1f0] sm:$0xff]
      %v236 = vld [vmem:[%s165 + $0x1f8] sm:$0xff]
      %v237 = vld [vmem:[%s165 + $0x200] sm:$0xff]
      %v238 = vld [vmem:[%s165 + $0x208] sm:$0xff]
      %v239 = vld [vmem:[%s165 + $0x210] sm:$0xff]
      %v240 = vld [vmem:[%s165 + $0x218] sm:$0xff]
      %v241 = vld [vmem:[%s165 + $0x220] sm:$0xff]
      %v242 = vld [vmem:[%s165 + $0x228] sm:$0xff]
      %v243 = vld [vmem:[%s165 + $0x230] sm:$0xff]
      %v244 = vld [vmem:[%s165 + $0x238] sm:$0xff]
      %v245 = vld [vmem:[%s2] sm:$0xff]
      %247 = vset.pattern.permute.xlu0 0
      %248 = vperm.xlu0 %247, %v245
      %v249 = vpop.permute.xlu0 %248
      %v252 = vunpack.c.l.b16 %v172
      %v253 = vunpack.c.h.b16 %v172
      %v254 = vpack.c.b16 %v252, %v252
      %v255 = vpack.c.b16 %v253, %v253
      %v329 = vunpack.c.l.b16 %v173
      %v330 = vunpack.c.h.b16 %v173
      %v331 = vunpack.c.l.b16 %v174
      %v332 = vunpack.c.h.b16 %v174
      %v333 = vunpack.c.l.b16 %v175
      %v334 = vunpack.c.h.b16 %v175
      %v335 = vunpack.c.l.b16 %v176
      %v336 = vunpack.c.h.b16 %v176
      %v337 = vunpack.c.l.b16 %v177
      %v338 = vunpack.c.h.b16 %v177
      %v339 = vunpack.c.l.b16 %v178
      %v340 = vunpack.c.h.b16 %v178
      %v341 = vunpack.c.l.b16 %v179
      %v342 = vunpack.c.h.b16 %v179
      %v343 = vunpack.c.l.b16 %v180
      %v344 = vunpack.c.h.b16 %v180
      %v345 = vunpack.c.l.b16 %v181
      %v346 = vunpack.c.h.b16 %v181
      %v347 = vunpack.c.l.b16 %v182
      %v348 = vunpack.c.h.b16 %v182
      %v349 = vunpack.c.l.b16 %v183
      %v350 = vunpack.c.h.b16 %v183
      %v351 = vunpack.c.l.b16 %v184
      %v352 = vunpack.c.h.b16 %v184
      %v353 = vunpack.c.l.b16 %v185
      %v354 = vunpack.c.h.b16 %v185
      %v355 = vunpack.c.l.b16 %v186
      %v356 = vunpack.c.h.b16 %v186
      %v357 = vunpack.c.l.b16 %v187
      %v358 = vunpack.c.h.b16 %v187
      %v359 = vunpack.c.l.b16 %v188
      %v360 = vunpack.c.h.b16 %v188
      %v361 = vunpack.c.l.b16 %v189
      %v362 = vunpack.c.h.b16 %v189
      %v363 = vunpack.c.l.b16 %v190
      %v364 = vunpack.c.h.b16 %v190
      %v365 = vunpack.c.l.b16 %v191
      %v366 = vunpack.c.h.b16 %v191
      %v367 = vunpack.c.l.b16 %v192
      %v368 = vunpack.c.h.b16 %v192
      %v369 = vunpack.c.l.b16 %v193
      %v370 = vunpack.c.h.b16 %v193
      %v371 = vunpack.c.l.b16 %v194
      %v372 = vunpack.c.h.b16 %v194
      %v373 = vunpack.c.l.b16 %v195
      %v374 = vunpack.c.h.b16 %v195
      %v375 = vunpack.c.l.b16 %v196
      %v376 = vunpack.c.h.b16 %v196
      %v377 = vunpack.c.l.b16 %v197
      %v378 = vunpack.c.h.b16 %v197
      %v379 = vunpack.c.l.b16 %v198
      %v380 = vunpack.c.h.b16 %v198
      %v381 = vunpack.c.l.b16 %v199
      %v382 = vunpack.c.h.b16 %v199
      %v383 = vunpack.c.l.b16 %v200
      %v384 = vunpack.c.h.b16 %v200
      %v385 = vunpack.c.l.b16 %v201
      %v386 = vunpack.c.h.b16 %v201
      %v387 = vunpack.c.l.b16 %v202
      %v388 = vunpack.c.h.b16 %v202
      %v389 = vunpack.c.l.b16 %v203
      %v390 = vunpack.c.h.b16 %v203
      %v391 = vunpack.c.l.b16 %v204
      %v392 = vunpack.c.h.b16 %v204
      %v393 = vunpack.c.l.b16 %v205
      %v394 = vunpack.c.h.b16 %v205
      %v395 = vunpack.c.l.b16 %v206
      %v396 = vunpack.c.h.b16 %v206
      %v397 = vunpack.c.l.b16 %v207
      %v398 = vunpack.c.h.b16 %v207
      %v399 = vunpack.c.l.b16 %v208
      %v400 = vunpack.c.h.b16 %v208
      %v401 = vunpack.c.l.b16 %v209
      %v402 = vunpack.c.h.b16 %v209
      %v403 = vunpack.c.l.b16 %v210
      %v404 = vunpack.c.h.b16 %v210
      %v405 = vunpack.c.l.b16 %v211
      %v406 = vunpack.c.h.b16 %v211
      %v407 = vunpack.c.l.b16 %v212
      %v408 = vunpack.c.h.b16 %v212
      %v409 = vunpack.c.l.b16 %v213
      %v410 = vunpack.c.h.b16 %v213
      %v411 = vunpack.c.l.b16 %v214
      %v412 = vunpack.c.h.b16 %v214
      %v413 = vunpack.c.l.b16 %v215
      %v414 = vunpack.c.h.b16 %v215
      %v415 = vunpack.c.l.b16 %v216
      %v416 = vunpack.c.h.b16 %v216
      %v417 = vunpack.c.l.b16 %v217
      %v418 = vunpack.c.h.b16 %v217
      %v419 = vunpack.c.l.b16 %v218
      %v420 = vunpack.c.h.b16 %v218
      %v421 = vunpack.c.l.b16 %v219
      %v422 = vunpack.c.h.b16 %v219
      %v423 = vunpack.c.l.b16 %v220
      %v424 = vunpack.c.h.b16 %v220
      %v425 = vunpack.c.l.b16 %v221
      %v426 = vunpack.c.h.b16 %v221
      %v427 = vunpack.c.l.b16 %v222
      %v428 = vunpack.c.h.b16 %v222
      %v429 = vunpack.c.l.b16 %v223
      %v430 = vunpack.c.h.b16 %v223
      %v431 = vunpack.c.l.b16 %v224
      %v432 = vunpack.c.h.b16 %v224
      %v433 = vunpack.c.l.b16 %v225
      %v434 = vunpack.c.h.b16 %v225
      %v435 = vunpack.c.l.b16 %v226
      %v436 = vunpack.c.h.b16 %v226
      %v437 = vunpack.c.l.b16 %v227
      %v438 = vunpack.c.h.b16 %v227
      %v439 = vunpack.c.l.b16 %v228
      %v440 = vunpack.c.h.b16 %v228
      %v441 = vunpack.c.l.b16 %v229
      %v442 = vunpack.c.h.b16 %v229
      %v443 = vunpack.c.l.b16 %v230
      %v444 = vunpack.c.h.b16 %v230
      %v445 = vunpack.c.l.b16 %v231
      %v446 = vunpack.c.h.b16 %v231
      %v447 = vunpack.c.l.b16 %v232
      %v448 = vunpack.c.h.b16 %v232
      %v449 = vunpack.c.l.b16 %v233
      %v450 = vunpack.c.h.b16 %v233
      %v451 = vunpack.c.l.b16 %v234
      %v452 = vunpack.c.h.b16 %v234
      %v453 = vunpack.c.l.b16 %v235
      %v454 = vunpack.c.h.b16 %v235
      %v455 = vunpack.c.l.b16 %v236
      %v456 = vunpack.c.h.b16 %v236
      %v457 = vunpack.c.l.b16 %v237
      %v458 = vunpack.c.h.b16 %v237
      %v459 = vunpack.c.l.b16 %v238
      %v460 = vunpack.c.h.b16 %v238
      %v461 = vunpack.c.l.b16 %v239
      %v462 = vunpack.c.h.b16 %v239
      %v463 = vunpack.c.l.b16 %v240
      %v464 = vunpack.c.h.b16 %v240
      %v465 = vunpack.c.l.b16 %v241
      %v466 = vunpack.c.h.b16 %v241
      %v467 = vunpack.c.l.b16 %v242
      %v468 = vunpack.c.h.b16 %v242
      %v469 = vunpack.c.l.b16 %v243
      %v470 = vunpack.c.h.b16 %v243
      %v471 = vunpack.c.l.b16 %v244
      %v472 = vunpack.c.h.b16 %v244
      %v473 = vpack.c.b16 %v337, %v329
      %v474 = vpack.c.b16 %v338, %v330
      %v475 = vpack.c.b16 %v339, %v331
      %v476 = vpack.c.b16 %v340, %v332
      %v477 = vpack.c.b16 %v341, %v333
      %v478 = vpack.c.b16 %v342, %v334
      %v479 = vpack.c.b16 %v343, %v335
      %v480 = vpack.c.b16 %v344, %v336
      %v481 = vpack.c.b16 %v353, %v345
      %v482 = vpack.c.b16 %v354, %v346
      %v483 = vpack.c.b16 %v355, %v347
      %v484 = vpack.c.b16 %v356, %v348
      %v485 = vpack.c.b16 %v357, %v349
      %v486 = vpack.c.b16 %v358, %v350
      %v487 = vpack.c.b16 %v359, %v351
      %v488 = vpack.c.b16 %v360, %v352
      %v489 = vpack.c.b16 %v369, %v361
      %v490 = vpack.c.b16 %v370, %v362
      %v491 = vpack.c.b16 %v371, %v363
      %v492 = vpack.c.b16 %v372, %v364
      %v493 = vpack.c.b16 %v373, %v365
      %v494 = vpack.c.b16 %v374, %v366
      %v495 = vpack.c.b16 %v375, %v367
      %v496 = vpack.c.b16 %v376, %v368
      %v497 = vpack.c.b16 %v385, %v377
      %v498 = vpack.c.b16 %v386, %v378
      %v499 = vpack.c.b16 %v387, %v379
      %v500 = vpack.c.b16 %v388, %v380
      %v501 = vpack.c.b16 %v389, %v381
      %v502 = vpack.c.b16 %v390, %v382
      %v503 = vpack.c.b16 %v391, %v383
      %v504 = vpack.c.b16 %v392, %v384
      %v505 = vpack.c.b16 %v401, %v393
      %v506 = vpack.c.b16 %v402, %v394
      %v507 = vpack.c.b16 %v403, %v395
      %v508 = vpack.c.b16 %v404, %v396
      %v509 = vpack.c.b16 %v405, %v397
      %v510 = vpack.c.b16 %v406, %v398
      %v511 = vpack.c.b16 %v407, %v399
      %v512 = vpack.c.b16 %v408, %v400
      %v513 = vpack.c.b16 %v417, %v409
      %v514 = vpack.c.b16 %v418, %v410
      %v515 = vpack.c.b16 %v419, %v411
      %v516 = vpack.c.b16 %v420, %v412
      %v517 = vpack.c.b16 %v421, %v413
      %v518 = vpack.c.b16 %v422, %v414
      %v519 = vpack.c.b16 %v423, %v415
      %v520 = vpack.c.b16 %v424, %v416
      %v521 = vpack.c.b16 %v433, %v425
      %v522 = vpack.c.b16 %v434, %v426
      %v523 = vpack.c.b16 %v435, %v427
      %v524 = vpack.c.b16 %v436, %v428
      %v525 = vpack.c.b16 %v437, %v429
      %v526 = vpack.c.b16 %v438, %v430
      %v527 = vpack.c.b16 %v439, %v431
      %v528 = vpack.c.b16 %v440, %v432
      %v529 = vpack.c.b16 %v449, %v441
      %v530 = vpack.c.b16 %v450, %v442
      %v531 = vpack.c.b16 %v451, %v443
      %v532 = vpack.c.b16 %v452, %v444
      %v533 = vpack.c.b16 %v453, %v445
      %v534 = vpack.c.b16 %v454, %v446
      %v535 = vpack.c.b16 %v455, %v447
      %v536 = vpack.c.b16 %v456, %v448
      %v537 = vpack.c.b16 %v465, %v457
      %v538 = vpack.c.b16 %v466, %v458
      %v539 = vpack.c.b16 %v467, %v459
      %v540 = vpack.c.b16 %v468, %v460
      %v541 = vpack.c.b16 %v469, %v461
      %v542 = vpack.c.b16 %v470, %v462
      %v543 = vpack.c.b16 %v471, %v463
      %v544 = vpack.c.b16 %v472, %v464
      %vm617 = vcmask 130048
      %v619 = vsel %vm617, %v255, 0
      %621 = vmatprep.subr.bf16.mxu0 %v474
      %622 = vmatpush1.bf16.msra.mxu0 %v473
      %623 = vmatprep.subr.bf16.mxu0 %v482
      %624 = vmatpush1.bf16.msra.mxu0 %v481
      %625 = vmatprep.subr.bf16.mxu0 %v490
      %626 = vmatpush1.bf16.msra.mxu0 %v489
      %627 = vmatprep.subr.bf16.mxu0 %v498
      %628 = vmatpush1.bf16.msra.mxu0 %v497
      %629 = vmatprep.subr.bf16.mxu0 %v506
      %630 = vmatpush1.bf16.msra.mxu0 %v505
      %631 = vmatprep.subr.bf16.mxu0 %v514
      %632 = vmatpush1.bf16.msra.mxu0 %v513
      %633 = vmatprep.subr.bf16.mxu0 %v522
      %634 = vmatpush1.bf16.msra.mxu0 %v521
      %635 = vmatprep.subr.bf16.mxu0 %v530
      %636 = vmatpush1.bf16.msra.mxu0 %v529
      %637 = vmatprep.subr.bf16.mxu0 %v538
      %638 = vmatpush1.bf16.msra.mxu0 %v537
      %639 = vmatprep.subr.bf16.mxu0 0
      %640 = vmatpush1.bf16.msra.mxu0 0
      %641 = vmatprep.subr.bf16.mxu0 0
      %642 = vmatpush1.bf16.msra.mxu0 0
      %643 = vmatprep.subr.bf16.mxu0 0
      %644 = vmatpush1.bf16.msra.mxu0 0
      %645 = vmatprep.subr.bf16.mxu0 0
      %646 = vmatpush1.bf16.msra.mxu0 0
      %647 = vmatprep.subr.bf16.mxu0 0
      %648 = vmatpush1.bf16.msra.mxu0 0
      %649 = vmatprep.subr.bf16.mxu0 0
      %650 = vmatpush1.bf16.msra.mxu0 0
      %651 = vmatprep.subr.bf16.mxu0 0
      %652 = vmatpush1.bf16.msra.mxu0 0
      %653 = vmatprep.mubr.bf16.mxu0 %v619
      %654 = vmatmul.mubr.bf16.gmra.mrb[0].mxu0 %v254
      %v655 = vpop.f32.mrb[0].mxu0
      %v656 = vadd.f32 %v249, %v655
      %v657 = vpop.f32.mrb[0].mxu0
      %v658 = vadd.f32 %v249, %v657
      %v659 = vpop.f32.mrb[0].mxu0
      %v660 = vpop.f32.mrb[0].mxu0
      %661 = vdwg.mxu0
      %662 = vmatprep.subr.bf16.mxu0 %v476
      %663 = vmatpush1.bf16.msra.mxu0 %v475
      %664 = vmatprep.subr.bf16.mxu0 %v484
      %665 = vmatpush1.bf16.msra.mxu0 %v483
      %666 = vmatprep.subr.bf16.mxu0 %v492
      %667 = vmatpush1.bf16.msra.mxu0 %v491
      %668 = vmatprep.subr.bf16.mxu0 %v500
      %669 = vmatpush1.bf16.msra.mxu0 %v499
      %670 = vmatprep.subr.bf16.mxu0 %v508
      %671 = vmatpush1.bf16.msra.mxu0 %v507
      %672 = vmatprep.subr.bf16.mxu0 %v516
      %673 = vmatpush1.bf16.msra.mxu0 %v515
      %674 = vmatprep.subr.bf16.mxu0 %v524
      %675 = vmatpush1.bf16.msra.mxu0 %v523
      %676 = vmatprep.subr.bf16.mxu0 %v532
      %677 = vmatpush1.bf16.msra.mxu0 %v531
      %678 = vmatprep.subr.bf16.mxu0 %v540
      %679 = vmatpush1.bf16.msra.mxu0 %v539
      %680 = vmatprep.subr.bf16.mxu0 0
      %681 = vmatpush1.bf16.msra.mxu0 0
      %682 = vmatprep.subr.bf16.mxu0 0
      %683 = vmatpush1.bf16.msra.mxu0 0
      %684 = vmatprep.subr.bf16.mxu0 0
      %685 = vmatpush1.bf16.msra.mxu0 0
      %686 = vmatprep.subr.bf16.mxu0 0
      %687 = vmatpush1.bf16.msra.mxu0 0
      %688 = vmatprep.subr.bf16.mxu0 0
      %689 = vmatpush1.bf16.msra.mxu0 0
      %690 = vmatprep.subr.bf16.mxu0 0
      %691 = vmatpush1.bf16.msra.mxu0 0
      %692 = vmatprep.subr.bf16.mxu0 0
      %693 = vmatpush1.bf16.msra.mxu0 0
      %694 = vmatprep.mubr.bf16.mxu0 %v619
      %695 = vmatmul.mubr.bf16.gmra.mrb[0].mxu0 %v254
      %v696 = vpop.f32.mrb[0].mxu0
      %v697 = vadd.f32 %v249, %v696
      %v698 = vpop.f32.mrb[0].mxu0
      %v699 = vadd.f32 %v249, %v698
      %v700 = vpop.f32.mrb[0].mxu0
      %v701 = vpop.f32.mrb[0].mxu0
      %702 = vdwg.mxu0
      %703 = vmatprep.subr.bf16.mxu0 %v478
      %704 = vmatpush1.bf16.msra.mxu0 %v477
      %705 = vmatprep.subr.bf16.mxu0 %v486
      %706 = vmatpush1.bf16.msra.mxu0 %v485
      %707 = vmatprep.subr.bf16.mxu0 %v494
      %708 = vmatpush1.bf16.msra.mxu0 %v493
      %709 = vmatprep.subr.bf16.mxu0 %v502
      %710 = vmatpush1.bf16.msra.mxu0 %v501
      %711 = vmatprep.subr.bf16.mxu0 %v510
      %712 = vmatpush1.bf16.msra.mxu0 %v509
      %713 = vmatprep.subr.bf16.mxu0 %v518
      %714 = vmatpush1.bf16.msra.mxu0 %v517
      %715 = vmatprep.subr.bf16.mxu0 %v526
      %716 = vmatpush1.bf16.msra.mxu0 %v525
      %717 = vmatprep.subr.bf16.mxu0 %v534
      %718 = vmatpush1.bf16.msra.mxu0 %v533
      %719 = vmatprep.subr.bf16.mxu0 %v542
      %720 = vmatpush1.bf16.msra.mxu0 %v541
      %721 = vmatprep.subr.bf16.mxu0 0
      %722 = vmatpush1.bf16.msra.mxu0 0
      %723 = vmatprep.subr.bf16.mxu0 0
      %724 = vmatpush1.bf16.msra.mxu0 0
      %725 = vmatprep.subr.bf16.mxu0 0
      %726 = vmatpush1.bf16.msra.mxu0 0
      %727 = vmatprep.subr.bf16.mxu0 0
      %728 = vmatpush1.bf16.msra.mxu0 0
      %729 = vmatprep.subr.bf16.mxu0 0
      %730 = vmatpush1.bf16.msra.mxu0 0
      %731 = vmatprep.subr.bf16.mxu0 0
      %732 = vmatpush1.bf16.msra.mxu0 0
      %733 = vmatprep.subr.bf16.mxu0 0
      %734 = vmatpush1.bf16.msra.mxu0 0
      %735 = vmatprep.mubr.bf16.mxu0 %v619
      %736 = vmatmul.mubr.bf16.gmra.mrb[0].mxu0 %v254
      %v737 = vpop.f32.mrb[0].mxu0
      %v738 = vadd.f32 %v249, %v737
      %v739 = vpop.f32.mrb[0].mxu0
      %v740 = vadd.f32 %v249, %v739
      %v741 = vpop.f32.mrb[0].mxu0
      %v742 = vpop.f32.mrb[0].mxu0
      %743 = vdwg.mxu0
      %744 = vmatprep.subr.bf16.mxu0 %v480
      %745 = vmatpush1.bf16.msra.mxu0 %v479
      %746 = vmatprep.subr.bf16.mxu0 %v488
      %747 = vmatpush1.bf16.msra.mxu0 %v487
      %748 = vmatprep.subr.bf16.mxu0 %v496
      %749 = vmatpush1.bf16.msra.mxu0 %v495
      %750 = vmatprep.subr.bf16.mxu0 %v504
      %751 = vmatpush1.bf16.msra.mxu0 %v503
      %752 = vmatprep.subr.bf16.mxu0 %v512
      %753 = vmatpush1.bf16.msra.mxu0 %v511
      %754 = vmatprep.subr.bf16.mxu0 %v520
      %755 = vmatpush1.bf16.msra.mxu0 %v519
      %756 = vmatprep.subr.bf16.mxu0 %v528
      %757 = vmatpush1.bf16.msra.mxu0 %v527
      %758 = vmatprep.subr.bf16.mxu0 %v536
      %759 = vmatpush1.bf16.msra.mxu0 %v535
      %760 = vmatprep.subr.bf16.mxu0 %v544
      %761 = vmatpush1.bf16.msra.mxu0 %v543
      %762 = vmatprep.subr.bf16.mxu0 0
      %763 = vmatpush1.bf16.msra.mxu0 0
      %764 = vmatprep.subr.bf16.mxu0 0
      %765 = vmatpush1.bf16.msra.mxu0 0
      %766 = vmatprep.subr.bf16.mxu0 0
      %767 = vmatpush1.bf16.msra.mxu0 0
      %768 = vmatprep.subr.bf16.mxu0 0
      %769 = vmatpush1.bf16.msra.mxu0 0
      %770 = vmatprep.subr.bf16.mxu0 0
      %771 = vmatpush1.bf16.msra.mxu0 0
      %772 = vmatprep.subr.bf16.mxu0 0
      %773 = vmatpush1.bf16.msra.mxu0 0
      %774 = vmatprep.subr.bf16.mxu0 0
      %775 = vmatpush1.bf16.msra.mxu0 0
      %776 = vmatprep.mubr.bf16.mxu0 %v619
      %777 = vmatmul.mubr.bf16.gmra.mrb[0].mxu0 %v254
      %v778 = vpop.f32.mrb[0].mxu0
      %v779 = vadd.f32 %v249, %v778
      %v780 = vpop.f32.mrb[0].mxu0
      %v781 = vadd.f32 %v249, %v780
      %v782 = vpop.f32.mrb[0].mxu0
      %v783 = vpop.f32.mrb[0].mxu0
      %784 = vdwg.mxu0
      %v785 = vmax.f32 %v656, 0.0
      %v786 = vmax.f32 %v658, 0.0
      %v787 = vmax.f32 %v697, 0.0
      %v788 = vmax.f32 %v699, 0.0
      %v789 = vmax.f32 %v738, 0.0
      %v790 = vmax.f32 %v740, 0.0
      %v791 = vmax.f32 %v779, 0.0
      %v792 = vmax.f32 %v781, 0.0
      %v793 = vpack.c.bf16 %v785, %v785
      %v794 = vpack.c.bf16 %v786, %v786
      %v795 = vpack.c.bf16 %v787, %v787
      %v796 = vpack.c.bf16 %v788, %v788
      %v797 = vpack.c.bf16 %v789, %v789
      %v798 = vpack.c.bf16 %v790, %v790
      %v799 = vpack.c.bf16 %v791, %v791
      %v800 = vpack.c.bf16 %v792, %v792
      %v809 = vunpack.c.l.b16 %v793
      %v810 = vunpack.c.l.b16 %v794
      %v811 = vunpack.c.l.b16 %v795
      %v812 = vunpack.c.l.b16 %v796
      %v813 = vunpack.c.l.b16 %v797
      %v814 = vunpack.c.l.b16 %v798
      %v815 = vunpack.c.l.b16 %v799
      %v816 = vunpack.c.l.b16 %v800
      %v817 = vpack.c.b16 %v810, %v809
      %v818 = vpack.c.b16 %v812, %v811
      %v819 = vpack.c.b16 %v814, %v813
      %v820 = vpack.c.b16 %v816, %v815
      %825 = vst [vmem:[%s170] sm:$0xff] %v817
      %826 = vst [vmem:[%s170 + $0x8] sm:$0xff] %v818
      %827 = vst [vmem:[%s170 + $0x10] sm:$0xff] %v819
      %828 = vst [vmem:[%s170 + $0x18] sm:$0xff] %v820
      %p829 = scmp.lt.s32.totalorder %s14, 7
      %s830 = scalar_select %p829, %s14, 7
      %s831 = smul.addr %s830, 8
      %s832 = smul.addr %s831, 4
      %s833 = scalar_lea.vmem %s3, %s832
      // Predicated region
      $region33: #{im2im_forward.14} parent=31 // pred_check
        %p834 = pneg %p100
      $region34: #{im2im_forward.14} parent=31 // pred_check_branch
        %836 = sbr.rel (%p834) target = $region36
      $region35: #{im2im_forward.14} parent=31 // pred_region
        _
      $region36: #{im2im_forward.14} parent=31 // pred_fallthru
        _
    $region32: #{im2im_forward.14} parent=5 // pred_fallthru
      _
    %p837 = scmp.le.s32.totalorder 2, %s9
    // Predicated region
    $region37: #{im2im_forward.14} parent=5 // pred_check
      %p838 = pneg %p837
    $region38: #{im2im_forward.14} parent=5 // pred_check_branch
      %840 = sbr.rel (%p838) target = $region40
    $region39: #{im2im_forward.14} parent=5 // pred_region
      %s841 = ssub.s32 %s9, 2
      // Predicated region
      $region41: #{im2im_forward.14} parent=39 // pred_check
        %p842 = pneg %p106
      $region42: #{im2im_forward.14} parent=39 // pred_check_branch
        %844 = sbr.rel (%p842) target = $region44
      $region43: #{im2im_forward.14} parent=39 // pred_region
        %p845 = scmp.lt.s32.totalorder %s15, 7
        %s846 = scalar_select %p845, %s15, 7
        %s847 = smul.addr %s846, 8
        %s848 = smul.addr %s847, 4
        %s849 = scalar_lea.vmem %s3, %s848
      $region44: #{im2im_forward.14} parent=39 // pred_fallthru
        _
    $region40: #{im2im_forward.14} parent=5 // pred_fallthru
      _
  $region6: #{im2im_forward.14} parent=0 // loop_footer
    %s13 = sadd.s32 1, %s9
  $region7: #{im2im_forward.14} parent=0 // loop_footer_branch
    %8 = sbr.rel target = $region3
  $region8: #{im2im_forward.14} parent=0 // loop_exit
    _

// kernel: im2im_forward.15
$region0: #{im2im_forward.15}
  #allocation0 [shape = 'u32[]', space=smem, size = 0x4, offset = 0x4, fixed_abs, tag = 'smem constant byte address 0x4 - core index']
  #allocation1 [shape = 'u32[144,128]{1,0:T(1,128)}', space=vmem, size = 0x12000, scoped, tag = 'internal scratch']
  %s0 = inlined_call_operand.vmem [shape: bf16[3,72], index: 0, kind: input, shape index: {}]
  %s1 = inlined_call_operand.vmem [shape: bf16[8,72,4096], index: 1, kind: input, shape index: {}]
  %s2 = inlined_call_operand.vmem [shape: f32[3,1], index: 2, kind: input, shape index: {}]
  %s3 = inlined_call_operand.vmem [shape: f32[8,3,4096], index: 3, kind: output, shape index: {}]
  %s4 = sld [smem:[#allocation0]]
  $region45: #{im2im_forward.15} parent=0
    _
  %s6 = ssub.s32 1, %s4
  %s7 = scalar_select 0, %s6, %s4
  loop: start=0, step=1, limit=10
  $region2: #{im2im_forward.15} parent=0 // loop_pre_header
    _
  $region3: #{im2im_forward.15} parent=0 // loop_header
    %s9 = sphi 0, %s13
    %p10 = scmp.ge.s32.totalorder %s9, 10
    %s17 = sphi 0, %s17
    %s19 = sphi 0, %s17
    %s20 = sphi 0, %s19
    %s34 = sphi 0, %s20
    %s40 = sphi 0, %s42
    %s43 = sphi 0, %s40
    %s44 = sphi 0, %s43
    %s60 = sphi 0, %s44
    %s64 = sphi 0, %s64
    %s66 = sphi 0, %s64
    %s67 = sphi 0, %s66
    %s81 = sphi 0, %s67
    %s87 = sphi 0, %s89
    %s90 = sphi 0, %s87
    %s91 = sphi 0, %s90
    %s107 = sphi 0, %s91
  $region4: #{im2im_forward.15} parent=0 // loop_header_branch
    %12 = sbr.rel (%p10) target = $region8
  $region5: #{im2im_forward.15} parent=0 // loop_body
    %s14 = ssub.s32 %s9, 1
    %s15 = ssub.s32 %s9, 2
    %s16 = sadd.s32 %s9, 1
    %s18 = sadd.s32 %s17, 1
    %p21 = scmp.eq.s32.totalorder %s9, 7
    %p22 = scmp.ne.s32.totalorder %s17, %s19
    %p23 = scmp.eq.s32.totalorder %s9, 0
    %p24 = por %p22, %p23
    %p25 = scmp.ne.s32.totalorder %s17, %s19
    %p26 = scmp.eq.s32.totalorder %s14, 7
    %p27 = por %p25, %p26
    %p28 = scmp.ne.s32.totalorder %s19, %s20
    %p29 = scmp.eq.s32.totalorder %s14, 0
    %p30 = por %p28, %p29
    %p31 = scmp.ne.s32.totalorder %s19, %s20
    %p32 = scmp.eq.s32.totalorder %s15, 7
    %p33 = por %p31, %p32
    %p35 = scmp.ne.s32.totalorder %s20, %s34
    %p36 = scmp.eq.s32.totalorder %s15, 0
    %p37 = por %p35, %p36
    %s38 = ssub.s32 %s9, %s16
    %p39 = scmp.eq.s32.totalorder %s38, 0
    %s41 = sadd.s32 %s40, 1
    %s42 = scalar_select %p39, %s40, %s41
    %p45 = pneg %p39
    %p46 = scmp.eq.s32.totalorder %s9, 7
    %p47 = por %p45, %p46
    %p48 = scmp.ne.s32.totalorder %s40, %s43
    %p49 = scmp.eq.s32.totalorder %s9, 0
    %p50 = por %p48, %p49
    %p51 = scmp.ne.s32.totalorder %s40, %s43
    %p52 = scmp.eq.s32.totalorder %s14, 7
    %p53 = por %p51, %p52
    %p54 = scmp.ne.s32.totalorder %s43, %s44
    %p55 = scmp.eq.s32.totalorder %s14, 0
    %p56 = por %p54, %p55
    %p57 = scmp.ne.s32.totalorder %s43, %s44
    %p58 = scmp.eq.s32.totalorder %s15, 7
    %p59 = por %p57, %p58
    %p61 = scmp.ne.s32.totalorder %s44, %s60
    %p62 = scmp.eq.s32.totalorder %s15, 0
    %p63 = por %p61, %p62
    %s65 = sadd.s32 %s64, 1
    %p68 = scmp.eq.s32.totalorder %s9, 7
    %p69 = scmp.ne.s32.totalorder %s64, %s66
    %p70 = scmp.eq.s32.totalorder %s9, 0
    %p71 = por %p69, %p70
    %p72 = scmp.ne.s32.totalorder %s64, %s66
    %p73 = scmp.eq.s32.totalorder %s14, 7
    %p74 = por %p72, %p73
    %p75 = scmp.ne.s32.totalorder %s66, %s67
    %p76 = scmp.eq.s32.totalorder %s14, 0
    %p77 = por %p75, %p76
    %p78 = scmp.ne.s32.totalorder %s66, %s67
    %p79 = scmp.eq.s32.totalorder %s15, 7
    %p80 = por %p78, %p79
    %p82 = scmp.ne.s32.totalorder %s67, %s81
    %p83 = scmp.eq.s32.totalorder %s15, 0
    %p84 = por %p82, %p83
    %s85 = ssub.s32 %s9, %s16
    %p86 = scmp.eq.s32.totalorder %s85, 0
    %s88 = sadd.s32 %s87, 1
    %s89 = scalar_select %p86, %s87, %s88
    %p92 = pneg %p86
    %p93 = scmp.eq.s32.totalorder %s9, 7
    %p94 = por %p92, %p93
    %p95 = scmp.ne.s32.totalorder %s87, %s90
    %p96 = scmp.eq.s32.totalorder %s9, 0
    %p97 = por %p95, %p96
    %p98 = scmp.ne.s32.totalorder %s87, %s90
    %p99 = scmp.eq.s32.totalorder %s14, 7
    %p100 = por %p98, %p99
    %p101 = scmp.ne.s32.totalorder %s90, %s91
    %p102 = scmp.eq.s32.totalorder %s14, 0
    %p103 = por %p101, %p102
    %p104 = scmp.ne.s32.totalorder %s90, %s91
    %p105 = scmp.eq.s32.totalorder %s15, 7
    %p106 = por %p104, %p105
    %p108 = scmp.ne.s32.totalorder %s91, %s107
    %p109 = scmp.eq.s32.totalorder %s15, 0
    %p110 = por %p108, %p109
    %p111 = scmp.le.s32.totalorder 1, %s9
    %p112 = scmp.lt.s32.totalorder %s9, 9
    %p113 = pnand %p111, %p112
    %p114 = pneg %p113
    // Predicated region
    $region9: #{im2im_forward.15} parent=5 // pred_check
      _
    $region10: #{im2im_forward.15} parent=5 // pred_check_branch
      %116 = sbr.rel (%p113) target = $region12
    $region11: #{im2im_forward.15} parent=5 // pred_region
      %s117 = ssub.s32 %s9, 1
      // Predicated region
      $region13: #{im2im_forward.15} parent=11 // pred_check
        %p118 = pneg %p30
      $region14: #{im2im_forward.15} parent=11 // pred_check_branch
        %120 = sbr.rel (%p118) target = $region16
      $region15: #{im2im_forward.15} parent=11 // pred_region
        _
      $region16: #{im2im_forward.15} parent=11 // pred_fallthru
        _
      // Predicated region
      $region17: #{im2im_forward.15} parent=11 // pred_check
        %p121 = pneg %p77
      $region18: #{im2im_forward.15} parent=11 // pred_check_branch
        %123 = sbr.rel (%p121) target = $region20
      $region19: #{im2im_forward.15} parent=11 // pred_region
        _
      $region20: #{im2im_forward.15} parent=11 // pred_fallthru
        _
    $region12: #{im2im_forward.15} parent=5 // pred_fallthru
      _
    %p124 = scmp.lt.s32.totalorder %s9, 8
    // Predicated region
    $region21: #{im2im_forward.15} parent=5 // pred_check
      %p125 = pneg %p124
    $region22: #{im2im_forward.15} parent=5 // pred_check_branch
      %127 = sbr.rel (%p125) target = $region24
    $region23: #{im2im_forward.15} parent=5 // pred_region
      // Predicated region
      $region25: #{im2im_forward.15} parent=23 // pred_check
        %p128 = pneg %p50
      $region26: #{im2im_forward.15} parent=23 // pred_check_branch
        %130 = sbr.rel (%p128) target = $region28
      $region27: #{im2im_forward.15} parent=23 // pred_region
        %p131 = scmp.lt.s32.totalorder %s9, 7
        %s132 = scalar_select %p131, %s9, 7
        %s133 = smul.addr %s132, 288
        %s134 = smul.addr %s133, 4
        %s135 = scalar_lea.vmem %s1, %s134
      $region28: #{im2im_forward.15} parent=23 // pred_fallthru
        _
    $region24: #{im2im_forward.15} parent=5 // pred_fallthru
      _
    %p136 = scmp.le.s32.totalorder 1, %s9
    %p137 = scmp.lt.s32.totalorder %s9, 9
    %p138 = pnand %p136, %p137
    %p139 = pneg %p138
    // Predicated region
    $region29: #{im2im_forward.15} parent=5 // pred_check
      _
    $region30: #{im2im_forward.15} parent=5 // pred_check_branch
      %141 = sbr.rel (%p138) target = $region32
    $region31: #{im2im_forward.15} parent=5 // pred_region
      %s142 = ssub.s32 %s9, 1
      %p143 = pneg %p30
      %p144 = pneg %p27
      %p145 = scmp.lt.s32.totalorder %s14, 7
      %s146 = scalar_select %p145, %s14, 7
      %s147 = smul.addr %s146, 288
      %s148 = smul.addr %s147, 4
      %s149 = scalar_lea.vmem %s1, %s148
      %p150 = pneg %p56
      %p151 = pneg %p53
      %p152 = pneg %p77
      %p153 = pneg %p74
      %p154 = pneg %p103
      %p155 = pneg %p100
      %p156 = scmp.lt.s32.totalorder %s14, 7
      %s157 = scalar_select %p156, %s14, 7
      %s158 = smul.addr %s157, 32
      %s159 = smul.addr %s158, 4
      %s160 = scalar_lea.vmem %s3, %s159
      %p161 = scmp.lt.s32.totalorder %s14, 7
      %s162 = scalar_select %p161, %s14, 7
      %s163 = smul.addr %s162, 288
      %s164 = smul.addr %s163, 4
      %s165 = scalar_lea.vmem %s1, %s164
      %p166 = scmp.lt.s32.totalorder %s14, 7
      %s167 = scalar_select %p166, %s14, 7
      %s168 = smul.addr %s167, 32
      %s169 = smul.addr %s168, 4
      %s170 = scalar_lea.vmem %s3, %s169
      %v172 = vld [vmem:[%s0] sm:$0x3]
      %v173 = vld [vmem:[%s165] sm:$0xff]
      %v174 = vld [vmem:[%s165 + $0x8] sm:$0xff]
      %v175 = vld [vmem:[%s165 + $0x10] sm:$0xff]
      %v176 = vld [vmem:[%s165 + $0x18] sm:$0xff]
      %v177 = vld [vmem:[%s165 + $0x20] sm:$0xff]
      %v178 = vld [vmem:[%s165 + $0x28] sm:$0xff]
      %v179 = vld [vmem:[%s165 + $0x30] sm:$0xff]
      %v180 = vld [vmem:[%s165 + $0x38] sm:$0xff]
      %v181 = vld [vmem:[%s165 + $0x40] sm:$0xff]
      %v182 = vld [vmem:[%s165 + $0x48] sm:$0xff]
      %v183 = vld [vmem:[%s165 + $0x50] sm:$0xff]
      %v184 = vld [vmem:[%s165 + $0x58] sm:$0xff]
      %v185 = vld [vmem:[%s165 + $0x60] sm:$0xff]
      %v186 = vld [vmem:[%s165 + $0x68] sm:$0xff]
      %v187 = vld [vmem:[%s165 + $0x70] sm:$0xff]
      %v188 = vld [vmem:[%s165 + $0x78] sm:$0xff]
      %v189 = vld [vmem:[%s165 + $0x80] sm:$0xff]
      %v190 = vld [vmem:[%s165 + $0x88] sm:$0xff]
      %v191 = vld [vmem:[%s165 + $0x90] sm:$0xff]
      %v192 = vld [vmem:[%s165 + $0x98] sm:$0xff]
      %v193 = vld [vmem:[%s165 + $0xa0] sm:$0xff]
      %v194 = vld [vmem:[%s165 + $0xa8] sm:$0xff]
      %v195 = vld [vmem:[%s165 + $0xb0] sm:$0xff]
      %v196 = vld [vmem:[%s165 + $0xb8] sm:$0xff]
      %v197 = vld [vmem:[%s165 + $0xc0] sm:$0xff]
      %v198 = vld [vmem:[%s165 + $0xc8] sm:$0xff]
      %v199 = vld [vmem:[%s165 + $0xd0] sm:$0xff]
      %v200 = vld [vmem:[%s165 + $0xd8] sm:$0xff]
      %v201 = vld [vmem:[%s165 + $0xe0] sm:$0xff]
      %v202 = vld [vmem:[%s165 + $0xe8] sm:$0xff]
      %v203 = vld [vmem:[%s165 + $0xf0] sm:$0xff]
      %v204 = vld [vmem:[%s165 + $0xf8] sm:$0xff]
      %v205 = vld [vmem:[%s165 + $0x100] sm:$0xff]
      %v206 = vld [vmem:[%s165 + $0x108] sm:$0xff]
      %v207 = vld [vmem:[%s165 + $0x110] sm:$0xff]
      %v208 = vld [vmem:[%s165 + $0x118] sm:$0xff]
      %v209 = vld [vmem:[%s165 + $0x120] sm:$0xff]
      %v210 = vld [vmem:[%s165 + $0x128] sm:$0xff]
      %v211 = vld [vmem:[%s165 + $0x130] sm:$0xff]
      %v212 = vld [vmem:[%s165 + $0x138] sm:$0xff]
      %v213 = vld [vmem:[%s165 + $0x140] sm:$0xff]
      %v214 = vld [vmem:[%s165 + $0x148] sm:$0xff]
      %v215 = vld [vmem:[%s165 + $0x150] sm:$0xff]
      %v216 = vld [vmem:[%s165 + $0x158] sm:$0xff]
      %v217 = vld [vmem:[%s165 + $0x160] sm:$0xff]
      %v218 = vld [vmem:[%s165 + $0x168] sm:$0xff]
      %v219 = vld [vmem:[%s165 + $0x170] sm:$0xff]
      %v220 = vld [vmem:[%s165 + $0x178] sm:$0xff]
      %v221 = vld [vmem:[%s165 + $0x180] sm:$0xff]
      %v222 = vld [vmem:[%s165 + $0x188] sm:$0xff]
      %v223 = vld [vmem:[%s165 + $0x190] sm:$0xff]
      %v224 = vld [vmem:[%s165 + $0x198] sm:$0xff]
      %v225 = vld [vmem:[%s165 + $0x1a0] sm:$0xff]
      %v226 = vld [vmem:[%s165 + $0x1a8] sm:$0xff]
      %v227 = vld [vmem:[%s165 + $0x1b0] sm:$0xff]
      %v228 = vld [vmem:[%s165 + $0x1b8] sm:$0xff]
      %v229 = vld [vmem:[%s165 + $0x1c0] sm:$0xff]
      %v230 = vld [vmem:[%s165 + $0x1c8] sm:$0xff]
      %v231 = vld [vmem:[%s165 + $0x1d0] sm:$0xff]
      %v232 = vld [vmem:[%s165 + $0x1d8] sm:$0xff]
      %v233 = vld [vmem:[%s165 + $0x1e0] sm:$0xff]
      %v234 = vld [vmem:[%s165 + $0x1e8] sm:$0xff]
      %v235 = vld [vmem:[%s165 + $0x1f0] sm:$0xff]
      %v236 = vld [vmem:[%s165 + $0x1f8] sm:$0xff]
      %v237 = vld [vmem:[%s165 + $0x200] sm:$0xff]
      %v238 = vld [vmem:[%s165 + $0x208] sm:$0xff]
      %v239 = vld [vmem:[%s165 + $0x210] sm:$0xff]
      %v240 = vld [vmem:[%s165 + $0x218] sm:$0xff]
      %v241 = vld [vmem:[%s165 + $0x220] sm:$0xff]
      %v242 = vld [vmem:[%s165 + $0x228] sm:$0xff]
      %v243 = vld [vmem:[%s165 + $0x230] sm:$0xff]
      %v244 = vld [vmem:[%s165 + $0x238] sm:$0xff]
      %v245 = vld [vmem:[%s165 + $0x240] sm:$0xff]
      %v246 = vld [vmem:[%s165 + $0x248] sm:$0xff]
      %v247 = vld [vmem:[%s165 + $0x250] sm:$0xff]
      %v248 = vld [vmem:[%s165 + $0x258] sm:$0xff]
      %v249 = vld [vmem:[%s165 + $0x260] sm:$0xff]
      %v250 = vld [vmem:[%s165 + $0x268] sm:$0xff]
      %v251 = vld [vmem:[%s165 + $0x270] sm:$0xff]
      %v252 = vld [vmem:[%s165 + $0x278] sm:$0xff]
      %v253 = vld [vmem:[%s165 + $0x280] sm:$0xff]
      %v254 = vld [vmem:[%s165 + $0x288] sm:$0xff]
      %v255 = vld [vmem:[%s165 + $0x290] sm:$0xff]
      %v256 = vld [vmem:[%s165 + $0x298] sm:$0xff]
      %v257 = vld [vmem:[%s165 + $0x2a0] sm:$0xff]
      %v258 = vld [vmem:[%s165 + $0x2a8] sm:$0xff]
      %v259 = vld [vmem:[%s165 + $0x2b0] sm:$0xff]
      %v260 = vld [vmem:[%s165 + $0x2b8] sm:$0xff]
      %v261 = vld [vmem:[%s165 + $0x2c0] sm:$0xff]
      %v262 = vld [vmem:[%s165 + $0x2c8] sm:$0xff]
      %v263 = vld [vmem:[%s165 + $0x2d0] sm:$0xff]
      %v264 = vld [vmem:[%s165 + $0x2d8] sm:$0xff]
      %v265 = vld [vmem:[%s165 + $0x2e0] sm:$0xff]
      %v266 = vld [vmem:[%s165 + $0x2e8] sm:$0xff]
      %v267 = vld [vmem:[%s165 + $0x2f0] sm:$0xff]
      %v268 = vld [vmem:[%s165 + $0x2f8] sm:$0xff]
      %v269 = vld [vmem:[%s165 + $0x300] sm:$0xff]
      %v270 = vld [vmem:[%s165 + $0x308] sm:$0xff]
      %v271 = vld [vmem:[%s165 + $0x310] sm:$0xff]
      %v272 = vld [vmem:[%s165 + $0x318] sm:$0xff]
      %v273 = vld [vmem:[%s165 + $0x320] sm:$0xff]
      %v274 = vld [vmem:[%s165 + $0x328] sm:$0xff]
      %v275 = vld [vmem:[%s165 + $0x330] sm:$0xff]
      %v276 = vld [vmem:[%s165 + $0x338] sm:$0xff]
      %v277 = vld [vmem:[%s165 + $0x340] sm:$0xff]
      %v278 = vld [vmem:[%s165 + $0x348] sm:$0xff]
      %v279 = vld [vmem:[%s165 + $0x350] sm:$0xff]
      %v280 = vld [vmem:[%s165 + $0x358] sm:$0xff]
      %v281 = vld [vmem:[%s165 + $0x360] sm:$0xff]
      %v282 = vld [vmem:[%s165 + $0x368] sm:$0xff]
      %v283 = vld [vmem:[%s165 + $0x370] sm:$0xff]
      %v284 = vld [vmem:[%s165 + $0x378] sm:$0xff]
      %v285 = vld [vmem:[%s165 + $0x380] sm:$0xff]
      %v286 = vld [vmem:[%s165 + $0x388] sm:$0xff]
      %v287 = vld [vmem:[%s165 + $0x390] sm:$0xff]
      %v288 = vld [vmem:[%s165 + $0x398] sm:$0xff]
      %v289 = vld [vmem:[%s165 + $0x3a0] sm:$0xff]
      %v290 = vld [vmem:[%s165 + $0x3a8] sm:$0xff]
      %v291 = vld [vmem:[%s165 + $0x3b0] sm:$0xff]
      %v292 = vld [vmem:[%s165 + $0x3b8] sm:$0xff]
      %v293 = vld [vmem:[%s165 + $0x3c0] sm:$0xff]
      %v294 = vld [vmem:[%s165 + $0x3c8] sm:$0xff]
      %v295 = vld [vmem:[%s165 + $0x3d0] sm:$0xff]
      %v296 = vld [vmem:[%s165 + $0x3d8] sm:$0xff]
      %v297 = vld [vmem:[%s165 + $0x3e0] sm:$0xff]
      %v298 = vld [vmem:[%s165 + $0x3e8] sm:$0xff]
      %v299 = vld [vmem:[%s165 + $0x3f0] sm:$0xff]
      %v300 = vld [vmem:[%s165 + $0x3f8] sm:$0xff]
      %v301 = vld [vmem:[%s165 + $0x400] sm:$0xff]
      %v302 = vld [vmem:[%s165 + $0x408] sm:$0xff]
      %v303 = vld [vmem:[%s165 + $0x410] sm:$0xff]
      %v304 = vld [vmem:[%s165 + $0x418] sm:$0xff]
      %v305 = vld [vmem:[%s165 + $0x420] sm:$0xff]
      %v306 = vld [vmem:[%s165 + $0x428] sm:$0xff]
      %v307 = vld [vmem:[%s165 + $0x430] sm:$0xff]
      %v308 = vld [vmem:[%s165 + $0x438] sm:$0xff]
      %v309 = vld [vmem:[%s165 + $0x440] sm:$0xff]
      %v310 = vld [vmem:[%s165 + $0x448] sm:$0xff]
      %v311 = vld [vmem:[%s165 + $0x450] sm:$0xff]
      %v312 = vld [vmem:[%s165 + $0x458] sm:$0xff]
      %v313 = vld [vmem:[%s165 + $0x460] sm:$0xff]
      %v314 = vld [vmem:[%s165 + $0x468] sm:$0xff]
      %v315 = vld [vmem:[%s165 + $0x470] sm:$0xff]
      %v316 = vld [vmem:[%s165 + $0x478] sm:$0xff]
      %v317 = vld [vmem:[%s2] sm:$0x7]
      %319 = vset.pattern.permute.xlu0 0
      %320 = vperm.xlu0 %319, %v317
      %v321 = vpop.permute.xlu0 %320
      %v467 = vunpack.c.l.b16 %v173
      %v468 = vunpack.c.h.b16 %v173
      %v469 = vunpack.c.l.b16 %v174
      %v470 = vunpack.c.h.b16 %v174
      %v471 = vunpack.c.l.b16 %v175
      %v472 = vunpack.c.h.b16 %v175
      %v473 = vunpack.c.l.b16 %v176
      %v474 = vunpack.c.h.b16 %v176
      %v475 = vunpack.c.l.b16 %v177
      %v476 = vunpack.c.h.b16 %v177
      %v477 = vunpack.c.l.b16 %v178
      %v478 = vunpack.c.h.b16 %v178
      %v479 = vunpack.c.l.b16 %v179
      %v480 = vunpack.c.h.b16 %v179
      %v481 = vunpack.c.l.b16 %v180
      %v482 = vunpack.c.h.b16 %v180
      %v483 = vunpack.c.l.b16 %v181
      %v484 = vunpack.c.h.b16 %v181
      %v485 = vunpack.c.l.b16 %v182
      %v486 = vunpack.c.h.b16 %v182
      %v487 = vunpack.c.l.b16 %v183
      %v488 = vunpack.c.h.b16 %v183
      %v489 = vunpack.c.l.b16 %v184
      %v490 = vunpack.c.h.b16 %v184
      %v491 = vunpack.c.l.b16 %v185
      %v492 = vunpack.c.h.b16 %v185
      %v493 = vunpack.c.l.b16 %v186
      %v494 = vunpack.c.h.b16 %v186
      %v495 = vunpack.c.l.b16 %v187
      %v496 = vunpack.c.h.b16 %v187
      %v497 = vunpack.c.l.b16 %v188
      %v498 = vunpack.c.h.b16 %v188
      %v499 = vunpack.c.l.b16 %v189
      %v500 = vunpack.c.h.b16 %v189
      %v501 = vunpack.c.l.b16 %v190
      %v502 = vunpack.c.h.b16 %v190
      %v503 = vunpack.c.l.b16 %v191
      %v504 = vunpack.c.h.b16 %v191
      %v505 = vunpack.c.l.b16 %v192
      %v506 = vunpack.c.h.b16 %v192
      %v507 = vunpack.c.l.b16 %v193
      %v508 = vunpack.c.h.b16 %v193
      %v509 = vunpack.c.l.b16 %v194
      %v510 = vunpack.c.h.b16 %v194
      %v511 = vunpack.c.l.b16 %v195
      %v512 = vunpack.c.h.b16 %v195
      %v513 = vunpack.c.l.b16 %v196
      %v514 = vunpack.c.h.b16 %v196
      %v515 = vunpack.c.l.b16 %v197
      %v516 = vunpack.c.h.b16 %v197
      %v517 = vunpack.c.l.b16 %v198
      %v518 = vunpack.c.h.b16 %v198
      %v519 = vunpack.c.l.b16 %v199
      %v520 = vunpack.c.h.b16 %v199
      %v521 = vunpack.c.l.b16 %v200
      %v522 = vunpack.c.h.b16 %v200
      %v523 = vunpack.c.l.b16 %v201
      %v524 = vunpack.c.h.b16 %v201
      %v525 = vunpack.c.l.b16 %v202
      %v526 = vunpack.c.h.b16 %v202
      %v527 = vunpack.c.l.b16 %v203
      %v528 = vunpack.c.h.b16 %v203
      %v529 = vunpack.c.l.b16 %v204
      %v530 = vunpack.c.h.b16 %v204
      %v531 = vunpack.c.l.b16 %v205
      %v532 = vunpack.c.h.b16 %v205
      %v533 = vunpack.c.l.b16 %v206
      %v534 = vunpack.c.h.b16 %v206
      %v535 = vunpack.c.l.b16 %v207
      %v536 = vunpack.c.h.b16 %v207
      %v537 = vunpack.c.l.b16 %v208
      %v538 = vunpack.c.h.b16 %v208
      %v539 = vunpack.c.l.b16 %v209
      %v540 = vunpack.c.h.b16 %v209
      %v541 = vunpack.c.l.b16 %v210
      %v542 = vunpack.c.h.b16 %v210
      %v543 = vunpack.c.l.b16 %v211
      %v544 = vunpack.c.h.b16 %v211
      %v545 = vunpack.c.l.b16 %v212
      %v546 = vunpack.c.h.b16 %v212
      %v547 = vunpack.c.l.b16 %v213
      %v548 = vunpack.c.h.b16 %v213
      %v549 = vunpack.c.l.b16 %v214
      %v550 = vunpack.c.h.b16 %v214
      %v551 = vunpack.c.l.b16 %v215
      %v552 = vunpack.c.h.b16 %v215
      %v553 = vunpack.c.l.b16 %v216
      %v554 = vunpack.c.h.b16 %v216
      %v555 = vunpack.c.l.b16 %v217
      %v556 = vunpack.c.h.b16 %v217
      %v557 = vunpack.c.l.b16 %v218
      %v558 = vunpack.c.h.b16 %v218
      %v559 = vunpack.c.l.b16 %v219
      %v560 = vunpack.c.h.b16 %v219
      %v561 = vunpack.c.l.b16 %v220
      %v562 = vunpack.c.h.b16 %v220
      %v563 = vunpack.c.l.b16 %v221
      %v564 = vunpack.c.h.b16 %v221
      %v565 = vunpack.c.l.b16 %v222
      %v566 = vunpack.c.h.b16 %v222
      %v567 = vunpack.c.l.b16 %v223
      %v568 = vunpack.c.h.b16 %v223
      %v569 = vunpack.c.l.b16 %v224
      %v570 = vunpack.c.h.b16 %v224
      %v571 = vunpack.c.l.b16 %v225
      %v572 = vunpack.c.h.b16 %v225
      %v573 = vunpack.c.l.b16 %v226
      %v574 = vunpack.c.h.b16 %v226
      %v575 = vunpack.c.l.b16 %v227
      %v576 = vunpack.c.h.b16 %v227
      %v577 = vunpack.c.l.b16 %v228
      %v578 = vunpack.c.h.b16 %v228
      %v579 = vunpack.c.l.b16 %v229
      %v580 = vunpack.c.h.b16 %v229
      %v581 = vunpack.c.l.b16 %v230
      %v582 = vunpack.c.h.b16 %v230
      %v583 = vunpack.c.l.b16 %v231
      %v584 = vunpack.c.h.b16 %v231
      %v585 = vunpack.c.l.b16 %v232
      %v586 = vunpack.c.h.b16 %v232
      %v587 = vunpack.c.l.b16 %v233
      %v588 = vunpack.c.h.b16 %v233
      %v589 = vunpack.c.l.b16 %v234
      %v590 = vunpack.c.h.b16 %v234
      %v591 = vunpack.c.l.b16 %v235
      %v592 = vunpack.c.h.b16 %v235
      %v593 = vunpack.c.l.b16 %v236
      %v594 = vunpack.c.h.b16 %v236
      %v595 = vunpack.c.l.b16 %v237
      %v596 = vunpack.c.h.b16 %v237
      %v597 = vunpack.c.l.b16 %v238
      %v598 = vunpack.c.h.b16 %v238
      %v599 = vunpack.c.l.b16 %v239
      %v600 = vunpack.c.h.b16 %v239
      %v601 = vunpack.c.l.b16 %v240
      %v602 = vunpack.c.h.b16 %v240
      %v603 = vunpack.c.l.b16 %v241
      %v604 = vunpack.c.h.b16 %v241
      %v605 = vunpack.c.l.b16 %v242
      %v606 = vunpack.c.h.b16 %v242
      %v607 = vunpack.c.l.b16 %v243
      %v608 = vunpack.c.h.b16 %v243
      %v609 = vunpack.c.l.b16 %v244
      %v610 = vunpack.c.h.b16 %v244
      %v611 = vunpack.c.l.b16 %v245
      %v612 = vunpack.c.h.b16 %v245
      %v613 = vunpack.c.l.b16 %v246
      %v614 = vunpack.c.h.b16 %v246
      %v615 = vunpack.c.l.b16 %v247
      %v616 = vunpack.c.h.b16 %v247
      %v617 = vunpack.c.l.b16 %v248
      %v618 = vunpack.c.h.b16 %v248
      %v619 = vunpack.c.l.b16 %v249
      %v620 = vunpack.c.h.b16 %v249
      %v621 = vunpack.c.l.b16 %v250
      %v622 = vunpack.c.h.b16 %v250
      %v623 = vunpack.c.l.b16 %v251
      %v624 = vunpack.c.h.b16 %v251
      %v625 = vunpack.c.l.b16 %v252
      %v626 = vunpack.c.h.b16 %v252
      %v627 = vunpack.c.l.b16 %v253
      %v628 = vunpack.c.h.b16 %v253
      %v629 = vunpack.c.l.b16 %v254
      %v630 = vunpack.c.h.b16 %v254
      %v631 = vunpack.c.l.b16 %v255
      %v632 = vunpack.c.h.b16 %v255
      %v633 = vunpack.c.l.b16 %v256
      %v634 = vunpack.c.h.b16 %v256
      %v635 = vunpack.c.l.b16 %v257
      %v636 = vunpack.c.h.b16 %v257
      %v637 = vunpack.c.l.b16 %v258
      %v638 = vunpack.c.h.b16 %v258
      %v639 = vunpack.c.l.b16 %v259
      %v640 = vunpack.c.h.b16 %v259
      %v641 = vunpack.c.l.b16 %v260
      %v642 = vunpack.c.h.b16 %v260
      %v643 = vunpack.c.l.b16 %v261
      %v644 = vunpack.c.h.b16 %v261
      %v645 = vunpack.c.l.b16 %v262
      %v646 = vunpack.c.h.b16 %v262
      %v647 = vunpack.c.l.b16 %v263
      %v648 = vunpack.c.h.b16 %v263
      %v649 = vunpack.c.l.b16 %v264
      %v650 = vunpack.c.h.b16 %v264
      %v651 = vunpack.c.l.b16 %v265
      %v652 = vunpack.c.h.b16 %v265
      %v653 = vunpack.c.l.b16 %v266
      %v654 = vunpack.c.h.b16 %v266
      %v655 = vunpack.c.l.b16 %v267
      %v656 = vunpack.c.h.b16 %v267
      %v657 = vunpack.c.l.b16 %v268
      %v658 = vunpack.c.h.b16 %v268
      %v659 = vunpack.c.l.b16 %v269
      %v660 = vunpack.c.h.b16 %v269
      %v661 = vunpack.c.l.b16 %v270
      %v662 = vunpack.c.h.b16 %v270
      %v663 = vunpack.c.l.b16 %v271
      %v664 = vunpack.c.h.b16 %v271
      %v665 = vunpack.c.l.b16 %v272
      %v666 = vunpack.c.h.b16 %v272
      %v667 = vunpack.c.l.b16 %v273
      %v668 = vunpack.c.h.b16 %v273
      %v669 = vunpack.c.l.b16 %v274
      %v670 = vunpack.c.h.b16 %v274
      %v671 = vunpack.c.l.b16 %v275
      %v672 = vunpack.c.h.b16 %v275
      %v673 = vunpack.c.l.b16 %v276
      %v674 = vunpack.c.h.b16 %v276
      %v675 = vunpack.c.l.b16 %v277
      %v676 = vunpack.c.h.b16 %v277
      %v677 = vunpack.c.l.b16 %v278
      %v678 = vunpack.c.h.b16 %v278
      %v679 = vunpack.c.l.b16 %v279
      %v680 = vunpack.c.h.b16 %v279
      %v681 = vunpack.c.l.b16 %v280
      %v682 = vunpack.c.h.b16 %v280
      %v683 = vunpack.c.l.b16 %v281
      %v684 = vunpack.c.h.b16 %v281
      %v685 = vunpack.c.l.b16 %v282
      %v686 = vunpack.c.h.b16 %v282
      %v687 = vunpack.c.l.b16 %v283
      %v688 = vunpack.c.h.b16 %v283
      %v689 = vunpack.c.l.b16 %v284
      %v690 = vunpack.c.h.b16 %v284
      %v691 = vunpack.c.l.b16 %v285
      %v692 = vunpack.c.h.b16 %v285
      %v693 = vunpack.c.l.b16 %v286
      %v694 = vunpack.c.h.b16 %v286
      %v695 = vunpack.c.l.b16 %v287
      %v696 = vunpack.c.h.b16 %v287
      %v697 = vunpack.c.l.b16 %v288
      %v698 = vunpack.c.h.b16 %v288
      %v699 = vunpack.c.l.b16 %v289
      %v700 = vunpack.c.h.b16 %v289
      %v701 = vunpack.c.l.b16 %v290
      %v702 = vunpack.c.h.b16 %v290
      %v703 = vunpack.c.l.b16 %v291
      %v704 = vunpack.c.h.b16 %v291
      %v705 = vunpack.c.l.b16 %v292
      %v706 = vunpack.c.h.b16 %v292
      %v707 = vunpack.c.l.b16 %v293
      %v708 = vunpack.c.h.b16 %v293
      %v709 = vunpack.c.l.b16 %v294
      %v710 = vunpack.c.h.b16 %v294
      %v711 = vunpack.c.l.b16 %v295
      %v712 = vunpack.c.h.b16 %v295
      %v713 = vunpack.c.l.b16 %v296
      %v714 = vunpack.c.h.b16 %v296
      %v715 = vunpack.c.l.b16 %v297
      %v716 = vunpack.c.h.b16 %v297
      %v717 = vunpack.c.l.b16 %v298
      %v718 = vunpack.c.h.b16 %v298
      %v719 = vunpack.c.l.b16 %v299
      %v720 = vunpack.c.h.b16 %v299
      %v721 = vunpack.c.l.b16 %v300
      %v722 = vunpack.c.h.b16 %v300
      %v723 = vunpack.c.l.b16 %v301
      %v724 = vunpack.c.h.b16 %v301
      %v725 = vunpack.c.l.b16 %v302
      %v726 = vunpack.c.h.b16 %v302
      %v727 = vunpack.c.l.b16 %v303
      %v728 = vunpack.c.h.b16 %v303
      %v729 = vunpack.c.l.b16 %v304
      %v730 = vunpack.c.h.b16 %v304
      %v731 = vunpack.c.l.b16 %v305
      %v732 = vunpack.c.h.b16 %v305
      %v733 = vunpack.c.l.b16 %v306
      %v734 = vunpack.c.h.b16 %v306
      %v735 = vunpack.c.l.b16 %v307
      %v736 = vunpack.c.h.b16 %v307
      %v737 = vunpack.c.l.b16 %v308
      %v738 = vunpack.c.h.b16 %v308
      %v739 = vunpack.c.l.b16 %v309
      %v740 = vunpack.c.h.b16 %v309
      %v741 = vunpack.c.l.b16 %v310
      %v742 = vunpack.c.h.b16 %v310
      %v743 = vunpack.c.l.b16 %v311
      %v744 = vunpack.c.h.b16 %v311
      %v745 = vunpack.c.l.b16 %v312
      %v746 = vunpack.c.h.b16 %v312
      %v747 = vunpack.c.l.b16 %v313
      %v748 = vunpack.c.h.b16 %v313
      %v749 = vunpack.c.l.b16 %v314
      %v750 = vunpack.c.h.b16 %v314
      %v751 = vunpack.c.l.b16 %v315
      %v752 = vunpack.c.h.b16 %v315
      %v753 = vunpack.c.l.b16 %v316
      %v754 = vunpack.c.h.b16 %v316
      %v755 = vpack.c.b16 %v499, %v467
      %v756 = vpack.c.b16 %v500, %v468
      %v757 = vpack.c.b16 %v501, %v469
      %v758 = vpack.c.b16 %v502, %v470
      %v759 = vpack.c.b16 %v503, %v471
      %v760 = vpack.c.b16 %v504, %v472
      %v761 = vpack.c.b16 %v505, %v473
      %v762 = vpack.c.b16 %v506, %v474
      %v763 = vpack.c.b16 %v507, %v475
      %v764 = vpack.c.b16 %v508, %v476
      %v765 = vpack.c.b16 %v509, %v477
      %v766 = vpack.c.b16 %v510, %v478
      %v767 = vpack.c.b16 %v511, %v479
      %v768 = vpack.c.b16 %v512, %v480
      %v769 = vpack.c.b16 %v513, %v481
      %v770 = vpack.c.b16 %v514, %v482
      %v771 = vpack.c.b16 %v515, %v483
      %v772 = vpack.c.b16 %v516, %v484
      %v773 = vpack.c.b16 %v517, %v485
      %v774 = vpack.c.b16 %v518, %v486
      %v775 = vpack.c.b16 %v519, %v487
      %v776 = vpack.c.b16 %v520, %v488
      %v777 = vpack.c.b16 %v521, %v489
      %v778 = vpack.c.b16 %v522, %v490
      %v779 = vpack.c.b16 %v523, %v491
      %v780 = vpack.c.b16 %v524, %v492
      %v781 = vpack.c.b16 %v525, %v493
      %v782 = vpack.c.b16 %v526, %v494
      %v783 = vpack.c.b16 %v527, %v495
      %v784 = vpack.c.b16 %v528, %v496
      %v785 = vpack.c.b16 %v529, %v497
      %v786 = vpack.c.b16 %v530, %v498
      %v787 = vpack.c.b16 %v563, %v531
      %v788 = vpack.c.b16 %v564, %v532
      %v789 = vpack.c.b16 %v565, %v533
      %v790 = vpack.c.b16 %v566, %v534
      %v791 = vpack.c.b16 %v567, %v535
      %v792 = vpack.c.b16 %v568, %v536
      %v793 = vpack.c.b16 %v569, %v537
      %v794 = vpack.c.b16 %v570, %v538
      %v795 = vpack.c.b16 %v571, %v539
      %v796 = vpack.c.b16 %v572, %v540
      %v797 = vpack.c.b16 %v573, %v541
      %v798 = vpack.c.b16 %v574, %v542
      %v799 = vpack.c.b16 %v575, %v543
      %v800 = vpack.c.b16 %v576, %v544
      %v801 = vpack.c.b16 %v577, %v545
      %v802 = vpack.c.b16 %v578, %v546
      %v803 = vpack.c.b16 %v579, %v547
      %v804 = vpack.c.b16 %v580, %v548
      %v805 = vpack.c.b16 %v581, %v549
      %v806 = vpack.c.b16 %v582, %v550
      %v807 = vpack.c.b16 %v583, %v551
      %v808 = vpack.c.b16 %v584, %v552
      %v809 = vpack.c.b16 %v585, %v553
      %v810 = vpack.c.b16 %v586, %v554
      %v811 = vpack.c.b16 %v587, %v555
      %v812 = vpack.c.b16 %v588, %v556
      %v813 = vpack.c.b16 %v589, %v557
      %v814 = vpack.c.b16 %v590, %v558
      %v815 = vpack.c.b16 %v591, %v559
      %v816 = vpack.c.b16 %v592, %v560
      %v817 = vpack.c.b16 %v593, %v561
      %v818 = vpack.c.b16 %v594, %v562
      %v819 = vpack.c.b16 %v627, %v595
      %v820 = vpack.c.b16 %v628, %v596
      %v821 = vpack.c.b16 %v629, %v597
      %v822 = vpack.c.b16 %v630, %v598
      %v823 = vpack.c.b16 %v631, %v599
      %v824 = vpack.c.b16 %v632, %v600
      %v825 = vpack.c.b16 %v633, %v601
      %v826 = vpack.c.b16 %v634, %v602
      %v827 = vpack.c.b16 %v635, %v603
      %v828 = vpack.c.b16 %v636, %v604
      %v829 = vpack.c.b16 %v637, %v605
      %v830 = vpack.c.b16 %v638, %v606
      %v831 = vpack.c.b16 %v639, %v607
      %v832 = vpack.c.b16 %v640, %v608
      %v833 = vpack.c.b16 %v641, %v609
      %v834 = vpack.c.b16 %v642, %v610
      %v835 = vpack.c.b16 %v643, %v611
      %v836 = vpack.c.b16 %v644, %v612
      %v837 = vpack.c.b16 %v645, %v613
      %v838 = vpack.c.b16 %v646, %v614
      %v839 = vpack.c.b16 %v647, %v615
      %v840 = vpack.c.b16 %v648, %v616
      %v841 = vpack.c.b16 %v649, %v617
      %v842 = vpack.c.b16 %v650, %v618
      %v843 = vpack.c.b16 %v651, %v619
      %v844 = vpack.c.b16 %v652, %v620
      %v845 = vpack.c.b16 %v653, %v621
      %v846 = vpack.c.b16 %v654, %v622
      %v847 = vpack.c.b16 %v655, %v623
      %v848 = vpack.c.b16 %v656, %v624
      %v849 = vpack.c.b16 %v657, %v625
      %v850 = vpack.c.b16 %v658, %v626
      %v851 = vpack.c.b16 %v691, %v659
      %v852 = vpack.c.b16 %v692, %v660
      %v853 = vpack.c.b16 %v693, %v661
      %v854 = vpack.c.b16 %v694, %v662
      %v855 = vpack.c.b16 %v695, %v663
      %v856 = vpack.c.b16 %v696, %v664
      %v857 = vpack.c.b16 %v697, %v665
      %v858 = vpack.c.b16 %v698, %v666
      %v859 = vpack.c.b16 %v699, %v667
      %v860 = vpack.c.b16 %v700, %v668
      %v861 = vpack.c.b16 %v701, %v669
      %v862 = vpack.c.b16 %v702, %v670
      %v863 = vpack.c.b16 %v703, %v671
      %v864 = vpack.c.b16 %v704, %v672
      %v865 = vpack.c.b16 %v705, %v673
      %v866 = vpack.c.b16 %v706, %v674
      %v867 = vpack.c.b16 %v707, %v675
      %v868 = vpack.c.b16 %v708, %v676
      %v869 = vpack.c.b16 %v709, %v677
      %v870 = vpack.c.b16 %v710, %v678
      %v871 = vpack.c.b16 %v711, %v679
      %v872 = vpack.c.b16 %v712, %v680
      %v873 = vpack.c.b16 %v713, %v681
      %v874 = vpack.c.b16 %v714, %v682
      %v875 = vpack.c.b16 %v715, %v683
      %v876 = vpack.c.b16 %v716, %v684
      %v877 = vpack.c.b16 %v717, %v685
      %v878 = vpack.c.b16 %v718, %v686
      %v879 = vpack.c.b16 %v719, %v687
      %v880 = vpack.c.b16 %v720, %v688
      %v881 = vpack.c.b16 %v721, %v689
      %v882 = vpack.c.b16 %v722, %v690
      %v883 = vpack.c.b16 %v723, %v723
      %v884 = vpack.c.b16 %v724, %v724
      %v885 = vpack.c.b16 %v725, %v725
      %v886 = vpack.c.b16 %v726, %v726
      %v887 = vpack.c.b16 %v727, %v727
      %v888 = vpack.c.b16 %v728, %v728
      %v889 = vpack.c.b16 %v729, %v729
      %v890 = vpack.c.b16 %v730, %v730
      %v891 = vpack.c.b16 %v731, %v731
      %v892 = vpack.c.b16 %v732, %v732
      %v893 = vpack.c.b16 %v733, %v733
      %v894 = vpack.c.b16 %v734, %v734
      %v895 = vpack.c.b16 %v735, %v735
      %v896 = vpack.c.b16 %v736, %v736
      %v897 = vpack.c.b16 %v737, %v737
      %v898 = vpack.c.b16 %v738, %v738
      %v899 = vpack.c.b16 %v739, %v739
      %v900 = vpack.c.b16 %v740, %v740
      %v901 = vpack.c.b16 %v741, %v741
      %v902 = vpack.c.b16 %v742, %v742
      %v903 = vpack.c.b16 %v743, %v743
      %v904 = vpack.c.b16 %v744, %v744
      %v905 = vpack.c.b16 %v745, %v745
      %v906 = vpack.c.b16 %v746, %v746
      %v907 = vpack.c.b16 %v747, %v747
      %v908 = vpack.c.b16 %v748, %v748
      %v909 = vpack.c.b16 %v749, %v749
      %v910 = vpack.c.b16 %v750, %v750
      %v911 = vpack.c.b16 %v751, %v751
      %v912 = vpack.c.b16 %v752, %v752
      %v913 = vpack.c.b16 %v753, %v753
      %v914 = vpack.c.b16 %v754, %v754
      %vm1043 = vcmask 588800
      %v1045 = vsel %vm1043, %v172, 0
      %vm1047 = vcmask 1043456
      %v1049 = vsel %vm1047, %v883, 0
      %v1052 = vsel %vm1047, %v884, 0
      %v1055 = vsel %vm1047, %v885, 0
      %v1058 = vsel %vm1047, %v886, 0
      %v1061 = vsel %vm1047, %v887, 0
      %v1064 = vsel %vm1047, %v888, 0
      %v1067 = vsel %vm1047, %v889, 0
      %v1070 = vsel %vm1047, %v890, 0
      %v1073 = vsel %vm1047, %v891, 0
      %v1076 = vsel %vm1047, %v892, 0
      %v1079 = vsel %vm1047, %v893, 0
      %v1082 = vsel %vm1047, %v894, 0
      %v1085 = vsel %vm1047, %v895, 0
      %v1088 = vsel %vm1047, %v896, 0
      %v1091 = vsel %vm1047, %v897, 0
      %v1094 = vsel %vm1047, %v898, 0
      %v1097 = vsel %vm1047, %v899, 0
      %v1100 = vsel %vm1047, %v900, 0
      %v1103 = vsel %vm1047, %v901, 0
      %v1106 = vsel %vm1047, %v902, 0
      %v1109 = vsel %vm1047, %v903, 0
      %v1112 = vsel %vm1047, %v904, 0
      %v1115 = vsel %vm1047, %v905, 0
      %v1118 = vsel %vm1047, %v906, 0
      %v1121 = vsel %vm1047, %v907, 0
      %v1124 = vsel %vm1047, %v908, 0
      %v1127 = vsel %vm1047, %v909, 0
      %v1130 = vsel %vm1047, %v910, 0
      %v1133 = vsel %vm1047, %v911, 0
      %v1136 = vsel %vm1047, %v912, 0
      %v1139 = vsel %vm1047, %v913, 0
      %v1142 = vsel %vm1047, %v914, 0
      %1144 = vmatprep.subr.bf16.mxu0 %v756
      %1145 = vmatpush1.bf16.msra.mxu0 %v755
      %1146 = vmatprep.subr.bf16.mxu0 %v788
      %1147 = vmatpush1.bf16.msra.mxu0 %v787
      %1148 = vmatprep.subr.bf16.mxu0 %v820
      %1149 = vmatpush1.bf16.msra.mxu0 %v819
      %1150 = vmatprep.subr.bf16.mxu0 %v852
      %1151 = vmatpush1.bf16.msra.mxu0 %v851
      %1152 = vmatprep.subr.bf16.mxu0 %v1052
      %1153 = vmatpush1.bf16.msra.mxu0 %v1049
      %1154 = vmatprep.subr.bf16.mxu0 0
      %1155 = vmatpush1.bf16.msra.mxu0 0
      %1156 = vmatprep.subr.bf16.mxu0 0
      %1157 = vmatpush1.bf16.msra.mxu0 0
      %1158 = vmatprep.subr.bf16.mxu0 0
      %1159 = vmatpush1.bf16.msra.mxu0 0
      %1160 = vmatprep.subr.bf16.mxu0 0
      %1161 = vmatpush1.bf16.msra.mxu0 0
      %1162 = vmatprep.subr.bf16.mxu0 0
      %1163 = vmatpush1.bf16.msra.mxu0 0
      %1164 = vmatprep.subr.bf16.mxu0 0
      %1165 = vmatpush1.bf16.msra.mxu0 0
      %1166 = vmatprep.subr.bf16.mxu0 0
      %1167 = vmatpush1.bf16.msra.mxu0 0
      %1168 = vmatprep.subr.bf16.mxu0 0
      %1169 = vmatpush1.bf16.msra.mxu0 0
      %1170 = vmatprep.subr.bf16.mxu0 0
      %1171 = vmatpush1.bf16.msra.mxu0 0
      %1172 = vmatprep.subr.bf16.mxu0 0
      %1173 = vmatpush1.bf16.msra.mxu0 0
      %1174 = vmatprep.subr.bf16.mxu0 0
      %1175 = vmatpush1.bf16.msra.mxu0 0
      %1176 = vmatprep.mubr.bf16.mxu0 0
      %1177 = vmatmul.mubr.bf16.gmra.mrb[0].mxu0 %v1045
      %v1178 = vpop.f32.mrb[0].mxu0
      %v1179 = vadd.f32 %v321, %v1178
      %v1180 = vpop.f32.mrb[0].mxu0
      %v1181 = vadd.f32 %v321, %v1180
      %v1182 = vpop.f32.mrb[0].mxu0
      %v1183 = vpop.f32.mrb[0].mxu0
      %1184 = vdwg.mxu0
      %1185 = vmatprep.subr.bf16.mxu0 %v758
      %1186 = vmatpush1.bf16.msra.mxu0 %v757
      %1187 = vmatprep.subr.bf16.mxu0 %v790
      %1188 = vmatpush1.bf16.msra.mxu0 %v789
      %1189 = vmatprep.subr.bf16.mxu0 %v822
      %1190 = vmatpush1.bf16.msra.mxu0 %v821
      %1191 = vmatprep.subr.bf16.mxu0 %v854
      %1192 = vmatpush1.bf16.msra.mxu0 %v853
      %1193 = vmatprep.subr.bf16.mxu0 %v1058
      %1194 = vmatpush1.bf16.msra.mxu0 %v1055
      %1195 = vmatprep.subr.bf16.mxu0 0
      %1196 = vmatpush1.bf16.msra.mxu0 0
      %1197 = vmatprep.subr.bf16.mxu0 0
      %1198 = vmatpush1.bf16.msra.mxu0 0
      %1199 = vmatprep.subr.bf16.mxu0 0
      %1200 = vmatpush1.bf16.msra.mxu0 0
      %1201 = vmatprep.subr.bf16.mxu0 0
      %1202 = vmatpush1.bf16.msra.mxu0 0
      %1203 = vmatprep.subr.bf16.mxu0 0
      %1204 = vmatpush1.bf16.msra.mxu0 0
      %1205 = vmatprep.subr.bf16.mxu0 0
      %1206 = vmatpush1.bf16.msra.mxu0 0
      %1207 = vmatprep.subr.bf16.mxu0 0
      %1208 = vmatpush1.bf16.msra.mxu0 0
      %1209 = vmatprep.subr.bf16.mxu0 0
      %1210 = vmatpush1.bf16.msra.mxu0 0
      %1211 = vmatprep.subr.bf16.mxu0 0
      %1212 = vmatpush1.bf16.msra.mxu0 0
      %1213 = vmatprep.subr.bf16.mxu0 0
      %1214 = vmatpush1.bf16.msra.mxu0 0
      %1215 = vmatprep.subr.bf16.mxu0 0
      %1216 = vmatpush1.bf16.msra.mxu0 0
      %1217 = vmatprep.mubr.bf16.mxu0 0
      %1218 = vmatmul.mubr.bf16.gmra.mrb[0].mxu0 %v1045
      %v1219 = vpop.f32.mrb[0].mxu0
      %v1220 = vadd.f32 %v321, %v1219
      %v1221 = vpop.f32.mrb[0].mxu0
      %v1222 = vadd.f32 %v321, %v1221
      %v1223 = vpop.f32.mrb[0].mxu0
      %v1224 = vpop.f32.mrb[0].mxu0
      %1225 = vdwg.mxu0
      %1226 = vmatprep.subr.bf16.mxu0 %v760
      %1227 = vmatpush1.bf16.msra.mxu0 %v759
      %1228 = vmatprep.subr.bf16.mxu0 %v792
      %1229 = vmatpush1.bf16.msra.mxu0 %v791
      %1230 = vmatprep.subr.bf16.mxu0 %v824
      %1231 = vmatpush1.bf16.msra.mxu0 %v823
      %1232 = vmatprep.subr.bf16.mxu0 %v856
      %1233 = vmatpush1.bf16.msra.mxu0 %v855
      %1234 = vmatprep.subr.bf16.mxu0 %v1064
      %1235 = vmatpush1.bf16.msra.mxu0 %v1061
      %1236 = vmatprep.subr.bf16.mxu0 0
      %1237 = vmatpush1.bf16.msra.mxu0 0
      %1238 = vmatprep.subr.bf16.mxu0 0
      %1239 = vmatpush1.bf16.msra.mxu0 0
      %1240 = vmatprep.subr.bf16.mxu0 0
      %1241 = vmatpush1.bf16.msra.mxu0 0
      %1242 = vmatprep.subr.bf16.mxu0 0
      %1243 = vmatpush1.bf16.msra.mxu0 0
      %1244 = vmatprep.subr.bf16.mxu0 0
      %1245 = vmatpush1.bf16.msra.mxu0 0
      %1246 = vmatprep.subr.bf16.mxu0 0
      %1247 = vmatpush1.bf16.msra.mxu0 0
      %1248 = vmatprep.subr.bf16.mxu0 0
      %1249 = vmatpush1.bf16.msra.mxu0 0
      %1250 = vmatprep.subr.bf16.mxu0 0
      %1251 = vmatpush1.bf16.msra.mxu0 0
      %1252 = vmatprep.subr.bf16.mxu0 0
      %1253 = vmatpush1.bf16.msra.mxu0 0
      %1254 = vmatprep.subr.bf16.mxu0 0
      %1255 = vmatpush1.bf16.msra.mxu0 0
      %1256 = vmatprep.subr.bf16.mxu0 0
      %1257 = vmatpush1.bf16.msra.mxu0 0
      %1258 = vmatprep.mubr.bf16.mxu0 0
      %1259 = vmatmul.mubr.bf16.gmra.mrb[0].mxu0 %v1045
      %v1260 = vpop.f32.mrb[0].mxu0
      %v1261 = vadd.f32 %v321, %v1260
      %v1262 = vpop.f32.mrb[0].mxu0
      %v1263 = vadd.f32 %v321, %v1262
      %v1264 = vpop.f32.mrb[0].mxu0
      %v1265 = vpop.f32.mrb[0].mxu0
      %1266 = vdwg.mxu0
      %1267 = vmatprep.subr.bf16.mxu0 %v762
      %1268 = vmatpush1.bf16.msra.mxu0 %v761
      %1269 = vmatprep.subr.bf16.mxu0 %v794
      %1270 = vmatpush1.bf16.msra.mxu0 %v793
      %1271 = vmatprep.subr.bf16.mxu0 %v826
      %1272 = vmatpush1.bf16.msra.mxu0 %v825
      %1273 = vmatprep.subr.bf16.mxu0 %v858
      %1274 = vmatpush1.bf16.msra.mxu0 %v857
      %1275 = vmatprep.subr.bf16.mxu0 %v1070
      %1276 = vmatpush1.bf16.msra.mxu0 %v1067
      %1277 = vmatprep.subr.bf16.mxu0 0
      %1278 = vmatpush1.bf16.msra.mxu0 0
      %1279 = vmatprep.subr.bf16.mxu0 0
      %1280 = vmatpush1.bf16.msra.mxu0 0
      %1281 = vmatprep.subr.bf16.mxu0 0
      %1282 = vmatpush1.bf16.msra.mxu0 0
      %1283 = vmatprep.subr.bf16.mxu0 0
      %1284 = vmatpush1.bf16.msra.mxu0 0
      %1285 = vmatprep.subr.bf16.mxu0 0
      %1286 = vmatpush1.bf16.msra.mxu0 0
      %1287 = vmatprep.subr.bf16.mxu0 0
      %1288 = vmatpush1.bf16.msra.mxu0 0
      %1289 = vmatprep.subr.bf16.mxu0 0
      %1290 = vmatpush1.bf16.msra.mxu0 0
      %1291 = vmatprep.subr.bf16.mxu0 0
      %1292 = vmatpush1.bf16.msra.mxu0 0
      %1293 = vmatprep.subr.bf16.mxu0 0
      %1294 = vmatpush1.bf16.msra.mxu0 0
      %1295 = vmatprep.subr.bf16.mxu0 0
      %1296 = vmatpush1.bf16.msra.mxu0 0
      %1297 = vmatprep.subr.bf16.mxu0 0
      %1298 = vmatpush1.bf16.msra.mxu0 0
      %1299 = vmatprep.mubr.bf16.mxu0 0
      %1300 = vmatmul.mubr.bf16.gmra.mrb[0].mxu0 %v1045
      %v1301 = vpop.f32.mrb[0].mxu0
      %v1302 = vadd.f32 %v321, %v1301
      %v1303 = vpop.f32.mrb[0].mxu0
      %v1304 = vadd.f32 %v321, %v1303
      %v1305 = vpop.f32.mrb[0].mxu0
      %v1306 = vpop.f32.mrb[0].mxu0
      %1307 = vdwg.mxu0
      %1308 = vmatprep.subr.bf16.mxu0 %v764
      %1309 = vmatpush1.bf16.msra.mxu0 %v763
      %1310 = vmatprep.subr.bf16.mxu0 %v796
      %1311 = vmatpush1.bf16.msra.mxu0 %v795
      %1312 = vmatprep.subr.bf16.mxu0 %v828
      %1313 = vmatpush1.bf16.msra.mxu0 %v827
      %1314 = vmatprep.subr.bf16.mxu0 %v860
      %1315 = vmatpush1.bf16.msra.mxu0 %v859
      %1316 = vmatprep.subr.bf16.mxu0 %v1076
      %1317 = vmatpush1.bf16.msra.mxu0 %v1073
      %1318 = vmatprep.subr.bf16.mxu0 0
      %1319 = vmatpush1.bf16.msra.mxu0 0
      %1320 = vmatprep.subr.bf16.mxu0 0
      %1321 = vmatpush1.bf16.msra.mxu0 0
      %1322 = vmatprep.subr.bf16.mxu0 0
      %1323 = vmatpush1.bf16.msra.mxu0 0
      %1324 = vmatprep.subr.bf16.mxu0 0
      %1325 = vmatpush1.bf16.msra.mxu0 0
      %1326 = vmatprep.subr.bf16.mxu0 0
      %1327 = vmatpush1.bf16.msra.mxu0 0
      %1328 = vmatprep.subr.bf16.mxu0 0
      %1329 = vmatpush1.bf16.msra.mxu0 0
      %1330 = vmatprep.subr.bf16.mxu0 0
      %1331 = vmatpush1.bf16.msra.mxu0 0
      %1332 = vmatprep.subr.bf16.mxu0 0
      %1333 = vmatpush1.bf16.msra.mxu0 0
      %1334 = vmatprep.subr.bf16.mxu0 0
      %1335 = vmatpush1.bf16.msra.mxu0 0
      %1336 = vmatprep.subr.bf16.mxu0 0
      %1337 = vmatpush1.bf16.msra.mxu0 0
      %1338 = vmatprep.subr.bf16.mxu0 0
      %1339 = vmatpush1.bf16.msra.mxu0 0
      %1340 = vmatprep.mubr.bf16.mxu0 0
      %1341 = vmatmul.mubr.bf16.gmra.mrb[0].mxu0 %v1045
      %v1342 = vpop.f32.mrb[0].mxu0
      %v1343 = vadd.f32 %v321, %v1342
      %v1344 = vpop.f32.mrb[0].mxu0
      %v1345 = vadd.f32 %v321, %v1344
      %v1346 = vpop.f32.mrb[0].mxu0
      %v1347 = vpop.f32.mrb[0].mxu0
      %1348 = vdwg.mxu0
      %1349 = vmatprep.subr.bf16.mxu0 %v766
      %1350 = vmatpush1.bf16.msra.mxu0 %v765
      %1351 = vmatprep.subr.bf16.mxu0 %v798
      %1352 = vmatpush1.bf16.msra.mxu0 %v797
      %1353 = vmatprep.subr.bf16.mxu0 %v830
      %1354 = vmatpush1.bf16.msra.mxu0 %v829
      %1355 = vmatprep.subr.bf16.mxu0 %v862
      %1356 = vmatpush1.bf16.msra.mxu0 %v861
      %1357 = vmatprep.subr.bf16.mxu0 %v1082
      %1358 = vmatpush1.bf16.msra.mxu0 %v1079
      %1359 = vmatprep.subr.bf16.mxu0 0
      %1360 = vmatpush1.bf16.msra.mxu0 0
      %1361 = vmatprep.subr.bf16.mxu0 0
      %1362 = vmatpush1.bf16.msra.mxu0 0
      %1363 = vmatprep.subr.bf16.mxu0 0
      %1364 = vmatpush1.bf16.msra.mxu0 0
      %1365 = vmatprep.subr.bf16.mxu0 0
      %1366 = vmatpush1.bf16.msra.mxu0 0
      %1367 = vmatprep.subr.bf16.mxu0 0
      %1368 = vmatpush1.bf16.msra.mxu0 0
      %1369 = vmatprep.subr.bf16.mxu0 0
      %1370 = vmatpush1.bf16.msra.mxu0 0
      %1371 = vmatprep.subr.bf16.mxu0 0
      %1372 = vmatpush1.bf16.msra.mxu0 0
      %1373 = vmatprep.subr.bf16.mxu0 0
      %1374 = vmatpush1.bf16.msra.mxu0 0
      %1375 = vmatprep.subr.bf16.mxu0 0
      %1376 = vmatpush1.bf16.msra.mxu0 0
      %1377 = vmatprep.subr.bf16.mxu0 0
      %1378 = vmatpush1.bf16.msra.mxu0 0
      %1379 = vmatprep.subr.bf16.mxu0 0
      %1380 = vmatpush1.bf16.msra.mxu0 0
      %1381 = vmatprep.mubr.bf16.mxu0 0
      %1382 = vmatmul.mubr.bf16.gmra.mrb[0].mxu0 %v1045
      %v1383 = vpop.f32.mrb[0].mxu0
      %v1384 = vadd.f32 %v321, %v1383
      %v1385 = vpop.f32.mrb[0].mxu0
      %v1386 = vadd.f32 %v321, %v1385
      %v1387 = vpop.f32.mrb[0].mxu0
      %v1388 = vpop.f32.mrb[0].mxu0
      %1389 = vdwg.mxu0
      %1390 = vmatprep.subr.bf16.mxu0 %v768
      %1391 = vmatpush1.bf16.msra.mxu0 %v767
      %1392 = vmatprep.subr.bf16.mxu0 %v800
      %1393 = vmatpush1.bf16.msra.mxu0 %v799
      %1394 = vmatprep.subr.bf16.mxu0 %v832
      %1395 = vmatpush1.bf16.msra.mxu0 %v831
      %1396 = vmatprep.subr.bf16.mxu0 %v864
      %1397 = vmatpush1.bf16.msra.mxu0 %v863
      %1398 = vmatprep.subr.bf16.mxu0 %v1088
      %1399 = vmatpush1.bf16.msra.mxu0 %v1085
      %1400 = vmatprep.subr.bf16.mxu0 0
      %1401 = vmatpush1.bf16.msra.mxu0 0
      %1402 = vmatprep.subr.bf16.mxu0 0
      %1403 = vmatpush1.bf16.msra.mxu0 0
      %1404 = vmatprep.subr.bf16.mxu0 0
      %1405 = vmatpush1.bf16.msra.mxu0 0
      %1406 = vmatprep.subr.bf16.mxu0 0
      %1407 = vmatpush1.bf16.msra.mxu0 0
      %1408 = vmatprep.subr.bf16.mxu0 0
      %1409 = vmatpush1.bf16.msra.mxu0 0
      %1410 = vmatprep.subr.bf16.mxu0 0
      %1411 = vmatpush1.bf16.msra.mxu0 0
      %1412 = vmatprep.subr.bf16.mxu0 0
      %1413 = vmatpush1.bf16.msra.mxu0 0
      %1414 = vmatprep.subr.bf16.mxu0 0
      %1415 = vmatpush1.bf16.msra.mxu0 0
      %1416 = vmatprep.subr.bf16.mxu0 0
      %1417 = vmatpush1.bf16.msra.mxu0 0
      %1418 = vmatprep.subr.bf16.mxu0 0
      %1419 = vmatpush1.bf16.msra.mxu0 0
      %1420 = vmatprep.subr.bf16.mxu0 0
      %1421 = vmatpush1.bf16.msra.mxu0 0
      %1422 = vmatprep.mubr.bf16.mxu0 0
      %1423 = vmatmul.mubr.bf16.gmra.mrb[0].mxu0 %v1045
      %v1424 = vpop.f32.mrb[0].mxu0
      %v1425 = vadd.f32 %v321, %v1424
      %v1426 = vpop.f32.mrb[0].mxu0
      %v1427 = vadd.f32 %v321, %v1426
      %v1428 = vpop.f32.mrb[0].mxu0
      %v1429 = vpop.f32.mrb[0].mxu0
      %1430 = vdwg.mxu0
      %1431 = vmatprep.subr.bf16.mxu0 %v770
      %1432 = vmatpush1.bf16.msra.mxu0 %v769
      %1433 = vmatprep.subr.bf16.mxu0 %v802
      %1434 = vmatpush1.bf16.msra.mxu0 %v801
      %1435 = vmatprep.subr.bf16.mxu0 %v834
      %1436 = vmatpush1.bf16.msra.mxu0 %v833
      %1437 = vmatprep.subr.bf16.mxu0 %v866
      %1438 = vmatpush1.bf16.msra.mxu0 %v865
      %1439 = vmatprep.subr.bf16.mxu0 %v1094
      %1440 = vmatpush1.bf16.msra.mxu0 %v1091
      %1441 = vmatprep.subr.bf16.mxu0 0
      %1442 = vmatpush1.bf16.msra.mxu0 0
      %1443 = vmatprep.subr.bf16.mxu0 0
      %1444 = vmatpush1.bf16.msra.mxu0 0
      %1445 = vmatprep.subr.bf16.mxu0 0
      %1446 = vmatpush1.bf16.msra.mxu0 0
      %1447 = vmatprep.subr.bf16.mxu0 0
      %1448 = vmatpush1.bf16.msra.mxu0 0
      %1449 = vmatprep.subr.bf16.mxu0 0
      %1450 = vmatpush1.bf16.msra.mxu0 0
      %1451 = vmatprep.subr.bf16.mxu0 0
      %1452 = vmatpush1.bf16.msra.mxu0 0
      %1453 = vmatprep.subr.bf16.mxu0 0
      %1454 = vmatpush1.bf16.msra.mxu0 0
      %1455 = vmatprep.subr.bf16.mxu0 0
      %1456 = vmatpush1.bf16.msra.mxu0 0
      %1457 = vmatprep.subr.bf16.mxu0 0
      %1458 = vmatpush1.bf16.msra.mxu0 0
      %1459 = vmatprep.subr.bf16.mxu0 0
      %1460 = vmatpush1.bf16.msra.mxu0 0
      %1461 = vmatprep.subr.bf16.mxu0 0
      %1462 = vmatpush1.bf16.msra.mxu0 0
      %1463 = vmatprep.mubr.bf16.mxu0 0
      %1464 = vmatmul.mubr.bf16.gmra.mrb[0].mxu0 %v1045
      %v1465 = vpop.f32.mrb[0].mxu0
      %v1466 = vadd.f32 %v321, %v1465
      %v1467 = vpop.f32.mrb[0].mxu0
      %v1468 = vadd.f32 %v321, %v1467
      %v1469 = vpop.f32.mrb[0].mxu0
      %v1470 = vpop.f32.mrb[0].mxu0
      %1471 = vdwg.mxu0
      %1472 = vmatprep.subr.bf16.mxu0 %v772
      %1473 = vmatpush1.bf16.msra.mxu0 %v771
      %1474 = vmatprep.subr.bf16.mxu0 %v804
      %1475 = vmatpush1.bf16.msra.mxu0 %v803
      %1476 = vmatprep.subr.bf16.mxu0 %v836
      %1477 = vmatpush1.bf16.msra.mxu0 %v835
      %1478 = vmatprep.subr.bf16.mxu0 %v868
      %1479 = vmatpush1.bf16.msra.mxu0 %v867
      %1480 = vmatprep.subr.bf16.mxu0 %v1100
      %1481 = vmatpush1.bf16.msra.mxu0 %v1097
      %1482 = vmatprep.subr.bf16.mxu0 0
      %1483 = vmatpush1.bf16.msra.mxu0 0
      %1484 = vmatprep.subr.bf16.mxu0 0
      %1485 = vmatpush1.bf16.msra.mxu0 0
      %1486 = vmatprep.subr.bf16.mxu0 0
      %1487 = vmatpush1.bf16.msra.mxu0 0
      %1488 = vmatprep.subr.bf16.mxu0 0
      %1489 = vmatpush1.bf16.msra.mxu0 0
      %1490 = vmatprep.subr.bf16.mxu0 0
      %1491 = vmatpush1.bf16.msra.mxu0 0
      %1492 = vmatprep.subr.bf16.mxu0 0
      %1493 = vmatpush1.bf16.msra.mxu0 0
      %1494 = vmatprep.subr.bf16.mxu0 0
      %1495 = vmatpush1.bf16.msra.mxu0 0
      %1496 = vmatprep.subr.bf16.mxu0 0
      %1497 = vmatpush1.bf16.msra.mxu0 0
      %1498 = vmatprep.subr.bf16.mxu0 0
      %1499 = vmatpush1.bf16.msra.mxu0 0
      %1500 = vmatprep.subr.bf16.mxu0 0
      %1501 = vmatpush1.bf16.msra.mxu0 0
      %1502 = vmatprep.subr.bf16.mxu0 0
      %1503 = vmatpush1.bf16.msra.mxu0 0
      %1504 = vmatprep.mubr.bf16.mxu0 0
      %1505 = vmatmul.mubr.bf16.gmra.mrb[0].mxu0 %v1045
      %v1506 = vpop.f32.mrb[0].mxu0
      %v1507 = vadd.f32 %v321, %v1506
      %v1508 = vpop.f32.mrb[0].mxu0
      %v1509 = vadd.f32 %v321, %v1508
      %v1510 = vpop.f32.mrb[0].mxu0
      %v1511 = vpop.f32.mrb[0].mxu0
      %1512 = vdwg.mxu0
      %1513 = vmatprep.subr.bf16.mxu0 %v774
      %1514 = vmatpush1.bf16.msra.mxu0 %v773
      %1515 = vmatprep.subr.bf16.mxu0 %v806
      %1516 = vmatpush1.bf16.msra.mxu0 %v805
      %1517 = vmatprep.subr.bf16.mxu0 %v838
      %1518 = vmatpush1.bf16.msra.mxu0 %v837
      %1519 = vmatprep.subr.bf16.mxu0 %v870
      %1520 = vmatpush1.bf16.msra.mxu0 %v869
      %1521 = vmatprep.subr.bf16.mxu0 %v1106
      %1522 = vmatpush1.bf16.msra.mxu0 %v1103
      %1523 = vmatprep.subr.bf16.mxu0 0
      %1524 = vmatpush1.bf16.msra.mxu0 0
      %1525 = vmatprep.subr.bf16.mxu0 0
      %1526 = vmatpush1.bf16.msra.mxu0 0
      %1527 = vmatprep.subr.bf16.mxu0 0
      %1528 = vmatpush1.bf16.msra.mxu0 0
      %1529 = vmatprep.subr.bf16.mxu0 0
      %1530 = vmatpush1.bf16.msra.mxu0 0
      %1531 = vmatprep.subr.bf16.mxu0 0
      %1532 = vmatpush1.bf16.msra.mxu0 0
      %1533 = vmatprep.subr.bf16.mxu0 0
      %1534 = vmatpush1.bf16.msra.mxu0 0
      %1535 = vmatprep.subr.bf16.mxu0 0
      %1536 = vmatpush1.bf16.msra.mxu0 0
      %1537 = vmatprep.subr.bf16.mxu0 0
      %1538 = vmatpush1.bf16.msra.mxu0 0
      %1539 = vmatprep.subr.bf16.mxu0 0
      %1540 = vmatpush1.bf16.msra.mxu0 0
      %1541 = vmatprep.subr.bf16.mxu0 0
      %1542 = vmatpush1.bf16.msra.mxu0 0
      %1543 = vmatprep.subr.bf16.mxu0 0
      %1544 = vmatpush1.bf16.msra.mxu0 0
      %1545 = vmatprep.mubr.bf16.mxu0 0
      %1546 = vmatmul.mubr.bf16.gmra.mrb[0].mxu0 %v1045
      %v1547 = vpop.f32.mrb[0].mxu0
      %v1548 = vadd.f32 %v321, %v1547
      %v1549 = vpop.f32.mrb[0].mxu0
      %v1550 = vadd.f32 %v321, %v1549
      %v1551 = vpop.f32.mrb[0].mxu0
      %v1552 = vpop.f32.mrb[0].mxu0
      %1553 = vdwg.mxu0
      %1554 = vmatprep.subr.bf16.mxu0 %v776
      %1555 = vmatpush1.bf16.msra.mxu0 %v775
      %1556 = vmatprep.subr.bf16.mxu0 %v808
      %1557 = vmatpush1.bf16.msra.mxu0 %v807
      %1558 = vmatprep.subr.bf16.mxu0 %v840
      %1559 = vmatpush1.bf16.msra.mxu0 %v839
      %1560 = vmatprep.subr.bf16.mxu0 %v872
      %1561 = vmatpush1.bf16.msra.mxu0 %v871
      %1562 = vmatprep.subr.bf16.mxu0 %v1112
      %1563 = vmatpush1.bf16.msra.mxu0 %v1109
      %1564 = vmatprep.subr.bf16.mxu0 0
      %1565 = vmatpush1.bf16.msra.mxu0 0
      %1566 = vmatprep.subr.bf16.mxu0 0
      %1567 = vmatpush1.bf16.msra.mxu0 0
      %1568 = vmatprep.subr.bf16.mxu0 0
      %1569 = vmatpush1.bf16.msra.mxu0 0
      %1570 = vmatprep.subr.bf16.mxu0 0
      %1571 = vmatpush1.bf16.msra.mxu0 0
      %1572 = vmatprep.subr.bf16.mxu0 0
      %1573 = vmatpush1.bf16.msra.mxu0 0
      %1574 = vmatprep.subr.bf16.mxu0 0
      %1575 = vmatpush1.bf16.msra.mxu0 0
      %1576 = vmatprep.subr.bf16.mxu0 0
      %1577 = vmatpush1.bf16.msra.mxu0 0
      %1578 = vmatprep.subr.bf16.mxu0 0
      %1579 = vmatpush1.bf16.msra.mxu0 0
      %1580 = vmatprep.subr.bf16.mxu0 0
      %1581 = vmatpush1.bf16.msra.mxu0 0
      %1582 = vmatprep.subr.bf16.mxu0 0
      %1583 = vmatpush1.bf16.msra.mxu0 0
      %1584 = vmatprep.subr.bf16.mxu0 0
      %1585 = vmatpush1.bf16.msra.mxu0 0
      %1586 = vmatprep.mubr.bf16.mxu0 0
      %1587 = vmatmul.mubr.bf16.gmra.mrb[0].mxu0 %v1045
      %v1588 = vpop.f32.mrb[0].mxu0
      %v1589 = vadd.f32 %v321, %v1588
      %v1590 = vpop.f32.mrb[0].mxu0
      %v1591 = vadd.f32 %v321, %v1590
      %v1592 = vpop.f32.mrb[0].mxu0
      %v1593 = vpop.f32.mrb[0].mxu0
      %1594 = vdwg.mxu0
      %1595 = vmatprep.subr.bf16.mxu0 %v778
      %1596 = vmatpush1.bf16.msra.mxu0 %v777
      %1597 = vmatprep.subr.bf16.mxu0 %v810
      %1598 = vmatpush1.bf16.msra.mxu0 %v809
      %1599 = vmatprep.subr.bf16.mxu0 %v842
      %1600 = vmatpush1.bf16.msra.mxu0 %v841
      %1601 = vmatprep.subr.bf16.mxu0 %v874
      %1602 = vmatpush1.bf16.msra.mxu0 %v873
      %1603 = vmatprep.subr.bf16.mxu0 %v1118
      %1604 = vmatpush1.bf16.msra.mxu0 %v1115
      %1605 = vmatprep.subr.bf16.mxu0 0
      %1606 = vmatpush1.bf16.msra.mxu0 0
      %1607 = vmatprep.subr.bf16.mxu0 0
      %1608 = vmatpush1.bf16.msra.mxu0 0
      %1609 = vmatprep.subr.bf16.mxu0 0
      %1610 = vmatpush1.bf16.msra.mxu0 0
      %1611 = vmatprep.subr.bf16.mxu0 0
      %1612 = vmatpush1.bf16.msra.mxu0 0
      %1613 = vmatprep.subr.bf16.mxu0 0
      %1614 = vmatpush1.bf16.msra.mxu0 0
      %1615 = vmatprep.subr.bf16.mxu0 0
      %1616 = vmatpush1.bf16.msra.mxu0 0
      %1617 = vmatprep.subr.bf16.mxu0 0
      %1618 = vmatpush1.bf16.msra.mxu0 0
      %1619 = vmatprep.subr.bf16.mxu0 0
      %1620 = vmatpush1.bf16.msra.mxu0 0
      %1621 = vmatprep.subr.bf16.mxu0 0
      %1622 = vmatpush1.bf16.msra.mxu0 0
      %1623 = vmatprep.subr.bf16.mxu0 0
      %1624 = vmatpush1.bf16.msra.mxu0 0
      %1625 = vmatprep.subr.bf16.mxu0 0
      %1626 = vmatpush1.bf16.msra.mxu0 0
      %1627 = vmatprep.mubr.bf16.mxu0 0
      %1628 = vmatmul.mubr.bf16.gmra.mrb[0].mxu0 %v1045
      %v1629 = vpop.f32.mrb[0].mxu0
      %v1630 = vadd.f32 %v321, %v1629
      %v1631 = vpop.f32.mrb[0].mxu0
      %v1632 = vadd.f32 %v321, %v1631
      %v1633 = vpop.f32.mrb[0].mxu0
      %v1634 = vpop.f32.mrb[0].mxu0
      %1635 = vdwg.mxu0
      %1636 = vmatprep.subr.bf16.mxu0 %v780
      %1637 = vmatpush1.bf16.msra.mxu0 %v779
      %1638 = vmatprep.subr.bf16.mxu0 %v812
      %1639 = vmatpush1.bf16.msra.mxu0 %v811
      %1640 = vmatprep.subr.bf16.mxu0 %v844
      %1641 = vmatpush1.bf16.msra.mxu0 %v843
      %1642 = vmatprep.subr.bf16.mxu0 %v876
      %1643 = vmatpush1.bf16.msra.mxu0 %v875
      %1644 = vmatprep.subr.bf16.mxu0 %v1124
      %1645 = vmatpush1.bf16.msra.mxu0 %v1121
      %1646 = vmatprep.subr.bf16.mxu0 0
      %1647 = vmatpush1.bf16.msra.mxu0 0
      %1648 = vmatprep.subr.bf16.mxu0 0
      %1649 = vmatpush1.bf16.msra.mxu0 0
      %1650 = vmatprep.subr.bf16.mxu0 0
      %1651 = vmatpush1.bf16.msra.mxu0 0
      %1652 = vmatprep.subr.bf16.mxu0 0
      %1653 = vmatpush1.bf16.msra.mxu0 0
      %1654 = vmatprep.subr.bf16.mxu0 0
      %1655 = vmatpush1.bf16.msra.mxu0 0
      %1656 = vmatprep.subr.bf16.mxu0 0
      %1657 = vmatpush1.bf16.msra.mxu0 0
      %1658 = vmatprep.subr.bf16.mxu0 0
      %1659 = vmatpush1.bf16.msra.mxu0 0
      %1660 = vmatprep.subr.bf16.mxu0 0
      %1661 = vmatpush1.bf16.msra.mxu0 0
      %1662 = vmatprep.subr.bf16.mxu0 0
      %1663 = vmatpush1.bf16.msra.mxu0 0
      %1664 = vmatprep.subr.bf16.mxu0 0
      %1665 = vmatpush1.bf16.msra.mxu0 0
      %1666 = vmatprep.subr.bf16.mxu0 0
      %1667 = vmatpush1.bf16.msra.mxu0 0
      %1668 = vmatprep.mubr.bf16.mxu0 0
      %1669 = vmatmul.mubr.bf16.gmra.mrb[0].mxu0 %v1045
      %v1670 = vpop.f32.mrb[0].mxu0
      %v1671 = vadd.f32 %v321, %v1670
      %v1672 = vpop.f32.mrb[0].mxu0
      %v1673 = vadd.f32 %v321, %v1672
      %v1674 = vpop.f32.mrb[0].mxu0
      %v1675 = vpop.f32.mrb[0].mxu0
      %1676 = vdwg.mxu0
      %1677 = vmatprep.subr.bf16.mxu0 %v782
      %1678 = vmatpush1.bf16.msra.mxu0 %v781
      %1679 = vmatprep.subr.bf16.mxu0 %v814
      %1680 = vmatpush1.bf16.msra.mxu0 %v813
      %1681 = vmatprep.subr.bf16.mxu0 %v846
      %1682 = vmatpush1.bf16.msra.mxu0 %v845
      %1683 = vmatprep.subr.bf16.mxu0 %v878
      %1684 = vmatpush1.bf16.msra.mxu0 %v877
      %1685 = vmatprep.subr.bf16.mxu0 %v1130
      %1686 = vmatpush1.bf16.msra.mxu0 %v1127
      %1687 = vmatprep.subr.bf16.mxu0 0
      %1688 = vmatpush1.bf16.msra.mxu0 0
      %1689 = vmatprep.subr.bf16.mxu0 0
      %1690 = vmatpush1.bf16.msra.mxu0 0
      %1691 = vmatprep.subr.bf16.mxu0 0
      %1692 = vmatpush1.bf16.msra.mxu0 0
      %1693 = vmatprep.subr.bf16.mxu0 0
      %1694 = vmatpush1.bf16.msra.mxu0 0
      %1695 = vmatprep.subr.bf16.mxu0 0
      %1696 = vmatpush1.bf16.msra.mxu0 0
      %1697 = vmatprep.subr.bf16.mxu0 0
      %1698 = vmatpush1.bf16.msra.mxu0 0
      %1699 = vmatprep.subr.bf16.mxu0 0
      %1700 = vmatpush1.bf16.msra.mxu0 0
      %1701 = vmatprep.subr.bf16.mxu0 0
      %1702 = vmatpush1.bf16.msra.mxu0 0
      %1703 = vmatprep.subr.bf16.mxu0 0
      %1704 = vmatpush1.bf16.msra.mxu0 0
      %1705 = vmatprep.subr.bf16.mxu0 0
      %1706 = vmatpush1.bf16.msra.mxu0 0
      %1707 = vmatprep.subr.bf16.mxu0 0
      %1708 = vmatpush1.bf16.msra.mxu0 0
      %1709 = vmatprep.mubr.bf16.mxu0 0
      %1710 = vmatmul.mubr.bf16.gmra.mrb[0].mxu0 %v1045
      %v1711 = vpop.f32.mrb[0].mxu0
      %v1712 = vadd.f32 %v321, %v1711
      %v1713 = vpop.f32.mrb[0].mxu0
      %v1714 = vadd.f32 %v321, %v1713
      %v1715 = vpop.f32.mrb[0].mxu0
      %v1716 = vpop.f32.mrb[0].mxu0
      %1717 = vdwg.mxu0
      %1718 = vmatprep.subr.bf16.mxu0 %v784
      %1719 = vmatpush1.bf16.msra.mxu0 %v783
      %1720 = vmatprep.subr.bf16.mxu0 %v816
      %1721 = vmatpush1.bf16.msra.mxu0 %v815
      %1722 = vmatprep.subr.bf16.mxu0 %v848
      %1723 = vmatpush1.bf16.msra.mxu0 %v847
      %1724 = vmatprep.subr.bf16.mxu0 %v880
      %1725 = vmatpush1.bf16.msra.mxu0 %v879
      %1726 = vmatprep.subr.bf16.mxu0 %v1136
      %1727 = vmatpush1.bf16.msra.mxu0 %v1133
      %1728 = vmatprep.subr.bf16.mxu0 0
      %1729 = vmatpush1.bf16.msra.mxu0 0
      %1730 = vmatprep.subr.bf16.mxu0 0
      %1731 = vmatpush1.bf16.msra.mxu0 0
      %1732 = vmatprep.subr.bf16.mxu0 0
      %1733 = vmatpush1.bf16.msra.mxu0 0
      %1734 = vmatprep.subr.bf16.mxu0 0
      %1735 = vmatpush1.bf16.msra.mxu0 0
      %1736 = vmatprep.subr.bf16.mxu0 0
      %1737 = vmatpush1.bf16.msra.mxu0 0
      %1738 = vmatprep.subr.bf16.mxu0 0
      %1739 = vmatpush1.bf16.msra.mxu0 0
      %1740 = vmatprep.subr.bf16.mxu0 0
      %1741 = vmatpush1.bf16.msra.mxu0 0
      %1742 = vmatprep.subr.bf16.mxu0 0
      %1743 = vmatpush1.bf16.msra.mxu0 0
      %1744 = vmatprep.subr.bf16.mxu0 0
      %1745 = vmatpush1.bf16.msra.mxu0 0
      %1746 = vmatprep.subr.bf16.mxu0 0
      %1747 = vmatpush1.bf16.msra.mxu0 0
      %1748 = vmatprep.subr.bf16.mxu0 0
      %1749 = vmatpush1.bf16.msra.mxu0 0
      %1750 = vmatprep.mubr.bf16.mxu0 0
      %1751 = vmatmul.mubr.bf16.gmra.mrb[0].mxu0 %v1045
      %v1752 = vpop.f32.mrb[0].mxu0
      %v1753 = vadd.f32 %v321, %v1752
      %v1754 = vpop.f32.mrb[0].mxu0
      %v1755 = vadd.f32 %v321, %v1754
      %v1756 = vpop.f32.mrb[0].mxu0
      %v1757 = vpop.f32.mrb[0].mxu0
      %1758 = vdwg.mxu0
      %1759 = vmatprep.subr.bf16.mxu0 %v786
      %1760 = vmatpush1.bf16.msra.mxu0 %v785
      %1761 = vmatprep.subr.bf16.mxu0 %v818
      %1762 = vmatpush1.bf16.msra.mxu0 %v817
      %1763 = vmatprep.subr.bf16.mxu0 %v850
      %1764 = vmatpush1.bf16.msra.mxu0 %v849
      %1765 = vmatprep.subr.bf16.mxu0 %v882
      %1766 = vmatpush1.bf16.msra.mxu0 %v881
      %1767 = vmatprep.subr.bf16.mxu0 %v1142
      %1768 = vmatpush1.bf16.msra.mxu0 %v1139
      %1769 = vmatprep.subr.bf16.mxu0 0
      %1770 = vmatpush1.bf16.msra.mxu0 0
      %1771 = vmatprep.subr.bf16.mxu0 0
      %1772 = vmatpush1.bf16.msra.mxu0 0
      %1773 = vmatprep.subr.bf16.mxu0 0
      %1774 = vmatpush1.bf16.msra.mxu0 0
      %1775 = vmatprep.subr.bf16.mxu0 0
      %1776 = vmatpush1.bf16.msra.mxu0 0
      %1777 = vmatprep.subr.bf16.mxu0 0
      %1778 = vmatpush1.bf16.msra.mxu0 0
      %1779 = vmatprep.subr.bf16.mxu0 0
      %1780 = vmatpush1.bf16.msra.mxu0 0
      %1781 = vmatprep.subr.bf16.mxu0 0
      %1782 = vmatpush1.bf16.msra.mxu0 0
      %1783 = vmatprep.subr.bf16.mxu0 0
      %1784 = vmatpush1.bf16.msra.mxu0 0
      %1785 = vmatprep.subr.bf16.mxu0 0
      %1786 = vmatpush1.bf16.msra.mxu0 0
      %1787 = vmatprep.subr.bf16.mxu0 0
      %1788 = vmatpush1.bf16.msra.mxu0 0
      %1789 = vmatprep.subr.bf16.mxu0 0
      %1790 = vmatpush1.bf16.msra.mxu0 0
      %1791 = vmatprep.mubr.bf16.mxu0 0
      %1792 = vmatmul.mubr.bf16.gmra.mrb[0].mxu0 %v1045
      %v1793 = vpop.f32.mrb[0].mxu0
      %v1794 = vadd.f32 %v321, %v1793
      %v1795 = vpop.f32.mrb[0].mxu0
      %v1796 = vadd.f32 %v321, %v1795
      %v1797 = vpop.f32.mrb[0].mxu0
      %v1798 = vpop.f32.mrb[0].mxu0
      %1799 = vdwg.mxu0
      %v1800 = vxor.u32 %v1179, 2147483648
      %v1801 = vxor.u32 %v1181, 2147483648
      %v1802 = vxor.u32 %v1220, 2147483648
      %v1803 = vxor.u32 %v1222, 2147483648
      %v1804 = vxor.u32 %v1261, 2147483648
      %v1805 = vxor.u32 %v1263, 2147483648
      %v1806 = vxor.u32 %v1302, 2147483648
      %v1807 = vxor.u32 %v1304, 2147483648
      %v1808 = vxor.u32 %v1343, 2147483648
      %v1809 = vxor.u32 %v1345, 2147483648
      %v1810 = vxor.u32 %v1384, 2147483648
      %v1811 = vxor.u32 %v1386, 2147483648
      %v1812 = vxor.u32 %v1425, 2147483648
      %v1813 = vxor.u32 %v1427, 2147483648
      %v1814 = vxor.u32 %v1466, 2147483648
      %v1815 = vxor.u32 %v1468, 2147483648
      %v1816 = vxor.u32 %v1507, 2147483648
      %v1817 = vxor.u32 %v1509, 2147483648
      %v1818 = vxor.u32 %v1548, 2147483648
      %v1819 = vxor.u32 %v1550, 2147483648
      %v1820 = vxor.u32 %v1589, 2147483648
      %v1821 = vxor.u32 %v1591, 2147483648
      %v1822 = vxor.u32 %v1630, 2147483648
      %v1823 = vxor.u32 %v1632, 2147483648
      %v1824 = vxor.u32 %v1671, 2147483648
      %v1825 = vxor.u32 %v1673, 2147483648
      %v1826 = vxor.u32 %v1712, 2147483648
      %v1827 = vxor.u32 %v1714, 2147483648
      %v1828 = vxor.u32 %v1753, 2147483648
      %v1829 = vxor.u32 %v1755, 2147483648
      %v1830 = vxor.u32 %v1794, 2147483648
      %v1831 = vxor.u32 %v1796, 2147483648
      %v1832 = vmul.f32 %v1800, 1.442695
      %v1833 = vpow.pop %v1832
      %v1834 = vmul.f32 %v1801, 1.442695
      %v1835 = vpow.pop %v1834
      %v1836 = vmul.f32 %v1802, 1.442695
      %v1837 = vpow.pop %v1836
      %v1838 = vmul.f32 %v1803, 1.442695
      %v1839 = vpow.pop %v1838
      %v1840 = vmul.f32 %v1804, 1.442695
      %v1841 = vpow.pop %v1840
      %v1842 = vmul.f32 %v1805, 1.442695
      %v1843 = vpow.pop %v1842
      %v1844 = vmul.f32 %v1806, 1.442695
      %v1845 = vpow.pop %v1844
      %v1846 = vmul.f32 %v1807, 1.442695
      %v1847 = vpow.pop %v1846
      %v1848 = vmul.f32 %v1808, 1.442695
      %v1849 = vpow.pop %v1848
      %v1850 = vmul.f32 %v1809, 1.442695
      %v1851 = vpow.pop %v1850
      %v1852 = vmul.f32 %v1810, 1.442695
      %v1853 = vpow.pop %v1852
      %v1854 = vmul.f32 %v1811, 1.442695
      %v1855 = vpow.pop %v1854
      %v1856 = vmul.f32 %v1812, 1.442695
      %v1857 = vpow.pop %v1856
      %v1858 = vmul.f32 %v1813, 1.442695
      %v1859 = vpow.pop %v1858
      %v1860 = vmul.f32 %v1814, 1.442695
      %v1861 = vpow.pop %v1860
      %v1862 = vmul.f32 %v1815, 1.442695
      %v1863 = vpow.pop %v1862
      %v1864 = vmul.f32 %v1816, 1.442695
      %v1865 = vpow.pop %v1864
      %v1866 = vmul.f32 %v1817, 1.442695
      %v1867 = vpow.pop %v1866
      %v1868 = vmul.f32 %v1818, 1.442695
      %v1869 = vpow.pop %v1868
      %v1870 = vmul.f32 %v1819, 1.442695
      %v1871 = vpow.pop %v1870
      %v1872 = vmul.f32 %v1820, 1.442695
      %v1873 = vpow.pop %v1872
      %v1874 = vmul.f32 %v1821, 1.442695
      %v1875 = vpow.pop %v1874
      %v1876 = vmul.f32 %v1822, 1.442695
      %v1877 = vpow.pop %v1876
      %v1878 = vmul.f32 %v1823, 1.442695
      %v1879 = vpow.pop %v1878
      %v1880 = vmul.f32 %v1824, 1.442695
      %v1881 = vpow.pop %v1880
      %v1882 = vmul.f32 %v1825, 1.442695
      %v1883 = vpow.pop %v1882
      %v1884 = vmul.f32 %v1826, 1.442695
      %v1885 = vpow.pop %v1884
      %v1886 = vmul.f32 %v1827, 1.442695
      %v1887 = vpow.pop %v1886
      %v1888 = vmul.f32 %v1828, 1.442695
      %v1889 = vpow.pop %v1888
      %v1890 = vmul.f32 %v1829, 1.442695
      %v1891 = vpow.pop %v1890
      %v1892 = vmul.f32 %v1830, 1.442695
      %v1893 = vpow.pop %v1892
      %v1894 = vmul.f32 %v1831, 1.442695
      %v1895 = vpow.pop %v1894
      %v1896 = vadd.f32 %v1833, 1.0
      %v1897 = vadd.f32 %v1835, 1.0
      %v1898 = vadd.f32 %v1837, 1.0
      %v1899 = vadd.f32 %v1839, 1.0
      %v1900 = vadd.f32 %v1841, 1.0
      %v1901 = vadd.f32 %v1843, 1.0
      %v1902 = vadd.f32 %v1845, 1.0
      %v1903 = vadd.f32 %v1847, 1.0
      %v1904 = vadd.f32 %v1849, 1.0
      %v1905 = vadd.f32 %v1851, 1.0
      %v1906 = vadd.f32 %v1853, 1.0
      %v1907 = vadd.f32 %v1855, 1.0
      %v1908 = vadd.f32 %v1857, 1.0
      %v1909 = vadd.f32 %v1859, 1.0
      %v1910 = vadd.f32 %v1861, 1.0
      %v1911 = vadd.f32 %v1863, 1.0
      %v1912 = vadd.f32 %v1865, 1.0
      %v1913 = vadd.f32 %v1867, 1.0
      %v1914 = vadd.f32 %v1869, 1.0
      %v1915 = vadd.f32 %v1871, 1.0
      %v1916 = vadd.f32 %v1873, 1.0
      %v1917 = vadd.f32 %v1875, 1.0
      %v1918 = vadd.f32 %v1877, 1.0
      %v1919 = vadd.f32 %v1879, 1.0
      %v1920 = vadd.f32 %v1881, 1.0
      %v1921 = vadd.f32 %v1883, 1.0
      %v1922 = vadd.f32 %v1885, 1.0
      %v1923 = vadd.f32 %v1887, 1.0
      %v1924 = vadd.f32 %v1889, 1.0
      %v1925 = vadd.f32 %v1891, 1.0
      %v1926 = vadd.f32 %v1893, 1.0
      %v1927 = vadd.f32 %v1895, 1.0
      %v1928 = vrcp.pop %v1896
      %v1929 = vmul.f32 1.0, %v1928
      %v1930 = vrcp.pop %v1897
      %v1931 = vmul.f32 1.0, %v1930
      %v1932 = vrcp.pop %v1898
      %v1933 = vmul.f32 1.0, %v1932
      %v1934 = vrcp.pop %v1899
      %v1935 = vmul.f32 1.0, %v1934
      %v1936 = vrcp.pop %v1900
      %v1937 = vmul.f32 1.0, %v1936
      %v1938 = vrcp.pop %v1901
      %v1939 = vmul.f32 1.0, %v1938
      %v1940 = vrcp.pop %v1902
      %v1941 = vmul.f32 1.0, %v1940
      %v1942 = vrcp.pop %v1903
      %v1943 = vmul.f32 1.0, %v1942
      %v1944 = vrcp.pop %v1904
      %v1945 = vmul.f32 1.0, %v1944
      %v1946 = vrcp.pop %v1905
      %v1947 = vmul.f32 1.0, %v1946
      %v1948 = vrcp.pop %v1906
      %v1949 = vmul.f32 1.0, %v1948
      %v1950 = vrcp.pop %v1907
      %v1951 = vmul.f32 1.0, %v1950
      %v1952 = vrcp.pop %v1908
      %v1953 = vmul.f32 1.0, %v1952
      %v1954 = vrcp.pop %v1909
      %v1955 = vmul.f32 1.0, %v1954
      %v1956 = vrcp.pop %v1910
      %v1957 = vmul.f32 1.0, %v1956
      %v1958 = vrcp.pop %v1911
      %v1959 = vmul.f32 1.0, %v1958
      %v1960 = vrcp.pop %v1912
      %v1961 = vmul.f32 1.0, %v1960
      %v1962 = vrcp.pop %v1913
      %v1963 = vmul.f32 1.0, %v1962
      %v1964 = vrcp.pop %v1914
      %v1965 = vmul.f32 1.0, %v1964
      %v1966 = vrcp.pop %v1915
      %v1967 = vmul.f32 1.0, %v1966
      %v1968 = vrcp.pop %v1916
      %v1969 = vmul.f32 1.0, %v1968
      %v1970 = vrcp.pop %v1917
      %v1971 = vmul.f32 1.0, %v1970
      %v1972 = vrcp.pop %v1918
      %v1973 = vmul.f32 1.0, %v1972
      %v1974 = vrcp.pop %v1919
      %v1975 = vmul.f32 1.0, %v1974
      %v1976 = vrcp.pop %v1920
      %v1977 = vmul.f32 1.0, %v1976
      %v1978 = vrcp.pop %v1921
      %v1979 = vmul.f32 1.0, %v1978
      %v1980 = vrcp.pop %v1922
      %v1981 = vmul.f32 1.0, %v1980
      %v1982 = vrcp.pop %v1923
      %v1983 = vmul.f32 1.0, %v1982
      %v1984 = vrcp.pop %v1924
      %v1985 = vmul.f32 1.0, %v1984
      %v1986 = vrcp.pop %v1925
      %v1987 = vmul.f32 1.0, %v1986
      %v1988 = vrcp.pop %v1926
      %v1989 = vmul.f32 1.0, %v1988
      %v1990 = vrcp.pop %v1927
      %v1991 = vmul.f32 1.0, %v1990
      %v2024 = vcombine.low %v1929, %v1931
      %v2025 = vcombine.low %v1933, %v1935
      %v2026 = vcombine.low %v1937, %v1939
      %v2027 = vcombine.low %v1941, %v1943
      %v2028 = vcombine.low %v1945, %v1947
      %v2029 = vcombine.low %v1949, %v1951
      %v2030 = vcombine.low %v1953, %v1955
      %v2031 = vcombine.low %v1957, %v1959
      %v2032 = vcombine.low %v1961, %v1963
      %v2033 = vcombine.low %v1965, %v1967
      %v2034 = vcombine.low %v1969, %v1971
      %v2035 = vcombine.low %v1973, %v1975
      %v2036 = vcombine.low %v1977, %v1979
      %v2037 = vcombine.low %v1981, %v1983
      %v2038 = vcombine.low %v1985, %v1987
      %v2039 = vcombine.low %v1989, %v1991
      %2056 = vst [vmem:[%s170] sm:$0x77] %v2024
      %2057 = vst [vmem:[%s170 + $0x8] sm:$0x77] %v2025
      %2058 = vst [vmem:[%s170 + $0x10] sm:$0x77] %v2026
      %2059 = vst [vmem:[%s170 + $0x18] sm:$0x77] %v2027
      %2060 = vst [vmem:[%s170 + $0x20] sm:$0x77] %v2028
      %2061 = vst [vmem:[%s170 + $0x28] sm:$0x77] %v2029
      %2062 = vst [vmem:[%s170 + $0x30] sm:$0x77] %v2030
      %2063 = vst [vmem:[%s170 + $0x38] sm:$0x77] %v2031
      %2064 = vst [vmem:[%s170 + $0x40] sm:$0x77] %v2032
      %2065 = vst [vmem:[%s170 + $0x48] sm:$0x77] %v2033
      %2066 = vst [vmem:[%s170 + $0x50] sm:$0x77] %v2034
      %2067 = vst [vmem:[%s170 + $0x58] sm:$0x77] %v2035
      %2068 = vst [vmem:[%s170 + $0x60] sm:$0x77] %v2036
      %2069 = vst [vmem:[%s170 + $0x68] sm:$0x77] %v2037
      %2070 = vst [vmem:[%s170 + $0x70] sm:$0x77] %v2038
      %2071 = vst [vmem:[%s170 + $0x78] sm:$0x77] %v2039
      %p2072 = scmp.lt.s32.totalorder %s14, 7
      %s2073 = scalar_select %p2072, %s14, 7
      %s2074 = smul.addr %s2073, 32
      %s2075 = smul.addr %s2074, 4
      %s2076 = scalar_lea.vmem %s3, %s2075
      // Predicated region
      $region33: #{im2im_forward.15} parent=31 // pred_check
        %p2077 = pneg %p100
      $region34: #{im2im_forward.15} parent=31 // pred_check_branch
        %2079 = sbr.rel (%p2077) target = $region36
      $region35: #{im2im_forward.15} parent=31 // pred_region
        _
      $region36: #{im2im_forward.15} parent=31 // pred_fallthru
        _
    $region32: #{im2im_forward.15} parent=5 // pred_fallthru
      _
    %p2080 = scmp.le.s32.totalorder 2, %s9
    // Predicated region
    $region37: #{im2im_forward.15} parent=5 // pred_check
      %p2081 = pneg %p2080
    $region38: #{im2im_forward.15} parent=5 // pred_check_branch
      %2083 = sbr.rel (%p2081) target = $region40
    $region39: #{im2im_forward.15} parent=5 // pred_region
      %s2084 = ssub.s32 %s9, 2
      // Predicated region
      $region41: #{im2im_forward.15} parent=39 // pred_check
        %p2085 = pneg %p106
      $region42: #{im2im_forward.15} parent=39 // pred_check_branch
        %2087 = sbr.rel (%p2085) target = $region44
      $region43: #{im2im_forward.15} parent=39 // pred_region
        %p2088 = scmp.lt.s32.totalorder %s15, 7
        %s2089 = scalar_select %p2088, %s15, 7
        %s2090 = smul.addr %s2089, 32
        %s2091 = smul.addr %s2090, 4
        %s2092 = scalar_lea.vmem %s3, %s2091
      $region44: #{im2im_forward.15} parent=39 // pred_fallthru
        _
    $region40: #{im2im_forward.15} parent=5 // pred_fallthru
      _
  $region6: #{im2im_forward.15} parent=0 // loop_footer
    %s13 = sadd.s32 1, %s9
  $region7: #{im2im_forward.15} parent=0 // loop_footer_branch
    %8 = sbr.rel target = $region3
  $region8: #{im2im_forward.15} parent=0 // loop_exit
    _

</llo_original>
